<compile_context>
chip_gen: v6e
topology: v6e:2x2x1
jax: 0.10.0
libtpu: 0.0.40
codegen_flags: <defaults>
</compile_context>

<pallas_src>
import math
import functools

import jax
import jax.numpy as jnp
from jax.experimental import pallas as pl
from jax.experimental.pallas import tpu as pltpu

LN_EPS = 1e-5  # PyTorch nn.LayerNorm default

# Row indices inside the packed per-layer vector slab (f32, shape (L, VEC_ROWS, E)).
ROW_G1, ROW_BE1, ROW_BQ, ROW_BK, ROW_BV, ROW_BO, ROW_G2, ROW_BE2, ROW_BM2 = range(9)
VEC_ROWS = 16  # padded to a sublane multiple


def _encoder_kernel(num_heads,
                    x_ref, vec_ref,
                    wq_ref, wk_ref, wv_ref, wo_ref,
                    w1_ref, bm1_ref, w2_ref,
                    out_ref,
                    ctx_scratch):
    layer = pl.program_id(1)

    # Seed the resident residual-stream block from the input at the first layer.
    @pl.when(layer == 0)
    def _():
        out_ref[...] = x_ref[...]

    xb = out_ref[...].astype(jnp.float32)            # (bB, S, E) residual stream
    bB, S, E = xb.shape
    BS = bB * S
    x2d = xb.reshape(BS, E)

    vecs = vec_ref[0]                                # (VEC_ROWS, E) f32, one DMA window

    def layer_norm(v, gamma, beta):                  # fused-stats LN, f32 math
        mu = jnp.mean(v, axis=-1, keepdims=True)
        ms = jnp.mean(v * v, axis=-1, keepdims=True)
        var = jnp.maximum(ms - mu * mu, 0.0)
        return (v - mu) * jax.lax.rsqrt(var + LN_EPS) * gamma + beta

    # ---------- Multi-head self-attention (pre-LN), bf16 MXU / f32 accumulation ----------
    x1 = layer_norm(x2d, vecs[ROW_G1:ROW_G1 + 1], vecs[ROW_BE1:ROW_BE1 + 1])
    x1b = x1.astype(jnp.bfloat16)

    hd = E // num_heads
    scale = 1.0 / math.sqrt(hd)

    # Weights are pre-transposed host-side: y = x @ W (no in-kernel transpose).
    # 1/sqrt(hd) is folded into q here (matches PyTorch: q scaled after in-projection),
    # which is one (BS,E) multiply instead of num_heads (bB,S,S) multiplies on the scores.
    q = (jnp.dot(x1b, wq_ref[0], preferred_element_type=jnp.float32)
         + vecs[ROW_BQ:ROW_BQ + 1]) * scale
    k = jnp.dot(x1b, wk_ref[0], preferred_element_type=jnp.float32) + vecs[ROW_BK:ROW_BK + 1]
    v = jnp.dot(x1b, wv_ref[0], preferred_element_type=jnp.float32) + vecs[ROW_BV:ROW_BV + 1]
    q = q.reshape(bB, S, E)
    k = k.reshape(bB, S, E)
    v = v.reshape(bB, S, E)

    # Heads are a static unrolled loop of single-batch einsums (Mosaic dot_general has a
    # single batch dim).  Each head's context is written into a bf16 VMEM slab so the
    # output projection below is a single full-K (K=E) MXU matmul.
    # TODO(synk): for long sequences replace the (bB,S,S) score tensor with an online
    # softmax (flash-style) loop over key tiles (needed for the v7x 64 MiB VMEM budget).
    for h in range(num_heads):
        sl = slice(h * hd, (h + 1) * hd)
        qh = q[:, :, sl].astype(jnp.bfloat16)
        kh = k[:, :, sl].astype(jnp.bfloat16)
        vh = v[:, :, sl].astype(jnp.bfloat16)
        s = jnp.einsum('bqd,bkd->bqk', qh, kh,
                       preferred_element_type=jnp.float32)          # (bB, S, S) f32
        s = s - jnp.max(s, axis=-1, keepdims=True)
        p = jnp.exp(s)
        denom = jnp.sum(p, axis=-1, keepdims=True)
        p = p * pl.reciprocal(denom, approx=True)                   # EUP slot (~free)
        ctx = jnp.einsum('bqk,bkd->bqd', p.astype(jnp.bfloat16), vh,
                         preferred_element_type=jnp.float32)        # (bB, S, hd)
        ctx_scratch[:, sl] = ctx.reshape(BS, hd).astype(jnp.bfloat16)

    # Single output projection with full contraction depth K=E.
    attn = jnp.dot(ctx_scratch[...], wo_ref[0], preferred_element_type=jnp.float32)
    # TODO(synk): attention-weight dropout (dropout_p) omitted — eval/inference semantics.
    x2d = x2d + attn + vecs[ROW_BO:ROW_BO + 1]                      # residual

    # ------------------------------- MLP block (pre-LN) -------------------------------
    x2 = layer_norm(x2d, vecs[ROW_G2:ROW_G2 + 1], vecs[ROW_BE2:ROW_BE2 + 1])
    x2b = x2.astype(jnp.bfloat16)

    Hm = w1_ref.shape[-1]
    HC = Hm
    if Hm > 1024:                                    # chunk hidden dim; caps h1 footprint
        for c in range(1024, 0, -1):
            if Hm % c == 0:
                HC = c
                break

    inv_sqrt2 = 1.0 / math.sqrt(2.0)
    mlp = jnp.zeros((BS, E), jnp.float32)
    for c0 in range(0, Hm, HC):
        h1 = (jnp.dot(x2b, w1_ref[0, :, c0:c0 + HC],
                      preferred_element_type=jnp.float32)
              + bm1_ref[0, :, c0:c0 + HC])                           # (BS, HC) f32
        # exact GELU (erf form), matching PyTorch nn.GELU() default, kept in f32
        h1 = 0.5 * h1 * (1.0 + jax.lax.erf(h1 * inv_sqrt2))
        mlp = mlp + jnp.dot(h1.astype(jnp.bfloat16), w2_ref[0, c0:c0 + HC, :],
                            preferred_element_type=jnp.float32)
    # TODO(synk): MLP dropout layers omitted — eval/inference semantics (deterministic).
    x2d = x2d + mlp + vecs[ROW_BM2:ROW_BM2 + 1]                      # residual

    out_ref[...] = x2d.reshape(bB, S, E).astype(out_ref.dtype)


_WEIGHT_ORDER = ('vecs', 'wq', 'wk', 'wv', 'wo', 'w1', 'bm1', 'w2')


def _vmem_limit_bytes():
    """Generation-aware VMEM budget: ~75% of physical, capped at 100 MiB.
    -> ~96 MiB on v5e/v6e (128 MiB physical), ~48 MiB on v7x (64 MiB physical)."""
    try:
        cap = int(pltpu.get_tpu_info().vmem_capacity_bytes)
    except Exception:
        cap = 64 * 1024 * 1024                      # conservative fallback (v7x-safe)
    return min(int(cap * 3) // 4, 100 * 1024 * 1024)


def _pick_batch_block(B, S, target_rows=1024):
    """Largest divisor of B with bB*S <= target_rows (amortizes per-layer weight DMA and
    per-grid-step overhead while keeping the activation footprint bounded)."""
    bB = 1
    for cand in range(1, B + 1):
        if B % cand == 0 and cand * S <= target_rows:
            bB = cand
    return bB


def transformer_encoder(x, params, num_heads):
    """x: (B, S, E) float32. params: per-layer-stacked weights (leading dim = depth),
    matmul weights pre-transposed & bf16, packed norm/bias vectors in f32.
    Note: for lane-dense stores E should be a multiple of 128 and S a multiple of 8
    (full-array blocks keep correctness for other shapes, just slower)."""
    B, S, E = x.shape
    L = params['wq'].shape[0]
    assert E % num_heads == 0

    bB = _pick_batch_block(B, S)

    def per_layer_spec(arr):
        nd = arr.ndim
        return pl.BlockSpec((1,) + arr.shape[1:],
                            lambda b, l, _nd=nd: (l,) + (0,) * (_nd - 1))

    io_spec = pl.BlockSpec((bB, S, E), lambda b, l: (b, 0, 0))

    in_specs = [io_spec] + [per_layer_spec(params[k]) for k in _WEIGHT_ORDER]

    kernel = functools.partial(_encoder_kernel, num_heads)

    return pl.pallas_call(
        kernel,
        out_shape=jax.ShapeDtypeStruct((B, S, E), x.dtype),
        grid_spec=pltpu.PrefetchScalarGridSpec(
            num_scalar_prefetch=0,
            grid=(B // bB, L),                 # batch tiles (parallel) x layers (arbitrary)
            in_specs=in_specs,
            out_specs=io_spec,                 # resident residual stream over the layer axis
            scratch_shapes=[pltpu.VMEM((bB * S, E), jnp.bfloat16)],   # head-context slab
        ),
        input_output_aliases={0: 0},           # residual stream written back in place
        compiler_params=pltpu.CompilerParams(
            dimension_semantics=("parallel", "arbitrary"),
            vmem_limit_bytes=_vmem_limit_bytes(),
        ),
    )(x, *[params[k] for k in _WEIGHT_ORDER])


def init_params(key, depth, embed_dim, mlp_ratio):
    hidden_dim = int(embed_dim * mlp_ratio)
    E, Hm, L = embed_dim, hidden_dim, depth
    ks = jax.random.split(key, 6)
    scale = 0.02

    def w(k, shape):  # matmul weights: pre-transposed layout, stored bf16 for the MXU
        return (scale * jax.random.normal(k, shape, jnp.float32)).astype(jnp.bfloat16)

    # Packed per-layer (1,E) vectors: LN gammas/betas + q/k/v/o/mlp-out biases.
    vecs = jnp.zeros((L, VEC_ROWS, E), jnp.float32)
    vecs = vecs.at[:, ROW_G1].set(1.0)          # norm1 gamma
    vecs = vecs.at[:, ROW_G2].set(1.0)          # norm2 gamma (all biases/betas stay 0)

    return {
        'vecs': vecs,
        'wq': w(ks[0], (L, E, E)),     # q = x1 @ wq   (== x1 @ Wq.T in PyTorch terms)
        'wk': w(ks[1], (L, E, E)),
        'wv': w(ks[2], (L, E, E)),
        'wo': w(ks[3], (L, E, E)),     # out = attn @ wo (pre-transposed out_proj)
        'w1': w(ks[4], (L, E, Hm)),    # pre-transposed mlp fc1
        'bm1': jnp.zeros((L, 1, Hm), jnp.float32),
        'w2': w(ks[5], (L, Hm, E)),    # pre-transposed mlp fc2
    }


if __name__ == "__main__":
    # Small shapes consistent with the module; E chosen lane-dense (multiple of 128).
    B, S, E = 4, 8, 128
    depth, num_heads, mlp_ratio = 2, 4, 4.0

    key = jax.random.PRNGKey(0)
    k_x, k_p = jax.random.split(key)
    x = jax.random.normal(k_x, (B, S, E), jnp.float32)
    params = init_params(k_p, depth, E, mlp_ratio)

    out = transformer_encoder(x, params, num_heads)
    out = jax.block_until_ready(out)
    assert out.shape == (B, S, E)
    assert bool(jnp.all(jnp.isfinite(out)))
    print("KERNEL_OK")
</pallas_src>

<mosaic_0001>
module attributes {stable_mosaic.version = 11 : i64} {
  func.func @_encoder_kernel(%arg0: i32, %arg1: i32, %arg2: memref<4x8x128xf32, #tpu.memory_space<vmem>>, %arg3: memref<1x16x128xf32, #tpu.memory_space<vmem>>, %arg4: memref<1x128x128xbf16, #tpu.memory_space<vmem>>, %arg5: memref<1x128x128xbf16, #tpu.memory_space<vmem>>, %arg6: memref<1x128x128xbf16, #tpu.memory_space<vmem>>, %arg7: memref<1x128x128xbf16, #tpu.memory_space<vmem>>, %arg8: memref<1x128x512xbf16, #tpu.memory_space<vmem>>, %arg9: memref<1x1x512xf32, #tpu.memory_space<vmem>>, %arg10: memref<1x512x128xbf16, #tpu.memory_space<vmem>>, %arg11: memref<4x8x128xf32, #tpu.memory_space<vmem>>, %arg12: memref<32x128xbf16, #tpu.memory_space<vmem>>) attributes {dimension_semantics = [#tpu.dimension_semantics<parallel>, #tpu.dimension_semantics<arbitrary>], iteration_bounds = array<i64: 1, 2>, scalar_prefetch = 0 : i64, scratch_operands = 1 : i64, tpu.core_type = #tpu.core_type<tc>, window_params = [{transform_indices = @transform_0, window_bounds = array<i64: 4, 8, 128>}, {transform_indices = @transform_1, window_bounds = array<i64: 1, 16, 128>}, {transform_indices = @transform_2, window_bounds = array<i64: 1, 128, 128>}, {transform_indices = @transform_3, window_bounds = array<i64: 1, 128, 128>}, {transform_indices = @transform_4, window_bounds = array<i64: 1, 128, 128>}, {transform_indices = @transform_5, window_bounds = array<i64: 1, 128, 128>}, {transform_indices = @transform_6, window_bounds = array<i64: 1, 128, 512>}, {transform_indices = @transform_7, window_bounds = array<i64: 1, 1, 512>}, {transform_indices = @transform_8, window_bounds = array<i64: 1, 512, 128>}, {transform_indices = @transform_9, window_bounds = array<i64: 4, 8, 128>}]} {
    %c0_i32 = arith.constant 0 : i32
    %0 = arith.cmpi eq, %arg1, %c0_i32 : i32
    %1 = arith.extui %0 : i1 to i32
    %c0_i32_0 = arith.constant 0 : i32
    %2 = arith.cmpi ne, %1, %c0_i32_0 : i32
    scf.if %2 {
      %c0_75 = arith.constant 0 : index
      %c0_76 = arith.constant 0 : index
      %c0_77 = arith.constant 0 : index
      %207 = vector.load %arg2[%c0_75, %c0_76, %c0_77] : memref<4x8x128xf32, #tpu.memory_space<vmem>>, vector<4x8x128xf32>
      %c0_78 = arith.constant 0 : index
      %c0_79 = arith.constant 0 : index
      %c0_80 = arith.constant 0 : index
      %208 = vector.load %arg11[%c0_78, %c0_79, %c0_80] : memref<4x8x128xf32, #tpu.memory_space<vmem>>, vector<4x8x128xf32>
      tpu.vector_store %arg11[%c0_78, %c0_79, %c0_80], %207 {strides = array<i32>} : memref<4x8x128xf32, #tpu.memory_space<vmem>>, vector<4x8x128xf32>,
    } else {
    }
    %c0 = arith.constant 0 : index
    %c0_1 = arith.constant 0 : index
    %c0_2 = arith.constant 0 : index
    %3 = vector.load %arg11[%c0, %c0_1, %c0_2] : memref<4x8x128xf32, #tpu.memory_space<vmem>>, vector<4x8x128xf32>
    %4 = vector.shape_cast %3 : vector<4x8x128xf32> to vector<32x128xf32>
    %c0_3 = arith.constant 0 : index
    %c0_4 = arith.constant 0 : index
    %c0_5 = arith.constant 0 : index
    %5 = vector.load %arg3[%c0_3, %c0_4, %c0_5] : memref<1x16x128xf32, #tpu.memory_space<vmem>>, vector<1x16x128xf32>
    %6 = vector.shape_cast %5 : vector<1x16x128xf32> to vector<16x128xf32>
    %7 = vector.extract_strided_slice %6 {offsets = [0, 0], sizes = [1, 128], strides = [1, 1]} : vector<16x128xf32> to vector<1x128xf32>
    %8 = vector.extract_strided_slice %6 {offsets = [1, 0], sizes = [1, 128], strides = [1, 1]} : vector<16x128xf32> to vector<1x128xf32>
    %cst = arith.constant dense<0.000000e+00> : vector<32xf32>
    %9 = vector.multi_reduction <add>, %4, %cst [1] : vector<32x128xf32> to vector<32xf32>
    %10 = vector.shape_cast %9 : vector<32xf32> to vector<32x1xf32>
    %cst_6 = arith.constant 1.280000e+02 : f32
    %11 = vector.broadcast %cst_6 : f32 to vector<32x1xf32>
    %12 = arith.divf %10, %11 : vector<32x1xf32>
    %13 = arith.mulf %4, %4 : vector<32x128xf32>
    %cst_7 = arith.constant dense<0.000000e+00> : vector<32xf32>
    %14 = vector.multi_reduction <add>, %13, %cst_7 [1] : vector<32x128xf32> to vector<32xf32>
    %15 = vector.shape_cast %14 : vector<32xf32> to vector<32x1xf32>
    %cst_8 = arith.constant 1.280000e+02 : f32
    %16 = vector.broadcast %cst_8 : f32 to vector<32x1xf32>
    %17 = arith.divf %15, %16 : vector<32x1xf32>
    %18 = arith.mulf %12, %12 : vector<32x1xf32>
    %19 = arith.subf %17, %18 : vector<32x1xf32>
    %cst_9 = arith.constant 0.000000e+00 : f32
    %20 = vector.broadcast %cst_9 : f32 to vector<32x1xf32>
    %21 = arith.maximumf %19, %20 : vector<32x1xf32>
    %22 = vector.broadcast %12 : vector<32x1xf32> to vector<32x128xf32>
    %23 = arith.subf %4, %22 : vector<32x128xf32>
    %cst_10 = arith.constant 9.99999974E-6 : f32
    %24 = vector.broadcast %cst_10 : f32 to vector<32x1xf32>
    %25 = arith.addf %21, %24 : vector<32x1xf32>
    %26 = math.rsqrt %25 : vector<32x1xf32>
    %27 = vector.broadcast %26 : vector<32x1xf32> to vector<32x128xf32>
    %28 = arith.mulf %23, %27 : vector<32x128xf32>
    %29 = vector.broadcast %7 : vector<1x128xf32> to vector<32x128xf32>
    %30 = arith.mulf %28, %29 : vector<32x128xf32>
    %31 = vector.broadcast %8 : vector<1x128xf32> to vector<32x128xf32>
    %32 = arith.addf %30, %31 : vector<32x128xf32>
    %33 = arith.truncf %32 : vector<32x128xf32> to vector<32x128xbf16>
    %c0_11 = arith.constant 0 : index
    %c0_12 = arith.constant 0 : index
    %c0_13 = arith.constant 0 : index
    %34 = vector.load %arg4[%c0_11, %c0_12, %c0_13] : memref<1x128x128xbf16, #tpu.memory_space<vmem>>, vector<1x128x128xbf16>
    %35 = vector.shape_cast %34 : vector<1x128x128xbf16> to vector<128x128xbf16>
    %cst_14 = arith.constant dense<0.000000e+00> : vector<32x128xf32>
    %36 = tpu.matmul %33, %35, %cst_14 {dimension_numbers = #tpu.dot_dimension_numbers<[1], [0], [0], [1], [0, 0, 1, 1], [], []>} : vector<32x128xbf16>, vector<128x128xbf16>, vector<32x128xf32> -> vector<32x128xf32>
    %37 = vector.extract_strided_slice %6 {offsets = [2, 0], sizes = [1, 128], strides = [1, 1]} : vector<16x128xf32> to vector<1x128xf32>
    %38 = vector.broadcast %37 : vector<1x128xf32> to vector<32x128xf32>
    %39 = arith.addf %36, %38 : vector<32x128xf32>
    %cst_15 = arith.constant 0.176776692 : f32
    %40 = vector.broadcast %cst_15 : f32 to vector<32x128xf32>
    %41 = arith.mulf %39, %40 : vector<32x128xf32>
    %c0_16 = arith.constant 0 : index
    %c0_17 = arith.constant 0 : index
    %c0_18 = arith.constant 0 : index
    %42 = vector.load %arg5[%c0_16, %c0_17, %c0_18] : memref<1x128x128xbf16, #tpu.memory_space<vmem>>, vector<1x128x128xbf16>
    %43 = vector.shape_cast %42 : vector<1x128x128xbf16> to vector<128x128xbf16>
    %cst_19 = arith.constant dense<0.000000e+00> : vector<32x128xf32>
    %44 = tpu.matmul %33, %43, %cst_19 {dimension_numbers = #tpu.dot_dimension_numbers<[1], [0], [0], [1], [0, 0, 1, 1], [], []>} : vector<32x128xbf16>, vector<128x128xbf16>, vector<32x128xf32> -> vector<32x128xf32>
    %45 = vector.extract_strided_slice %6 {offsets = [3, 0], sizes = [1, 128], strides = [1, 1]} : vector<16x128xf32> to vector<1x128xf32>
    %46 = vector.broadcast %45 : vector<1x128xf32> to vector<32x128xf32>
    %47 = arith.addf %44, %46 : vector<32x128xf32>
    %c0_20 = arith.constant 0 : index
    %c0_21 = arith.constant 0 : index
    %c0_22 = arith.constant 0 : index
    %48 = vector.load %arg6[%c0_20, %c0_21, %c0_22] : memref<1x128x128xbf16, #tpu.memory_space<vmem>>, vector<1x128x128xbf16>
    %49 = vector.shape_cast %48 : vector<1x128x128xbf16> to vector<128x128xbf16>
    %cst_23 = arith.constant dense<0.000000e+00> : vector<32x128xf32>
    %50 = tpu.matmul %33, %49, %cst_23 {dimension_numbers = #tpu.dot_dimension_numbers<[1], [0], [0], [1], [0, 0, 1, 1], [], []>} : vector<32x128xbf16>, vector<128x128xbf16>, vector<32x128xf32> -> vector<32x128xf32>
    %51 = vector.extract_strided_slice %6 {offsets = [4, 0], sizes = [1, 128], strides = [1, 1]} : vector<16x128xf32> to vector<1x128xf32>
    %52 = vector.broadcast %51 : vector<1x128xf32> to vector<32x128xf32>
    %53 = arith.addf %50, %52 : vector<32x128xf32>
    %54 = vector.shape_cast %41 : vector<32x128xf32> to vector<4x8x128xf32>
    %55 = vector.shape_cast %47 : vector<32x128xf32> to vector<4x8x128xf32>
    %56 = vector.shape_cast %53 : vector<32x128xf32> to vector<4x8x128xf32>
    %57 = vector.extract_strided_slice %54 {offsets = [0, 0, 0], sizes = [4, 8, 32], strides = [1, 1, 1]} : vector<4x8x128xf32> to vector<4x8x32xf32>
    %58 = arith.truncf %57 : vector<4x8x32xf32> to vector<4x8x32xbf16>
    %59 = vector.extract_strided_slice %55 {offsets = [0, 0, 0], sizes = [4, 8, 32], strides = [1, 1, 1]} : vector<4x8x128xf32> to vector<4x8x32xf32>
    %60 = arith.truncf %59 : vector<4x8x32xf32> to vector<4x8x32xbf16>
    %61 = vector.extract_strided_slice %56 {offsets = [0, 0, 0], sizes = [4, 8, 32], strides = [1, 1, 1]} : vector<4x8x128xf32> to vector<4x8x32xf32>
    %62 = arith.truncf %61 : vector<4x8x32xf32> to vector<4x8x32xbf16>
    "tpu.trace_start"() <{level = 10 : i32, message = "bqd,bkd->bqk"}> : () -> ()
    %cst_24 = arith.constant dense<0.000000e+00> : vector<4x8x8xf32>
    %63 = tpu.matmul %58, %60, %cst_24 {dimension_numbers = #tpu.dot_dimension_numbers<[2], [2], [1], [1], [0, 0, 0, 1, 1, 1], [0], [0]>} : vector<4x8x32xbf16>, vector<4x8x32xbf16>, vector<4x8x8xf32> -> vector<4x8x8xf32>
    "tpu.trace_stop"() : () -> ()
    %cst_25 = arith.constant dense<0xFF800000> : vector<4x8xf32>
    %64 = vector.multi_reduction <maximumf>, %63, %cst_25 [2] : vector<4x8x8xf32> to vector<4x8xf32>
    %65 = vector.shape_cast %64 : vector<4x8xf32> to vector<4x8x1xf32>
    %66 = vector.broadcast %65 : vector<4x8x1xf32> to vector<4x8x8xf32>
    %67 = arith.subf %63, %66 : vector<4x8x8xf32>
    %68 = math.exp %67 : vector<4x8x8xf32>
    %cst_26 = arith.constant dense<0.000000e+00> : vector<4x8xf32>
    %69 = vector.multi_reduction <add>, %68, %cst_26 [2] : vector<4x8x8xf32> to vector<4x8xf32>
    %70 = vector.shape_cast %69 : vector<4x8xf32> to vector<4x8x1xf32>
    %71 = tpu.reciprocal %70 {approx = true} : vector<4x8x1xf32> -> vector<4x8x1xf32>
    %72 = vector.broadcast %71 : vector<4x8x1xf32> to vector<4x8x8xf32>
    %73 = arith.mulf %68, %72 : vector<4x8x8xf32>
    %74 = arith.truncf %73 : vector<4x8x8xf32> to vector<4x8x8xbf16>
    "tpu.trace_start"() <{level = 10 : i32, message = "bqk,bkd->bqd"}> : () -> ()
    %cst_27 = arith.constant dense<0.000000e+00> : vector<4x8x32xf32>
    %75 = tpu.matmul %74, %62, %cst_27 {dimension_numbers = #tpu.dot_dimension_numbers<[2], [1], [1], [2], [0, 0, 0, 1, 1, 2], [0], [0]>} : vector<4x8x8xbf16>, vector<4x8x32xbf16>, vector<4x8x32xf32> -> vector<4x8x32xf32>
    "tpu.trace_stop"() : () -> ()
    %76 = vector.shape_cast %75 : vector<4x8x32xf32> to vector<32x32xf32>
    %77 = arith.truncf %76 : vector<32x32xf32> to vector<32x32xbf16>
    %c0_28 = arith.constant 0 : index
    %c0_29 = arith.constant 0 : index
    %78 = vector.load %arg12[%c0_28, %c0_29] : memref<32x128xbf16, #tpu.memory_space<vmem>>, vector<32x32xbf16>
    tpu.vector_store %arg12[%c0_28, %c0_29], %77 {strides = array<i32>} : memref<32x128xbf16, #tpu.memory_space<vmem>>, vector<32x32xbf16>,
    %79 = vector.extract_strided_slice %54 {offsets = [0, 0, 32], sizes = [4, 8, 32], strides = [1, 1, 1]} : vector<4x8x128xf32> to vector<4x8x32xf32>
    %80 = arith.truncf %79 : vector<4x8x32xf32> to vector<4x8x32xbf16>
    %81 = vector.extract_strided_slice %55 {offsets = [0, 0, 32], sizes = [4, 8, 32], strides = [1, 1, 1]} : vector<4x8x128xf32> to vector<4x8x32xf32>
    %82 = arith.truncf %81 : vector<4x8x32xf32> to vector<4x8x32xbf16>
    %83 = vector.extract_strided_slice %56 {offsets = [0, 0, 32], sizes = [4, 8, 32], strides = [1, 1, 1]} : vector<4x8x128xf32> to vector<4x8x32xf32>
    %84 = arith.truncf %83 : vector<4x8x32xf32> to vector<4x8x32xbf16>
    "tpu.trace_start"() <{level = 10 : i32, message = "bqd,bkd->bqk"}> : () -> ()
    %cst_30 = arith.constant dense<0.000000e+00> : vector<4x8x8xf32>
    %85 = tpu.matmul %80, %82, %cst_30 {dimension_numbers = #tpu.dot_dimension_numbers<[2], [2], [1], [1], [0, 0, 0, 1, 1, 1], [0], [0]>} : vector<4x8x32xbf16>, vector<4x8x32xbf16>, vector<4x8x8xf32> -> vector<4x8x8xf32>
    "tpu.trace_stop"() : () -> ()
    %cst_31 = arith.constant dense<0xFF800000> : vector<4x8xf32>
    %86 = vector.multi_reduction <maximumf>, %85, %cst_31 [2] : vector<4x8x8xf32> to vector<4x8xf32>
    %87 = vector.shape_cast %86 : vector<4x8xf32> to vector<4x8x1xf32>
    %88 = vector.broadcast %87 : vector<4x8x1xf32> to vector<4x8x8xf32>
    %89 = arith.subf %85, %88 : vector<4x8x8xf32>
    %90 = math.exp %89 : vector<4x8x8xf32>
    %cst_32 = arith.constant dense<0.000000e+00> : vector<4x8xf32>
    %91 = vector.multi_reduction <add>, %90, %cst_32 [2] : vector<4x8x8xf32> to vector<4x8xf32>
    %92 = vector.shape_cast %91 : vector<4x8xf32> to vector<4x8x1xf32>
    %93 = tpu.reciprocal %92 {approx = true} : vector<4x8x1xf32> -> vector<4x8x1xf32>
    %94 = vector.broadcast %93 : vector<4x8x1xf32> to vector<4x8x8xf32>
    %95 = arith.mulf %90, %94 : vector<4x8x8xf32>
    %96 = arith.truncf %95 : vector<4x8x8xf32> to vector<4x8x8xbf16>
    "tpu.trace_start"() <{level = 10 : i32, message = "bqk,bkd->bqd"}> : () -> ()
    %cst_33 = arith.constant dense<0.000000e+00> : vector<4x8x32xf32>
    %97 = tpu.matmul %96, %84, %cst_33 {dimension_numbers = #tpu.dot_dimension_numbers<[2], [1], [1], [2], [0, 0, 0, 1, 1, 2], [0], [0]>} : vector<4x8x8xbf16>, vector<4x8x32xbf16>, vector<4x8x32xf32> -> vector<4x8x32xf32>
    "tpu.trace_stop"() : () -> ()
    %98 = vector.shape_cast %97 : vector<4x8x32xf32> to vector<32x32xf32>
    %99 = arith.truncf %98 : vector<32x32xf32> to vector<32x32xbf16>
    %c0_34 = arith.constant 0 : index
    %c32 = arith.constant 32 : index
    %100 = vector.load %arg12[%c0_34, %c32] : memref<32x128xbf16, #tpu.memory_space<vmem>>, vector<32x32xbf16>
    tpu.vector_store %arg12[%c0_34, %c32], %99 {strides = array<i32>} : memref<32x128xbf16, #tpu.memory_space<vmem>>, vector<32x32xbf16>,
    %101 = vector.extract_strided_slice %54 {offsets = [0, 0, 64], sizes = [4, 8, 32], strides = [1, 1, 1]} : vector<4x8x128xf32> to vector<4x8x32xf32>
    %102 = arith.truncf %101 : vector<4x8x32xf32> to vector<4x8x32xbf16>
    %103 = vector.extract_strided_slice %55 {offsets = [0, 0, 64], sizes = [4, 8, 32], strides = [1, 1, 1]} : vector<4x8x128xf32> to vector<4x8x32xf32>
    %104 = arith.truncf %103 : vector<4x8x32xf32> to vector<4x8x32xbf16>
    %105 = vector.extract_strided_slice %56 {offsets = [0, 0, 64], sizes = [4, 8, 32], strides = [1, 1, 1]} : vector<4x8x128xf32> to vector<4x8x32xf32>
    %106 = arith.truncf %105 : vector<4x8x32xf32> to vector<4x8x32xbf16>
    "tpu.trace_start"() <{level = 10 : i32, message = "bqd,bkd->bqk"}> : () -> ()
    %cst_35 = arith.constant dense<0.000000e+00> : vector<4x8x8xf32>
    %107 = tpu.matmul %102, %104, %cst_35 {dimension_numbers = #tpu.dot_dimension_numbers<[2], [2], [1], [1], [0, 0, 0, 1, 1, 1], [0], [0]>} : vector<4x8x32xbf16>, vector<4x8x32xbf16>, vector<4x8x8xf32> -> vector<4x8x8xf32>
    "tpu.trace_stop"() : () -> ()
    %cst_36 = arith.constant dense<0xFF800000> : vector<4x8xf32>
    %108 = vector.multi_reduction <maximumf>, %107, %cst_36 [2] : vector<4x8x8xf32> to vector<4x8xf32>
    %109 = vector.shape_cast %108 : vector<4x8xf32> to vector<4x8x1xf32>
    %110 = vector.broadcast %109 : vector<4x8x1xf32> to vector<4x8x8xf32>
    %111 = arith.subf %107, %110 : vector<4x8x8xf32>
    %112 = math.exp %111 : vector<4x8x8xf32>
    %cst_37 = arith.constant dense<0.000000e+00> : vector<4x8xf32>
    %113 = vector.multi_reduction <add>, %112, %cst_37 [2] : vector<4x8x8xf32> to vector<4x8xf32>
    %114 = vector.shape_cast %113 : vector<4x8xf32> to vector<4x8x1xf32>
    %115 = tpu.reciprocal %114 {approx = true} : vector<4x8x1xf32> -> vector<4x8x1xf32>
    %116 = vector.broadcast %115 : vector<4x8x1xf32> to vector<4x8x8xf32>
    %117 = arith.mulf %112, %116 : vector<4x8x8xf32>
    %118 = arith.truncf %117 : vector<4x8x8xf32> to vector<4x8x8xbf16>
    "tpu.trace_start"() <{level = 10 : i32, message = "bqk,bkd->bqd"}> : () -> ()
    %cst_38 = arith.constant dense<0.000000e+00> : vector<4x8x32xf32>
    %119 = tpu.matmul %118, %106, %cst_38 {dimension_numbers = #tpu.dot_dimension_numbers<[2], [1], [1], [2], [0, 0, 0, 1, 1, 2], [0], [0]>} : vector<4x8x8xbf16>, vector<4x8x32xbf16>, vector<4x8x32xf32> -> vector<4x8x32xf32>
    "tpu.trace_stop"() : () -> ()
    %120 = vector.shape_cast %119 : vector<4x8x32xf32> to vector<32x32xf32>
    %121 = arith.truncf %120 : vector<32x32xf32> to vector<32x32xbf16>
    %c0_39 = arith.constant 0 : index
    %c64 = arith.constant 64 : index
    %122 = vector.load %arg12[%c0_39, %c64] : memref<32x128xbf16, #tpu.memory_space<vmem>>, vector<32x32xbf16>
    tpu.vector_store %arg12[%c0_39, %c64], %121 {strides = array<i32>} : memref<32x128xbf16, #tpu.memory_space<vmem>>, vector<32x32xbf16>,
    %123 = vector.extract_strided_slice %54 {offsets = [0, 0, 96], sizes = [4, 8, 32], strides = [1, 1, 1]} : vector<4x8x128xf32> to vector<4x8x32xf32>
    %124 = arith.truncf %123 : vector<4x8x32xf32> to vector<4x8x32xbf16>
    %125 = vector.extract_strided_slice %55 {offsets = [0, 0, 96], sizes = [4, 8, 32], strides = [1, 1, 1]} : vector<4x8x128xf32> to vector<4x8x32xf32>
    %126 = arith.truncf %125 : vector<4x8x32xf32> to vector<4x8x32xbf16>
    %127 = vector.extract_strided_slice %56 {offsets = [0, 0, 96], sizes = [4, 8, 32], strides = [1, 1, 1]} : vector<4x8x128xf32> to vector<4x8x32xf32>
    %128 = arith.truncf %127 : vector<4x8x32xf32> to vector<4x8x32xbf16>
    "tpu.trace_start"() <{level = 10 : i32, message = "bqd,bkd->bqk"}> : () -> ()
    %cst_40 = arith.constant dense<0.000000e+00> : vector<4x8x8xf32>
    %129 = tpu.matmul %124, %126, %cst_40 {dimension_numbers = #tpu.dot_dimension_numbers<[2], [2], [1], [1], [0, 0, 0, 1, 1, 1], [0], [0]>} : vector<4x8x32xbf16>, vector<4x8x32xbf16>, vector<4x8x8xf32> -> vector<4x8x8xf32>
    "tpu.trace_stop"() : () -> ()
    %cst_41 = arith.constant dense<0xFF800000> : vector<4x8xf32>
    %130 = vector.multi_reduction <maximumf>, %129, %cst_41 [2] : vector<4x8x8xf32> to vector<4x8xf32>
    %131 = vector.shape_cast %130 : vector<4x8xf32> to vector<4x8x1xf32>
    %132 = vector.broadcast %131 : vector<4x8x1xf32> to vector<4x8x8xf32>
    %133 = arith.subf %129, %132 : vector<4x8x8xf32>
    %134 = math.exp %133 : vector<4x8x8xf32>
    %cst_42 = arith.constant dense<0.000000e+00> : vector<4x8xf32>
    %135 = vector.multi_reduction <add>, %134, %cst_42 [2] : vector<4x8x8xf32> to vector<4x8xf32>
    %136 = vector.shape_cast %135 : vector<4x8xf32> to vector<4x8x1xf32>
    %137 = tpu.reciprocal %136 {approx = true} : vector<4x8x1xf32> -> vector<4x8x1xf32>
    %138 = vector.broadcast %137 : vector<4x8x1xf32> to vector<4x8x8xf32>
    %139 = arith.mulf %134, %138 : vector<4x8x8xf32>
    %140 = arith.truncf %139 : vector<4x8x8xf32> to vector<4x8x8xbf16>
    "tpu.trace_start"() <{level = 10 : i32, message = "bqk,bkd->bqd"}> : () -> ()
    %cst_43 = arith.constant dense<0.000000e+00> : vector<4x8x32xf32>
    %141 = tpu.matmul %140, %128, %cst_43 {dimension_numbers = #tpu.dot_dimension_numbers<[2], [1], [1], [2], [0, 0, 0, 1, 1, 2], [0], [0]>} : vector<4x8x8xbf16>, vector<4x8x32xbf16>, vector<4x8x32xf32> -> vector<4x8x32xf32>
    "tpu.trace_stop"() : () -> ()
    %142 = vector.shape_cast %141 : vector<4x8x32xf32> to vector<32x32xf32>
    %143 = arith.truncf %142 : vector<32x32xf32> to vector<32x32xbf16>
    %c0_44 = arith.constant 0 : index
    %c96 = arith.constant 96 : index
    %144 = vector.load %arg12[%c0_44, %c96] : memref<32x128xbf16, #tpu.memory_space<vmem>>, vector<32x32xbf16>
    tpu.vector_store %arg12[%c0_44, %c96], %143 {strides = array<i32>} : memref<32x128xbf16, #tpu.memory_space<vmem>>, vector<32x32xbf16>,
    %c0_45 = arith.constant 0 : index
    %c0_46 = arith.constant 0 : index
    %145 = vector.load %arg12[%c0_45, %c0_46] : memref<32x128xbf16, #tpu.memory_space<vmem>>, vector<32x128xbf16>
    %c0_47 = arith.constant 0 : index
    %c0_48 = arith.constant 0 : index
    %c0_49 = arith.constant 0 : index
    %146 = vector.load %arg7[%c0_47, %c0_48, %c0_49] : memref<1x128x128xbf16, #tpu.memory_space<vmem>>, vector<1x128x128xbf16>
    %147 = vector.shape_cast %146 : vector<1x128x128xbf16> to vector<128x128xbf16>
    %cst_50 = arith.constant dense<0.000000e+00> : vector<32x128xf32>
    %148 = tpu.matmul %145, %147, %cst_50 {dimension_numbers = #tpu.dot_dimension_numbers<[1], [0], [0], [1], [0, 0, 1, 1], [], []>} : vector<32x128xbf16>, vector<128x128xbf16>, vector<32x128xf32> -> vector<32x128xf32>
    %149 = arith.addf %4, %148 : vector<32x128xf32>
    %150 = vector.extract_strided_slice %6 {offsets = [5, 0], sizes = [1, 128], strides = [1, 1]} : vector<16x128xf32> to vector<1x128xf32>
    %151 = vector.broadcast %150 : vector<1x128xf32> to vector<32x128xf32>
    %152 = arith.addf %149, %151 : vector<32x128xf32>
    %153 = vector.extract_strided_slice %6 {offsets = [6, 0], sizes = [1, 128], strides = [1, 1]} : vector<16x128xf32> to vector<1x128xf32>
    %154 = vector.extract_strided_slice %6 {offsets = [7, 0], sizes = [1, 128], strides = [1, 1]} : vector<16x128xf32> to vector<1x128xf32>
    %cst_51 = arith.constant dense<0.000000e+00> : vector<32xf32>
    %155 = vector.multi_reduction <add>, %152, %cst_51 [1] : vector<32x128xf32> to vector<32xf32>
    %156 = vector.shape_cast %155 : vector<32xf32> to vector<32x1xf32>
    %cst_52 = arith.constant 1.280000e+02 : f32
    %157 = vector.broadcast %cst_52 : f32 to vector<32x1xf32>
    %158 = arith.divf %156, %157 : vector<32x1xf32>
    %159 = arith.mulf %152, %152 : vector<32x128xf32>
    %cst_53 = arith.constant dense<0.000000e+00> : vector<32xf32>
    %160 = vector.multi_reduction <add>, %159, %cst_53 [1] : vector<32x128xf32> to vector<32xf32>
    %161 = vector.shape_cast %160 : vector<32xf32> to vector<32x1xf32>
    %cst_54 = arith.constant 1.280000e+02 : f32
    %162 = vector.broadcast %cst_54 : f32 to vector<32x1xf32>
    %163 = arith.divf %161, %162 : vector<32x1xf32>
    %164 = arith.mulf %158, %158 : vector<32x1xf32>
    %165 = arith.subf %163, %164 : vector<32x1xf32>
    %cst_55 = arith.constant 0.000000e+00 : f32
    %166 = vector.broadcast %cst_55 : f32 to vector<32x1xf32>
    %167 = arith.maximumf %165, %166 : vector<32x1xf32>
    %168 = vector.broadcast %158 : vector<32x1xf32> to vector<32x128xf32>
    %169 = arith.subf %152, %168 : vector<32x128xf32>
    %cst_56 = arith.constant 9.99999974E-6 : f32
    %170 = vector.broadcast %cst_56 : f32 to vector<32x1xf32>
    %171 = arith.addf %167, %170 : vector<32x1xf32>
    %172 = math.rsqrt %171 : vector<32x1xf32>
    %173 = vector.broadcast %172 : vector<32x1xf32> to vector<32x128xf32>
    %174 = arith.mulf %169, %173 : vector<32x128xf32>
    %175 = vector.broadcast %153 : vector<1x128xf32> to vector<32x128xf32>
    %176 = arith.mulf %174, %175 : vector<32x128xf32>
    %177 = vector.broadcast %154 : vector<1x128xf32> to vector<32x128xf32>
    %178 = arith.addf %176, %177 : vector<32x128xf32>
    %179 = arith.truncf %178 : vector<32x128xf32> to vector<32x128xbf16>
    %cst_57 = arith.constant 0.000000e+00 : f32
    %180 = vector.broadcast %cst_57 : f32 to vector<32x128xf32>
    %c0_58 = arith.constant 0 : index
    %c0_59 = arith.constant 0 : index
    %c0_60 = arith.constant 0 : index
    %181 = vector.load %arg8[%c0_58, %c0_59, %c0_60] : memref<1x128x512xbf16, #tpu.memory_space<vmem>>, vector<1x128x512xbf16>
    %182 = vector.shape_cast %181 : vector<1x128x512xbf16> to vector<128x512xbf16>
    %cst_61 = arith.constant dense<0.000000e+00> : vector<32x512xf32>
    %183 = tpu.matmul %179, %182, %cst_61 {dimension_numbers = #tpu.dot_dimension_numbers<[1], [0], [0], [1], [0, 0, 1, 1], [], []>} : vector<32x128xbf16>, vector<128x512xbf16>, vector<32x512xf32> -> vector<32x512xf32>
    %c0_62 = arith.constant 0 : index
    %c0_63 = arith.constant 0 : index
    %c0_64 = arith.constant 0 : index
    %184 = vector.load %arg9[%c0_62, %c0_63, %c0_64] : memref<1x1x512xf32, #tpu.memory_space<vmem>>, vector<1x1x512xf32>
    %185 = vector.shape_cast %184 : vector<1x1x512xf32> to vector<1x512xf32>
    %186 = vector.broadcast %185 : vector<1x512xf32> to vector<32x512xf32>
    %187 = arith.addf %183, %186 : vector<32x512xf32>
    %cst_65 = arith.constant 5.000000e-01 : f32
    %188 = vector.broadcast %cst_65 : f32 to vector<32x512xf32>
    %189 = arith.mulf %188, %187 : vector<32x512xf32>
    %cst_66 = arith.constant 0.707106769 : f32
    %190 = vector.broadcast %cst_66 : f32 to vector<32x512xf32>
    %191 = arith.mulf %187, %190 : vector<32x512xf32>
    %192 = math.erf %191 : vector<32x512xf32>
    %cst_67 = arith.constant 1.000000e+00 : f32
    %193 = vector.broadcast %cst_67 : f32 to vector<32x512xf32>
    %194 = arith.addf %193, %192 : vector<32x512xf32>
    %195 = arith.mulf %189, %194 : vector<32x512xf32>
    %196 = arith.truncf %195 : vector<32x512xf32> to vector<32x512xbf16>
    %c0_68 = arith.constant 0 : index
    %c0_69 = arith.constant 0 : index
    %c0_70 = arith.constant 0 : index
    %197 = vector.load %arg10[%c0_68, %c0_69, %c0_70] : memref<1x512x128xbf16, #tpu.memory_space<vmem>>, vector<1x512x128xbf16>
    %198 = vector.shape_cast %197 : vector<1x512x128xbf16> to vector<512x128xbf16>
    %cst_71 = arith.constant dense<0.000000e+00> : vector<32x128xf32>
    %199 = tpu.matmul %196, %198, %cst_71 {dimension_numbers = #tpu.dot_dimension_numbers<[1], [0], [0], [1], [0, 0, 1, 1], [], []>} : vector<32x512xbf16>, vector<512x128xbf16>, vector<32x128xf32> -> vector<32x128xf32>
    %200 = arith.addf %180, %199 : vector<32x128xf32>
    %201 = arith.addf %152, %200 : vector<32x128xf32>
    %202 = vector.extract_strided_slice %6 {offsets = [8, 0], sizes = [1, 128], strides = [1, 1]} : vector<16x128xf32> to vector<1x128xf32>
    %203 = vector.broadcast %202 : vector<1x128xf32> to vector<32x128xf32>
    %204 = arith.addf %201, %203 : vector<32x128xf32>
    %205 = vector.shape_cast %204 : vector<32x128xf32> to vector<4x8x128xf32>
    %c0_72 = arith.constant 0 : index
    %c0_73 = arith.constant 0 : index
    %c0_74 = arith.constant 0 : index
    %206 = vector.load %arg11[%c0_72, %c0_73, %c0_74] : memref<4x8x128xf32, #tpu.memory_space<vmem>>, vector<4x8x128xf32>
    tpu.vector_store %arg11[%c0_72, %c0_73, %c0_74], %205 {strides = array<i32>} : memref<4x8x128xf32, #tpu.memory_space<vmem>>, vector<4x8x128xf32>,
    return
  }
  func.func @transform_0(%arg0: i32, %arg1: i32) -> (i32, i32, i32) {
    %c0_i32 = arith.constant 0 : i32
    %c0_i32_0 = arith.constant 0 : i32
    %c0_i32_1 = arith.constant 0 : i32
    return %arg0, %c0_i32, %c0_i32_0 : i32, i32, i32
  }
  func.func @transform_1(%arg0: i32, %arg1: i32) -> (i32, i32, i32) {
    %c0_i32 = arith.constant 0 : i32
    %c0_i32_0 = arith.constant 0 : i32
    %c0_i32_1 = arith.constant 0 : i32
    return %arg1, %c0_i32, %c0_i32_0 : i32, i32, i32
  }
  func.func @transform_2(%arg0: i32, %arg1: i32) -> (i32, i32, i32) {
    %c0_i32 = arith.constant 0 : i32
    %c0_i32_0 = arith.constant 0 : i32
    %c0_i32_1 = arith.constant 0 : i32
    return %arg1, %c0_i32, %c0_i32_0 : i32, i32, i32
  }
  func.func @transform_3(%arg0: i32, %arg1: i32) -> (i32, i32, i32) {
    %c0_i32 = arith.constant 0 : i32
    %c0_i32_0 = arith.constant 0 : i32
    %c0_i32_1 = arith.constant 0 : i32
    return %arg1, %c0_i32, %c0_i32_0 : i32, i32, i32
  }
  func.func @transform_4(%arg0: i32, %arg1: i32) -> (i32, i32, i32) {
    %c0_i32 = arith.constant 0 : i32
    %c0_i32_0 = arith.constant 0 : i32
    %c0_i32_1 = arith.constant 0 : i32
    return %arg1, %c0_i32, %c0_i32_0 : i32, i32, i32
  }
  func.func @transform_5(%arg0: i32, %arg1: i32) -> (i32, i32, i32) {
    %c0_i32 = arith.constant 0 : i32
    %c0_i32_0 = arith.constant 0 : i32
    %c0_i32_1 = arith.constant 0 : i32
    return %arg1, %c0_i32, %c0_i32_0 : i32, i32, i32
  }
  func.func @transform_6(%arg0: i32, %arg1: i32) -> (i32, i32, i32) {
    %c0_i32 = arith.constant 0 : i32
    %c0_i32_0 = arith.constant 0 : i32
    %c0_i32_1 = arith.constant 0 : i32
    return %arg1, %c0_i32, %c0_i32_0 : i32, i32, i32
  }
  func.func @transform_7(%arg0: i32, %arg1: i32) -> (i32, i32, i32) {
    %c0_i32 = arith.constant 0 : i32
    %c0_i32_0 = arith.constant 0 : i32
    %c0_i32_1 = arith.constant 0 : i32
    return %arg1, %c0_i32, %c0_i32_0 : i32, i32, i32
  }
  func.func @transform_8(%arg0: i32, %arg1: i32) -> (i32, i32, i32) {
    %c0_i32 = arith.constant 0 : i32
    %c0_i32_0 = arith.constant 0 : i32
    %c0_i32_1 = arith.constant 0 : i32
    return %arg1, %c0_i32, %c0_i32_0 : i32, i32, i32
  }
  func.func @transform_9(%arg0: i32, %arg1: i32) -> (i32, i32, i32) {
    %c0_i32 = arith.constant 0 : i32
    %c0_i32_0 = arith.constant 0 : i32
    %c0_i32_1 = arith.constant 0 : i32
    return %arg0, %c0_i32, %c0_i32_0 : i32, i32, i32
  }
}

</mosaic_0001>

<llo_original>
// kernel: tpu_custom_call.1
$region0: #{tpu_custom_call.1}
  #allocation0 [shape = 'u32[]', space=smem, size = 0x4, offset = 0x4, fixed_abs, tag = 'smem constant byte address 0x4 - core index']
  #allocation1 [shape = 'u32[144,128]{1,0:T(1,128)}', space=vmem, size = 0x12000, scoped, tag = 'internal scratch']
  #allocation2 [shape = 'bf16[32,128]{1,0:T(8,128)(2,1)}', space=vmem, size = 0x2000, scoped, tag = 'scratch operand']
  %s0 = inlined_call_operand.hbm [shape: f32[4,8,128], index: 0, kind: input, shape index: {}, may-alias: {0,9}]
  %s1 = inlined_call_operand.vmem [shape: f32[2,16,128], index: 1, kind: input, shape index: {}]
  %s2 = inlined_call_operand.hbm [shape: bf16[2,128,128], index: 2, kind: input, shape index: {}]
  %s3 = inlined_call_operand.hbm [shape: bf16[2,128,128], index: 3, kind: input, shape index: {}]
  %s4 = inlined_call_operand.hbm [shape: bf16[2,128,128], index: 4, kind: input, shape index: {}]
  %s5 = inlined_call_operand.hbm [shape: bf16[2,128,128], index: 5, kind: input, shape index: {}]
  %s6 = inlined_call_operand.hbm [shape: bf16[2,128,512], index: 6, kind: input, shape index: {}]
  %s7 = inlined_call_operand.vmem [shape: f32[2,1,512], index: 7, kind: input, shape index: {}]
  %s8 = inlined_call_operand.hbm [shape: bf16[2,512,128], index: 8, kind: input, shape index: {}]
  %s9 = inlined_call_operand.hbm [shape: f32[4,8,128], index: 9, kind: output, shape index: {}, may-alias: {0,9}]
  %s10 = sld [smem:[#allocation0]]
  $region101: #{tpu_custom_call.1} parent=0
    _
  %s12 = ssub.s32 1, %s10
  %s13 = scalar_select 0, %s12, %s10
  $region1: #{tpu_custom_call.1} parent=0
    #allocation3 [shape = 'u8[16384]{0}', space=vmem, size = 0x4000, scoped, tag = 'input window, operand 0, single buffered']
    #allocation4 [shape = 's32[2]{0}', space=sflag, size = 0x8, scoped, tag = 'scoped memory for tpu_custom_call.1']
    #allocation5 [shape = 's32[2]{0}', space=sflag, size = 0x8, scoped, tag = 'scoped memory for tpu_custom_call.1']
    #allocation6 [shape = 'u8[65536]{0}', space=vmem, size = 0x10000, scoped, tag = 'input window, operand 2']
    #allocation7 [shape = 's32[2]{0}', space=sflag, size = 0x8, scoped, tag = 'scoped memory for tpu_custom_call.1']
    #allocation8 [shape = 'u8[65536]{0}', space=vmem, size = 0x10000, scoped, tag = 'input window, operand 3']
    #allocation9 [shape = 'u8[65536]{0}', space=vmem, size = 0x10000, scoped, tag = 'input window, operand 4']
    #allocation10 [shape = 's32[2]{0}', space=sflag, size = 0x8, scoped, tag = 'scoped memory for tpu_custom_call.1']
    #allocation11 [shape = 'u8[65536]{0}', space=vmem, size = 0x10000, scoped, tag = 'input window, operand 5']
    #allocation12 [shape = 'u8[262144]{0}', space=vmem, size = 0x40000, scoped, tag = 'input window, operand 6']
    #allocation13 [shape = 's32[2]{0}', space=sflag, size = 0x8, scoped, tag = 'scoped memory for tpu_custom_call.1']
    #allocation14 [shape = 'u8[262144]{0}', space=vmem, size = 0x40000, scoped, tag = 'input window, operand 8']
    #allocation15 [shape = 'u8[16384]{0}', space=vmem, size = 0x4000, scoped, tag = 'output window, operand 0, single buffered']
    %14 = vsyncpa [#allocation4], 0
    %15 = vsyncpa [#allocation7], 0
    %s16 = scalar_lea.sflag [#allocation7], 1
    %17 = vsyncpa %s16, 0
    %18 = vsyncpa [#allocation10], 0
    %s19 = scalar_lea.sflag [#allocation10], 1
    %20 = vsyncpa %s19, 0
    %21 = vsyncpa [#allocation13], 0
    %s22 = scalar_lea.sflag [#allocation13], 1
    %23 = vsyncpa %s22, 0
    %24 = vsyncpa [#allocation5], 0
    loop: start=0, step=1, limit=4
    $region2: #{tpu_custom_call.1} parent=1 // loop_pre_header
      _
    $region3: #{tpu_custom_call.1} parent=1 // loop_header
      %s26 = sphi 0, %s30
      %p27 = scmp.ge.s32.totalorder %s26, 4
      %s33 = sphi 0, %s45
      %s34 = sphi 0, %s41
      %s35 = sphi 0, %s33
      %s36 = sphi 0, %s34
      %s37 = sphi 0, %s35
      %s38 = sphi 0, %s36
      %s48 = sphi 0, %s50
      %s51 = sphi 0, %s48
      %s52 = sphi 0, %s51
      %s68 = sphi 0, %s52
      %s74 = sphi 0, %s76
      %s77 = sphi 0, %s74
      %s78 = sphi 0, %s77
      %s94 = sphi 0, %s78
      %s100 = sphi 0, %s102
      %s103 = sphi 0, %s100
      %s104 = sphi 0, %s103
      %s120 = sphi 0, %s104
      %s126 = sphi 0, %s128
      %s129 = sphi 0, %s126
      %s130 = sphi 0, %s129
      %s146 = sphi 0, %s130
      %s152 = sphi 0, %s154
      %s155 = sphi 0, %s152
      %s156 = sphi 0, %s155
      %s172 = sphi 0, %s156
      %s178 = sphi 0, %s180
      %s181 = sphi 0, %s178
      %s182 = sphi 0, %s181
      %s198 = sphi 0, %s182
      %s204 = sphi 0, %s206
      %s207 = sphi 0, %s204
      %s208 = sphi 0, %s207
      %s224 = sphi 0, %s208
      %s230 = sphi 0, %s232
      %s233 = sphi 0, %s230
      %s234 = sphi 0, %s233
      %s250 = sphi 0, %s234
      %s256 = sphi 0, %s258
      %s259 = sphi 0, %s256
      %s260 = sphi 0, %s259
      %s276 = sphi 0, %s260
      %s282 = sphi 0, %s284
      %s285 = sphi 0, %s282
      %s286 = sphi 0, %s285
      %s302 = sphi 0, %s286
    $region4: #{tpu_custom_call.1} parent=1 // loop_header_branch
      %29 = sbr.rel (%p27) target = $region8
    $region5: #{tpu_custom_call.1} parent=1 // loop_body
      %s31 = ssub.s32 %s26, 1
      %s32 = ssub.s32 %s26, 2
      %s39 = sadd.s32 1, %s34
      %p40 = scmp.ge.s32.totalorder %s39, 2
      %s41 = scalar_select %p40, 0, %s39
      %s42 = sadd.s32 1, %s33
      %s43 = scalar_select %p40, %s42, %s33
      %p44 = scmp.ge.s32.totalorder %s43, 1
      %s45 = scalar_select %p44, 0, %s43
      %s46 = ssub.s32 %s33, %s45
      %p47 = scmp.eq.s32.totalorder %s46, 0
      %s49 = sadd.s32 %s48, 1
      %s50 = scalar_select %p47, %s48, %s49
      %p53 = pneg %p47
      %p54 = scmp.eq.s32.totalorder %s26, 1
      %p55 = por %p53, %p54
      %p56 = scmp.ne.s32.totalorder %s48, %s51
      %p57 = scmp.eq.s32.totalorder %s26, 0
      %p58 = por %p56, %p57
      %p59 = scmp.ne.s32.totalorder %s48, %s51
      %p60 = scmp.eq.s32.totalorder %s31, 1
      %p61 = por %p59, %p60
      %p62 = scmp.ne.s32.totalorder %s51, %s52
      %p63 = scmp.eq.s32.totalorder %s31, 0
      %p64 = por %p62, %p63
      %p65 = scmp.ne.s32.totalorder %s51, %s52
      %p66 = scmp.eq.s32.totalorder %s32, 1
      %p67 = por %p65, %p66
      %p69 = scmp.ne.s32.totalorder %s52, %s68
      %p70 = scmp.eq.s32.totalorder %s32, 0
      %p71 = por %p69, %p70
      %s72 = ssub.s32 %s34, %s41
      %p73 = scmp.eq.s32.totalorder %s72, 0
      %s75 = sadd.s32 %s74, 1
      %s76 = scalar_select %p73, %s74, %s75
      %p79 = pneg %p73
      %p80 = scmp.eq.s32.totalorder %s26, 1
      %p81 = por %p79, %p80
      %p82 = scmp.ne.s32.totalorder %s74, %s77
      %p83 = scmp.eq.s32.totalorder %s26, 0
      %p84 = por %p82, %p83
      %p85 = scmp.ne.s32.totalorder %s74, %s77
      %p86 = scmp.eq.s32.totalorder %s31, 1
      %p87 = por %p85, %p86
      %p88 = scmp.ne.s32.totalorder %s77, %s78
      %p89 = scmp.eq.s32.totalorder %s31, 0
      %p90 = por %p88, %p89
      %p91 = scmp.ne.s32.totalorder %s77, %s78
      %p92 = scmp.eq.s32.totalorder %s32, 1
      %p93 = por %p91, %p92
      %p95 = scmp.ne.s32.totalorder %s78, %s94
      %p96 = scmp.eq.s32.totalorder %s32, 0
      %p97 = por %p95, %p96
      %s98 = ssub.s32 %s34, %s41
      %p99 = scmp.eq.s32.totalorder %s98, 0
      %s101 = sadd.s32 %s100, 1
      %s102 = scalar_select %p99, %s100, %s101
      %p105 = pneg %p99
      %p106 = scmp.eq.s32.totalorder %s26, 1
      %p107 = por %p105, %p106
      %p108 = scmp.ne.s32.totalorder %s100, %s103
      %p109 = scmp.eq.s32.totalorder %s26, 0
      %p110 = por %p108, %p109
      %p111 = scmp.ne.s32.totalorder %s100, %s103
      %p112 = scmp.eq.s32.totalorder %s31, 1
      %p113 = por %p111, %p112
      %p114 = scmp.ne.s32.totalorder %s103, %s104
      %p115 = scmp.eq.s32.totalorder %s31, 0
      %p116 = por %p114, %p115
      %p117 = scmp.ne.s32.totalorder %s103, %s104
      %p118 = scmp.eq.s32.totalorder %s32, 1
      %p119 = por %p117, %p118
      %p121 = scmp.ne.s32.totalorder %s104, %s120
      %p122 = scmp.eq.s32.totalorder %s32, 0
      %p123 = por %p121, %p122
      %s124 = ssub.s32 %s34, %s41
      %p125 = scmp.eq.s32.totalorder %s124, 0
      %s127 = sadd.s32 %s126, 1
      %s128 = scalar_select %p125, %s126, %s127
      %p131 = pneg %p125
      %p132 = scmp.eq.s32.totalorder %s26, 1
      %p133 = por %p131, %p132
      %p134 = scmp.ne.s32.totalorder %s126, %s129
      %p135 = scmp.eq.s32.totalorder %s26, 0
      %p136 = por %p134, %p135
      %p137 = scmp.ne.s32.totalorder %s126, %s129
      %p138 = scmp.eq.s32.totalorder %s31, 1
      %p139 = por %p137, %p138
      %p140 = scmp.ne.s32.totalorder %s129, %s130
      %p141 = scmp.eq.s32.totalorder %s31, 0
      %p142 = por %p140, %p141
      %p143 = scmp.ne.s32.totalorder %s129, %s130
      %p144 = scmp.eq.s32.totalorder %s32, 1
      %p145 = por %p143, %p144
      %p147 = scmp.ne.s32.totalorder %s130, %s146
      %p148 = scmp.eq.s32.totalorder %s32, 0
      %p149 = por %p147, %p148
      %s150 = ssub.s32 %s34, %s41
      %p151 = scmp.eq.s32.totalorder %s150, 0
      %s153 = sadd.s32 %s152, 1
      %s154 = scalar_select %p151, %s152, %s153
      %p157 = pneg %p151
      %p158 = scmp.eq.s32.totalorder %s26, 1
      %p159 = por %p157, %p158
      %p160 = scmp.ne.s32.totalorder %s152, %s155
      %p161 = scmp.eq.s32.totalorder %s26, 0
      %p162 = por %p160, %p161
      %p163 = scmp.ne.s32.totalorder %s152, %s155
      %p164 = scmp.eq.s32.totalorder %s31, 1
      %p165 = por %p163, %p164
      %p166 = scmp.ne.s32.totalorder %s155, %s156
      %p167 = scmp.eq.s32.totalorder %s31, 0
      %p168 = por %p166, %p167
      %p169 = scmp.ne.s32.totalorder %s155, %s156
      %p170 = scmp.eq.s32.totalorder %s32, 1
      %p171 = por %p169, %p170
      %p173 = scmp.ne.s32.totalorder %s156, %s172
      %p174 = scmp.eq.s32.totalorder %s32, 0
      %p175 = por %p173, %p174
      %s176 = ssub.s32 %s34, %s41
      %p177 = scmp.eq.s32.totalorder %s176, 0
      %s179 = sadd.s32 %s178, 1
      %s180 = scalar_select %p177, %s178, %s179
      %p183 = pneg %p177
      %p184 = scmp.eq.s32.totalorder %s26, 1
      %p185 = por %p183, %p184
      %p186 = scmp.ne.s32.totalorder %s178, %s181
      %p187 = scmp.eq.s32.totalorder %s26, 0
      %p188 = por %p186, %p187
      %p189 = scmp.ne.s32.totalorder %s178, %s181
      %p190 = scmp.eq.s32.totalorder %s31, 1
      %p191 = por %p189, %p190
      %p192 = scmp.ne.s32.totalorder %s181, %s182
      %p193 = scmp.eq.s32.totalorder %s31, 0
      %p194 = por %p192, %p193
      %p195 = scmp.ne.s32.totalorder %s181, %s182
      %p196 = scmp.eq.s32.totalorder %s32, 1
      %p197 = por %p195, %p196
      %p199 = scmp.ne.s32.totalorder %s182, %s198
      %p200 = scmp.eq.s32.totalorder %s32, 0
      %p201 = por %p199, %p200
      %s202 = ssub.s32 %s34, %s41
      %p203 = scmp.eq.s32.totalorder %s202, 0
      %s205 = sadd.s32 %s204, 1
      %s206 = scalar_select %p203, %s204, %s205
      %p209 = pneg %p203
      %p210 = scmp.eq.s32.totalorder %s26, 1
      %p211 = por %p209, %p210
      %p212 = scmp.ne.s32.totalorder %s204, %s207
      %p213 = scmp.eq.s32.totalorder %s26, 0
      %p214 = por %p212, %p213
      %p215 = scmp.ne.s32.totalorder %s204, %s207
      %p216 = scmp.eq.s32.totalorder %s31, 1
      %p217 = por %p215, %p216
      %p218 = scmp.ne.s32.totalorder %s207, %s208
      %p219 = scmp.eq.s32.totalorder %s31, 0
      %p220 = por %p218, %p219
      %p221 = scmp.ne.s32.totalorder %s207, %s208
      %p222 = scmp.eq.s32.totalorder %s32, 1
      %p223 = por %p221, %p222
      %p225 = scmp.ne.s32.totalorder %s208, %s224
      %p226 = scmp.eq.s32.totalorder %s32, 0
      %p227 = por %p225, %p226
      %s228 = ssub.s32 %s34, %s41
      %p229 = scmp.eq.s32.totalorder %s228, 0
      %s231 = sadd.s32 %s230, 1
      %s232 = scalar_select %p229, %s230, %s231
      %p235 = pneg %p229
      %p236 = scmp.eq.s32.totalorder %s26, 1
      %p237 = por %p235, %p236
      %p238 = scmp.ne.s32.totalorder %s230, %s233
      %p239 = scmp.eq.s32.totalorder %s26, 0
      %p240 = por %p238, %p239
      %p241 = scmp.ne.s32.totalorder %s230, %s233
      %p242 = scmp.eq.s32.totalorder %s31, 1
      %p243 = por %p241, %p242
      %p244 = scmp.ne.s32.totalorder %s233, %s234
      %p245 = scmp.eq.s32.totalorder %s31, 0
      %p246 = por %p244, %p245
      %p247 = scmp.ne.s32.totalorder %s233, %s234
      %p248 = scmp.eq.s32.totalorder %s32, 1
      %p249 = por %p247, %p248
      %p251 = scmp.ne.s32.totalorder %s234, %s250
      %p252 = scmp.eq.s32.totalorder %s32, 0
      %p253 = por %p251, %p252
      %s254 = ssub.s32 %s34, %s41
      %p255 = scmp.eq.s32.totalorder %s254, 0
      %s257 = sadd.s32 %s256, 1
      %s258 = scalar_select %p255, %s256, %s257
      %p261 = pneg %p255
      %p262 = scmp.eq.s32.totalorder %s26, 1
      %p263 = por %p261, %p262
      %p264 = scmp.ne.s32.totalorder %s256, %s259
      %p265 = scmp.eq.s32.totalorder %s26, 0
      %p266 = por %p264, %p265
      %p267 = scmp.ne.s32.totalorder %s256, %s259
      %p268 = scmp.eq.s32.totalorder %s31, 1
      %p269 = por %p267, %p268
      %p270 = scmp.ne.s32.totalorder %s259, %s260
      %p271 = scmp.eq.s32.totalorder %s31, 0
      %p272 = por %p270, %p271
      %p273 = scmp.ne.s32.totalorder %s259, %s260
      %p274 = scmp.eq.s32.totalorder %s32, 1
      %p275 = por %p273, %p274
      %p277 = scmp.ne.s32.totalorder %s260, %s276
      %p278 = scmp.eq.s32.totalorder %s32, 0
      %p279 = por %p277, %p278
      %s280 = ssub.s32 %s33, %s45
      %p281 = scmp.eq.s32.totalorder %s280, 0
      %s283 = sadd.s32 %s282, 1
      %s284 = scalar_select %p281, %s282, %s283
      %p287 = pneg %p281
      %p288 = scmp.eq.s32.totalorder %s26, 1
      %p289 = por %p287, %p288
      %p290 = scmp.ne.s32.totalorder %s282, %s285
      %p291 = scmp.eq.s32.totalorder %s26, 0
      %p292 = por %p290, %p291
      %p293 = scmp.ne.s32.totalorder %s282, %s285
      %p294 = scmp.eq.s32.totalorder %s31, 1
      %p295 = por %p293, %p294
      %p296 = scmp.ne.s32.totalorder %s285, %s286
      %p297 = scmp.eq.s32.totalorder %s31, 0
      %p298 = por %p296, %p297
      %p299 = scmp.ne.s32.totalorder %s285, %s286
      %p300 = scmp.eq.s32.totalorder %s32, 1
      %p301 = por %p299, %p300
      %p303 = scmp.ne.s32.totalorder %s286, %s302
      %p304 = scmp.eq.s32.totalorder %s32, 0
      %p305 = por %p303, %p304
      %p306 = scmp.le.s32.totalorder 1, %s26
      %p307 = scmp.lt.s32.totalorder %s26, 3
      %p308 = pnand %p306, %p307
      %p309 = pneg %p308
      // Predicated region
      $region9: #{tpu_custom_call.1} parent=5 // pred_check
        _
      $region10: #{tpu_custom_call.1} parent=5 // pred_check_branch
        %311 = sbr.rel (%p308) target = $region12
      $region11: #{tpu_custom_call.1} parent=5 // pred_region
        %s312 = ssub.s32 %s26, 1
        // Predicated region
        $region13: #{tpu_custom_call.1} parent=11 // pred_check
          %p313 = pneg %p64
        $region14: #{tpu_custom_call.1} parent=11 // pred_check_branch
          %315 = sbr.rel (%p313) target = $region16
        $region15: #{tpu_custom_call.1} parent=11 // pred_region
          %s316 = smul.u32 4, %s35
          %s318 = ssub.s32 512, 512
          %319 = vsyncadd [#allocation4], %s318
          %s320 = smul.addr %s316, 128
          %s321 = scalar_lea.hbm %s0, %s320
          %s322 = sshll.u32 [#allocation3], 4
          %s323 = int_to_ptr.vmem [resolvable:$true] %s322
          %328 = dma.hbm_to_vmem [thread:$0]  %s321, 512, %s323, [#allocation4], 128, 128, 8
        $region16: #{tpu_custom_call.1} parent=11 // pred_fallthru
          _
      $region12: #{tpu_custom_call.1} parent=5 // pred_fallthru
        _
      %p329 = scmp.lt.s32.totalorder %s26, 2
      // Predicated region
      $region17: #{tpu_custom_call.1} parent=5 // pred_check
        %p330 = pneg %p329
      $region18: #{tpu_custom_call.1} parent=5 // pred_check_branch
        %332 = sbr.rel (%p330) target = $region20
      $region19: #{tpu_custom_call.1} parent=5 // pred_region
        // Predicated region
        $region21: #{tpu_custom_call.1} parent=19 // pred_check
          %p333 = pneg %p84
        $region22: #{tpu_custom_call.1} parent=19 // pred_check_branch
          %335 = sbr.rel (%p333) target = $region24
        $region23: #{tpu_custom_call.1} parent=19 // pred_region
          %p336 = scmp.lt.s32.totalorder %s34, 1
          %s337 = scalar_select %p336, %s34, 1
          %s338 = smul.addr %s337, 2
          %s339 = smul.addr %s338, 8
          %s340 = scalar_lea.vmem %s1, %s339
        $region24: #{tpu_custom_call.1} parent=19 // pred_fallthru
          _
        // Predicated region
        $region25: #{tpu_custom_call.1} parent=19 // pred_check
          %p341 = pneg %p110
        $region26: #{tpu_custom_call.1} parent=19 // pred_check_branch
          %343 = sbr.rel (%p341) target = $region28
        $region27: #{tpu_custom_call.1} parent=19 // pred_region
          %s344 = sand.u32 %s26, 1
          %s345 = scalar_lea.sflag [#allocation7], %s344
          %s346 = sand.u32 %s100, 1
          %s347 = smul.addr %s346, 64
          %s348 = scalar_lea.vmem [#allocation6], %s347
          %s350 = ssub.s32 1024, 1024
          %351 = vsyncadd %s345, %s350
          %s352 = smul.addr %s34, 16
          %s353 = smul.addr %s352, 64
          %s354 = scalar_lea.hbm %s2, %s353
          %s355 = sshll.u32 %s348, 4
          %s356 = int_to_ptr.vmem [resolvable:$true] %s355
          %361 = dma.hbm_to_vmem [thread:$0]  %s354, 1024, %s356, %s345, 64, 64, 4
        $region28: #{tpu_custom_call.1} parent=19 // pred_fallthru
          _
        // Predicated region
        $region29: #{tpu_custom_call.1} parent=19 // pred_check
          %p362 = pneg %p136
        $region30: #{tpu_custom_call.1} parent=19 // pred_check_branch
          %364 = sbr.rel (%p362) target = $region32
        $region31: #{tpu_custom_call.1} parent=19 // pred_region
          %s365 = sand.u32 %s26, 1
          %s366 = scalar_lea.sflag [#allocation7], %s365
          %s367 = sand.u32 %s126, 1
          %s368 = smul.addr %s367, 64
          %s369 = scalar_lea.vmem [#allocation8], %s368
          %s371 = ssub.s32 1024, 1024
          %372 = vsyncadd %s366, %s371
          %s373 = smul.addr %s34, 16
          %s374 = smul.addr %s373, 64
          %s375 = scalar_lea.hbm %s3, %s374
          %s376 = sshll.u32 %s369, 4
          %s377 = int_to_ptr.vmem [resolvable:$true] %s376
          %382 = dma.hbm_to_vmem [thread:$0]  %s375, 1024, %s377, %s366, 64, 64, 4
        $region32: #{tpu_custom_call.1} parent=19 // pred_fallthru
          _
        // Predicated region
        $region33: #{tpu_custom_call.1} parent=19 // pred_check
          %p383 = pneg %p162
        $region34: #{tpu_custom_call.1} parent=19 // pred_check_branch
          %385 = sbr.rel (%p383) target = $region36
        $region35: #{tpu_custom_call.1} parent=19 // pred_region
          %s386 = sand.u32 %s26, 1
          %s387 = scalar_lea.sflag [#allocation10], %s386
          %s388 = sand.u32 %s152, 1
          %s389 = smul.addr %s388, 64
          %s390 = scalar_lea.vmem [#allocation9], %s389
          %s392 = ssub.s32 1024, 1024
          %393 = vsyncadd %s387, %s392
          %s394 = smul.addr %s34, 16
          %s395 = smul.addr %s394, 64
          %s396 = scalar_lea.hbm %s4, %s395
          %s397 = sshll.u32 %s390, 4
          %s398 = int_to_ptr.vmem [resolvable:$true] %s397
          %403 = dma.hbm_to_vmem [thread:$0]  %s396, 1024, %s398, %s387, 64, 64, 4
        $region36: #{tpu_custom_call.1} parent=19 // pred_fallthru
          _
        // Predicated region
        $region37: #{tpu_custom_call.1} parent=19 // pred_check
          %p404 = pneg %p188
        $region38: #{tpu_custom_call.1} parent=19 // pred_check_branch
          %406 = sbr.rel (%p404) target = $region40
        $region39: #{tpu_custom_call.1} parent=19 // pred_region
          %s407 = sand.u32 %s26, 1
          %s408 = scalar_lea.sflag [#allocation10], %s407
          %s409 = sand.u32 %s178, 1
          %s410 = smul.addr %s409, 64
          %s411 = scalar_lea.vmem [#allocation11], %s410
          %s413 = ssub.s32 1024, 1024
          %414 = vsyncadd %s408, %s413
          %s415 = smul.addr %s34, 16
          %s416 = smul.addr %s415, 64
          %s417 = scalar_lea.hbm %s5, %s416
          %s418 = sshll.u32 %s411, 4
          %s419 = int_to_ptr.vmem [resolvable:$true] %s418
          %424 = dma.hbm_to_vmem [thread:$0]  %s417, 1024, %s419, %s408, 64, 64, 4
        $region40: #{tpu_custom_call.1} parent=19 // pred_fallthru
          _
        // Predicated region
        $region41: #{tpu_custom_call.1} parent=19 // pred_check
          %p425 = pneg %p214
        $region42: #{tpu_custom_call.1} parent=19 // pred_check_branch
          %427 = sbr.rel (%p425) target = $region44
        $region43: #{tpu_custom_call.1} parent=19 // pred_region
          %s428 = sand.u32 %s26, 1
          %s429 = scalar_lea.sflag [#allocation13], %s428
          %s430 = sand.u32 %s204, 1
          %s431 = smul.addr %s430, 256
          %s432 = scalar_lea.vmem [#allocation12], %s431
          %s434 = ssub.s32 4096, 4096
          %435 = vsyncadd %s429, %s434
          %s436 = smul.addr %s34, 64
          %s437 = smul.addr %s436, 64
          %s438 = scalar_lea.hbm %s6, %s437
          %s439 = sshll.u32 %s432, 4
          %s440 = int_to_ptr.vmem [resolvable:$true] %s439
          %445 = dma.hbm_to_vmem [thread:$0]  %s438, 4096, %s440, %s429, 256, 256, 16
        $region44: #{tpu_custom_call.1} parent=19 // pred_fallthru
          _
        // Predicated region
        $region45: #{tpu_custom_call.1} parent=19 // pred_check
          %p446 = pneg %p240
        $region46: #{tpu_custom_call.1} parent=19 // pred_check_branch
          %448 = sbr.rel (%p446) target = $region48
        $region47: #{tpu_custom_call.1} parent=19 // pred_region
          %p449 = scmp.lt.s32.totalorder %s34, 1
          %s450 = scalar_select %p449, %s34, 1
          %s451 = smul.addr %s450, 4
          %s452 = scalar_lea.vmem %s7, %s451
        $region48: #{tpu_custom_call.1} parent=19 // pred_fallthru
          _
        // Predicated region
        $region49: #{tpu_custom_call.1} parent=19 // pred_check
          %p453 = pneg %p266
        $region50: #{tpu_custom_call.1} parent=19 // pred_check_branch
          %455 = sbr.rel (%p453) target = $region52
        $region51: #{tpu_custom_call.1} parent=19 // pred_region
          %s456 = sand.u32 %s26, 1
          %s457 = scalar_lea.sflag [#allocation13], %s456
          %s458 = sand.u32 %s256, 1
          %s459 = smul.addr %s458, 256
          %s460 = scalar_lea.vmem [#allocation14], %s459
          %s462 = ssub.s32 4096, 4096
          %463 = vsyncadd %s457, %s462
          %s464 = smul.addr %s34, 64
          %s465 = smul.addr %s464, 64
          %s466 = scalar_lea.hbm %s8, %s465
          %s467 = sshll.u32 %s460, 4
          %s468 = int_to_ptr.vmem [resolvable:$true] %s467
          %473 = dma.hbm_to_vmem [thread:$0]  %s466, 4096, %s468, %s457, 64, 64, 4
        $region52: #{tpu_custom_call.1} parent=19 // pred_fallthru
          _
      $region20: #{tpu_custom_call.1} parent=5 // pred_fallthru
        _
      %p474 = scmp.le.s32.totalorder 1, %s26
      %p475 = scmp.lt.s32.totalorder %s26, 3
      %p476 = pnand %p474, %p475
      %p477 = pneg %p476
      // Predicated region
      $region53: #{tpu_custom_call.1} parent=5 // pred_check
        _
      $region54: #{tpu_custom_call.1} parent=5 // pred_check_branch
        %479 = sbr.rel (%p476) target = $region56
      $region55: #{tpu_custom_call.1} parent=5 // pred_region
        %s480 = ssub.s32 %s26, 1
        // Predicated region
        $region57: #{tpu_custom_call.1} parent=55 // pred_check
          %p481 = pneg %p64
        $region58: #{tpu_custom_call.1} parent=55 // pred_check_branch
          %483 = sbr.rel (%p481) target = $region60
        $region59: #{tpu_custom_call.1} parent=55 // pred_region
          %484 = dma.done [#allocation4], 512
        $region60: #{tpu_custom_call.1} parent=55 // pred_fallthru
          _
        %s485 = sand.u32 %s31, 1
        %s486 = scalar_lea.sflag [#allocation7], %s485
        %s487 = sand.u32 %s103, 1
        %s488 = smul.addr %s487, 64
        %s489 = scalar_lea.vmem [#allocation6], %s488
        // Predicated region
        $region61: #{tpu_custom_call.1} parent=55 // pred_check
          %p490 = pneg %p116
        $region62: #{tpu_custom_call.1} parent=55 // pred_check_branch
          %492 = sbr.rel (%p490) target = $region64
        $region63: #{tpu_custom_call.1} parent=55 // pred_region
          %493 = dma.done %s486, 1024
        $region64: #{tpu_custom_call.1} parent=55 // pred_fallthru
          _
        %s494 = sand.u32 %s31, 1
        %s495 = scalar_lea.sflag [#allocation7], %s494
        %s496 = sand.u32 %s129, 1
        %s497 = smul.addr %s496, 64
        %s498 = scalar_lea.vmem [#allocation8], %s497
        // Predicated region
        $region65: #{tpu_custom_call.1} parent=55 // pred_check
          %p499 = pneg %p142
        $region66: #{tpu_custom_call.1} parent=55 // pred_check_branch
          %501 = sbr.rel (%p499) target = $region68
        $region67: #{tpu_custom_call.1} parent=55 // pred_region
          %502 = dma.done %s495, 1024
        $region68: #{tpu_custom_call.1} parent=55 // pred_fallthru
          _
        %s503 = sand.u32 %s31, 1
        %s504 = scalar_lea.sflag [#allocation10], %s503
        %s505 = sand.u32 %s155, 1
        %s506 = smul.addr %s505, 64
        %s507 = scalar_lea.vmem [#allocation9], %s506
        // Predicated region
        $region69: #{tpu_custom_call.1} parent=55 // pred_check
          %p508 = pneg %p168
        $region70: #{tpu_custom_call.1} parent=55 // pred_check_branch
          %510 = sbr.rel (%p508) target = $region72
        $region71: #{tpu_custom_call.1} parent=55 // pred_region
          %511 = dma.done %s504, 1024
        $region72: #{tpu_custom_call.1} parent=55 // pred_fallthru
          _
        %s512 = sand.u32 %s31, 1
        %s513 = scalar_lea.sflag [#allocation10], %s512
        %s514 = sand.u32 %s181, 1
        %s515 = smul.addr %s514, 64
        %s516 = scalar_lea.vmem [#allocation11], %s515
        // Predicated region
        $region73: #{tpu_custom_call.1} parent=55 // pred_check
          %p517 = pneg %p194
        $region74: #{tpu_custom_call.1} parent=55 // pred_check_branch
          %519 = sbr.rel (%p517) target = $region76
        $region75: #{tpu_custom_call.1} parent=55 // pred_region
          %520 = dma.done %s513, 1024
        $region76: #{tpu_custom_call.1} parent=55 // pred_fallthru
          _
        %s521 = sand.u32 %s31, 1
        %s522 = scalar_lea.sflag [#allocation13], %s521
        %s523 = sand.u32 %s207, 1
        %s524 = smul.addr %s523, 256
        %s525 = scalar_lea.vmem [#allocation12], %s524
        // Predicated region
        $region77: #{tpu_custom_call.1} parent=55 // pred_check
          %p526 = pneg %p220
        $region78: #{tpu_custom_call.1} parent=55 // pred_check_branch
          %528 = sbr.rel (%p526) target = $region80
        $region79: #{tpu_custom_call.1} parent=55 // pred_region
          %529 = dma.done %s522, 4096
        $region80: #{tpu_custom_call.1} parent=55 // pred_fallthru
          _
        %s530 = sand.u32 %s31, 1
        %s531 = scalar_lea.sflag [#allocation13], %s530
        %s532 = sand.u32 %s259, 1
        %s533 = smul.addr %s532, 256
        %s534 = scalar_lea.vmem [#allocation14], %s533
        // Predicated region
        $region81: #{tpu_custom_call.1} parent=55 // pred_check
          %p535 = pneg %p272
        $region82: #{tpu_custom_call.1} parent=55 // pred_check_branch
          %537 = sbr.rel (%p535) target = $region84
        $region83: #{tpu_custom_call.1} parent=55 // pred_region
          %538 = dma.done %s531, 4096
        $region84: #{tpu_custom_call.1} parent=55 // pred_fallthru
          _
        %p539 = pneg %p64
        %p540 = pneg %p61
        %p541 = scmp.lt.s32.totalorder %s36, 1
        %s542 = scalar_select %p541, %s36, 1
        %s543 = smul.addr %s542, 2
        %s544 = smul.addr %s543, 8
        %s545 = scalar_lea.vmem %s1, %s544
        %p546 = pneg %p90
        %p547 = pneg %p87
        %s548 = sand.u32 %s31, 1
        %s549 = scalar_lea.sflag [#allocation7], %s548
        %s550 = sand.u32 %s103, 1
        %s551 = smul.addr %s550, 64
        %s552 = scalar_lea.vmem [#allocation6], %s551
        %p553 = pneg %p116
        %p554 = pneg %p113
        %s555 = sand.u32 %s31, 1
        %s556 = scalar_lea.sflag [#allocation7], %s555
        %s557 = sand.u32 %s129, 1
        %s558 = smul.addr %s557, 64
        %s559 = scalar_lea.vmem [#allocation8], %s558
        %p560 = pneg %p142
        %p561 = pneg %p139
        %s562 = sand.u32 %s31, 1
        %s563 = scalar_lea.sflag [#allocation10], %s562
        %s564 = sand.u32 %s155, 1
        %s565 = smul.addr %s564, 64
        %s566 = scalar_lea.vmem [#allocation9], %s565
        %p567 = pneg %p168
        %p568 = pneg %p165
        %s569 = sand.u32 %s31, 1
        %s570 = scalar_lea.sflag [#allocation10], %s569
        %s571 = sand.u32 %s181, 1
        %s572 = smul.addr %s571, 64
        %s573 = scalar_lea.vmem [#allocation11], %s572
        %p574 = pneg %p194
        %p575 = pneg %p191
        %s576 = sand.u32 %s31, 1
        %s577 = scalar_lea.sflag [#allocation13], %s576
        %s578 = sand.u32 %s207, 1
        %s579 = smul.addr %s578, 256
        %s580 = scalar_lea.vmem [#allocation12], %s579
        %p581 = pneg %p220
        %p582 = pneg %p217
        %p583 = scmp.lt.s32.totalorder %s36, 1
        %s584 = scalar_select %p583, %s36, 1
        %s585 = smul.addr %s584, 4
        %s586 = scalar_lea.vmem %s7, %s585
        %p587 = pneg %p246
        %p588 = pneg %p243
        %s589 = sand.u32 %s31, 1
        %s590 = scalar_lea.sflag [#allocation13], %s589
        %s591 = sand.u32 %s259, 1
        %s592 = smul.addr %s591, 256
        %s593 = scalar_lea.vmem [#allocation14], %s592
        %p594 = pneg %p272
        %p595 = pneg %p269
        %p596 = pneg %p298
        %p597 = pneg %p295
        %s598 = smul.u32 4, %s35
        %p599 = scmp.lt.s32.totalorder %s36, 1
        %s600 = scalar_select %p599, %s36, 1
        %s601 = smul.addr %s600, 2
        %s602 = smul.addr %s601, 8
        %s603 = scalar_lea.vmem %s1, %s602
        %p604 = scmp.lt.s32.totalorder %s36, 1
        %s605 = scalar_select %p604, %s36, 1
        %s606 = smul.addr %s605, 4
        %s607 = scalar_lea.vmem %s7, %s606
        %s608 = smul.u32 4, %s35
        %p610 = scmp.eq.s32.totalorder %s36, 0
        // Predicated region
        $region85: #{tpu_custom_call.1} parent=55 // pred_check
          %p611 = pneg %p610
        $region86: #{tpu_custom_call.1} parent=55 // pred_check_branch
          %613 = sbr.rel (%p611) target = $region88
        $region87: #{tpu_custom_call.1} parent=55 // pred_region
          %v614 = vld [vmem:[#allocation3] sm:$0xff]
          %v615 = vld [vmem:[#allocation3 + $0x8] sm:$0xff]
          %v616 = vld [vmem:[#allocation3 + $0x10] sm:$0xff]
          %v617 = vld [vmem:[#allocation3 + $0x18] sm:$0xff]
          %618 = vst [vmem:[#allocation15] sm:$0xff] %v614
          %619 = vst [vmem:[#allocation15 + $0x8] sm:$0xff] %v615
          %620 = vst [vmem:[#allocation15 + $0x10] sm:$0xff] %v616
          %621 = vst [vmem:[#allocation15 + $0x18] sm:$0xff] %v617
        $region88: #{tpu_custom_call.1} parent=55 // pred_fallthru
          _
        %v622 = vld [vmem:[#allocation15] sm:$0xff]
        %v623 = vld [vmem:[#allocation15 + $0x8] sm:$0xff]
        %v624 = vld [vmem:[#allocation15 + $0x10] sm:$0xff]
        %v625 = vld [vmem:[#allocation15 + $0x18] sm:$0xff]
        %v626 = vld [vmem:[%s603] sm:$0xff]
        %v627 = vld [vmem:[%s603 + $0x8] sm:$0xff]
        %628 = vadd.xlane.f32.xlu0 %v622
        %v629 = vpop.xlane.xlu0 %628
        %630 = vadd.xlane.f32.xlu0 %v623
        %v631 = vpop.xlane.xlu0 %630
        %632 = vadd.xlane.f32.xlu0 %v624
        %v633 = vpop.xlane.xlu0 %632
        %634 = vadd.xlane.f32.xlu0 %v625
        %v635 = vpop.xlane.xlu0 %634
        %v636 = vrcp.pop 128.0
        %v637 = vmul.f32 %v629, %v636
        %v638 = vmul.f32 %v631, %v636
        %v639 = vmul.f32 %v633, %v636
        %v640 = vmul.f32 %v635, %v636
        %v641 = vmul.f32 %v622, %v622
        %v642 = vmul.f32 %v623, %v623
        %v643 = vmul.f32 %v624, %v624
        %v644 = vmul.f32 %v625, %v625
        %645 = vadd.xlane.f32.xlu0 %v641
        %v646 = vpop.xlane.xlu0 %645
        %647 = vadd.xlane.f32.xlu0 %v642
        %v648 = vpop.xlane.xlu0 %647
        %649 = vadd.xlane.f32.xlu0 %v643
        %v650 = vpop.xlane.xlu0 %649
        %651 = vadd.xlane.f32.xlu0 %v644
        %v652 = vpop.xlane.xlu0 %651
        %v653 = vmul.f32 %v646, %v636
        %v654 = vmul.f32 %v648, %v636
        %v655 = vmul.f32 %v650, %v636
        %v656 = vmul.f32 %v652, %v636
        %v657 = vmul.f32 %v637, %v637
        %v658 = vmul.f32 %v638, %v638
        %v659 = vmul.f32 %v639, %v639
        %v660 = vmul.f32 %v640, %v640
        %v661 = vsub.f32 %v653, %v657
        %v662 = vsub.f32 %v654, %v658
        %v663 = vsub.f32 %v655, %v659
        %v664 = vsub.f32 %v656, %v660
        %v665 = vmax.f32 %v661, 0.0
        %v666 = vmax.f32 %v662, 0.0
        %v667 = vmax.f32 %v663, 0.0
        %v668 = vmax.f32 %v664, 0.0
        %v669 = vsub.f32 %v622, %v637
        %v670 = vsub.f32 %v623, %v638
        %v671 = vsub.f32 %v624, %v639
        %v672 = vsub.f32 %v625, %v640
        %v673 = vadd.f32 %v665, 1e-05
        %v674 = vadd.f32 %v666, 1e-05
        %v675 = vadd.f32 %v667, 1e-05
        %v676 = vadd.f32 %v668, 1e-05
        %v677 = vrsqrt.pop %v673
        %v678 = vrsqrt.pop %v674
        %v679 = vrsqrt.pop %v675
        %v680 = vrsqrt.pop %v676
        %v681 = vmul.f32 %v669, %v677
        %v682 = vmul.f32 %v670, %v678
        %v683 = vmul.f32 %v671, %v679
        %v684 = vmul.f32 %v672, %v680
        %v685 = vlaneseq
        %v686 = vshrl.u32 %v685, 7
        %v687 = vsub.s32 0, %v686
        %v688 = vrot.slane %v626, %v687
        %v689 = vmul.f32 %v681, %v688
        %v690 = vmul.f32 %v682, %v688
        %v691 = vmul.f32 %v683, %v688
        %v692 = vmul.f32 %v684, %v688
        %v693 = vlaneseq
        %v694 = vshrl.u32 %v693, 7
        %v695 = vsub.s32 1, %v694
        %v696 = vrot.slane %v626, %v695
        %v697 = vadd.f32 %v689, %v696
        %v698 = vadd.f32 %v690, %v696
        %v699 = vadd.f32 %v691, %v696
        %v700 = vadd.f32 %v692, %v696
        %v701 = vpack.c.bf16 %v698, %v697
        %v702 = vpack.c.bf16 %v700, %v699
        %v703 = vld [vmem:[%s489] sm:$0xf]
        %v704 = vld [vmem:[%s489 + $0x4] sm:$0xf]
        %v705 = vld [vmem:[%s489 + $0x8] sm:$0xf]
        %v706 = vld [vmem:[%s489 + $0xc] sm:$0xf]
        %v707 = vld [vmem:[%s489 + $0x10] sm:$0xf]
        %v708 = vld [vmem:[%s489 + $0x14] sm:$0xf]
        %v709 = vld [vmem:[%s489 + $0x18] sm:$0xf]
        %v710 = vld [vmem:[%s489 + $0x1c] sm:$0xf]
        %v711 = vld [vmem:[%s489 + $0x20] sm:$0xf]
        %v712 = vld [vmem:[%s489 + $0x24] sm:$0xf]
        %v713 = vld [vmem:[%s489 + $0x28] sm:$0xf]
        %v714 = vld [vmem:[%s489 + $0x2c] sm:$0xf]
        %v715 = vld [vmem:[%s489 + $0x30] sm:$0xf]
        %v716 = vld [vmem:[%s489 + $0x34] sm:$0xf]
        %v717 = vld [vmem:[%s489 + $0x38] sm:$0xf]
        %v718 = vld [vmem:[%s489 + $0x3c] sm:$0xf]
        %v719 = vlaneseq
        %v720 = vshrl.u32 %v719, 7
        %v721 = vsub.s32 2, %v720
        %v722 = vrot.slane %v626, %v721
        %v739 = vunpack.c.l.b16 %v703
        %v740 = vunpack.c.l.b16 %v704
        %v741 = vunpack.c.l.b16 %v705
        %v742 = vunpack.c.l.b16 %v706
        %v743 = vunpack.c.l.b16 %v707
        %v744 = vunpack.c.l.b16 %v708
        %v745 = vunpack.c.l.b16 %v709
        %v746 = vunpack.c.l.b16 %v710
        %v747 = vunpack.c.l.b16 %v711
        %v748 = vunpack.c.l.b16 %v712
        %v749 = vunpack.c.l.b16 %v713
        %v750 = vunpack.c.l.b16 %v714
        %v751 = vunpack.c.l.b16 %v715
        %v752 = vunpack.c.l.b16 %v716
        %v753 = vunpack.c.l.b16 %v717
        %v754 = vunpack.c.l.b16 %v718
        %v755 = vpack.c.b16 %v740, %v739
        %v756 = vpack.c.b16 %v742, %v741
        %v757 = vpack.c.b16 %v744, %v743
        %v758 = vpack.c.b16 %v746, %v745
        %v759 = vpack.c.b16 %v748, %v747
        %v760 = vpack.c.b16 %v750, %v749
        %v761 = vpack.c.b16 %v752, %v751
        %v762 = vpack.c.b16 %v754, %v753
        %771 = vmatprep.subr.bf16.mxu0 0
        %772 = vmatpush1.bf16.msra.mxu0 %v762
        %773 = vmatprep.subr.bf16.mxu0 0
        %774 = vmatpush1.bf16.msra.mxu0 %v761
        %775 = vmatprep.subr.bf16.mxu0 0
        %776 = vmatpush1.bf16.msra.mxu0 %v760
        %777 = vmatprep.subr.bf16.mxu0 0
        %778 = vmatpush1.bf16.msra.mxu0 %v759
        %779 = vmatprep.subr.bf16.mxu0 0
        %780 = vmatpush1.bf16.msra.mxu0 %v758
        %781 = vmatprep.subr.bf16.mxu0 0
        %782 = vmatpush1.bf16.msra.mxu0 %v757
        %783 = vmatprep.subr.bf16.mxu0 0
        %784 = vmatpush1.bf16.msra.mxu0 %v756
        %785 = vmatprep.subr.bf16.mxu0 0
        %786 = vmatpush1.bf16.msra.mxu0 %v755
        %787 = vmatprep.subr.bf16.mxu0 0
        %788 = vmatpush2.bf16.msra.mxu0 0
        %789 = vmatprep.subr.bf16.mxu0 0
        %790 = vmatpush2.bf16.msra.mxu0 0
        %791 = vmatprep.subr.bf16.mxu0 0
        %792 = vmatpush2.bf16.msra.mxu0 0
        %793 = vmatprep.subr.bf16.mxu0 0
        %794 = vmatpush2.bf16.msra.mxu0 0
        %795 = vmatprep.subr.bf16.mxu0 0
        %796 = vmatpush2.bf16.msra.mxu0 0
        %797 = vmatprep.subr.bf16.mxu0 0
        %798 = vmatpush2.bf16.msra.mxu0 0
        %799 = vmatprep.subr.bf16.mxu0 0
        %800 = vmatpush2.bf16.msra.mxu0 0
        %801 = vmatprep.subr.bf16.mxu0 0
        %802 = vmatpush2.bf16.msra.mxu0 0
        %803 = vmatprep.mubr.bf16.mxu0 0
        %804 = vmatmul.mubr.bf16.gmra.mxu0 %v701
        %v805 = vpop.f32.mrf.mxu0
        %v806 = vadd.f32 %v722, %v805
        %v807 = vpop.f32.mrf.mxu0
        %v808 = vpop.f32.mrf.mxu0
        %v809 = vadd.f32 %v722, %v808
        %v810 = vpop.f32.mrf.mxu0
        %811 = vmatprep.mubr.bf16.mxu0 0
        %812 = vmatmul.mubr.bf16.gmra.mxu0 %v702
        %v813 = vpop.f32.mrf.mxu0
        %v814 = vadd.f32 %v722, %v813
        %v815 = vpop.f32.mrf.mxu0
        %v816 = vpop.f32.mrf.mxu0
        %v817 = vadd.f32 %v722, %v816
        %v818 = vpop.f32.mrf.mxu0
        %819 = vdwg.mxu0
        %v820 = vmul.f32 %v806, 0.17677669
        %v821 = vmul.f32 %v809, 0.17677669
        %v822 = vmul.f32 %v814, 0.17677669
        %v823 = vmul.f32 %v817, 0.17677669
        %v824 = vld [vmem:[%s498] sm:$0xf]
        %v825 = vld [vmem:[%s498 + $0x4] sm:$0xf]
        %v826 = vld [vmem:[%s498 + $0x8] sm:$0xf]
        %v827 = vld [vmem:[%s498 + $0xc] sm:$0xf]
        %v828 = vld [vmem:[%s498 + $0x10] sm:$0xf]
        %v829 = vld [vmem:[%s498 + $0x14] sm:$0xf]
        %v830 = vld [vmem:[%s498 + $0x18] sm:$0xf]
        %v831 = vld [vmem:[%s498 + $0x1c] sm:$0xf]
        %v832 = vld [vmem:[%s498 + $0x20] sm:$0xf]
        %v833 = vld [vmem:[%s498 + $0x24] sm:$0xf]
        %v834 = vld [vmem:[%s498 + $0x28] sm:$0xf]
        %v835 = vld [vmem:[%s498 + $0x2c] sm:$0xf]
        %v836 = vld [vmem:[%s498 + $0x30] sm:$0xf]
        %v837 = vld [vmem:[%s498 + $0x34] sm:$0xf]
        %v838 = vld [vmem:[%s498 + $0x38] sm:$0xf]
        %v839 = vld [vmem:[%s498 + $0x3c] sm:$0xf]
        %v840 = vlaneseq
        %v841 = vshrl.u32 %v840, 7
        %v842 = vsub.s32 3, %v841
        %v843 = vrot.slane %v626, %v842
        %v860 = vunpack.c.l.b16 %v824
        %v861 = vunpack.c.l.b16 %v825
        %v862 = vunpack.c.l.b16 %v826
        %v863 = vunpack.c.l.b16 %v827
        %v864 = vunpack.c.l.b16 %v828
        %v865 = vunpack.c.l.b16 %v829
        %v866 = vunpack.c.l.b16 %v830
        %v867 = vunpack.c.l.b16 %v831
        %v868 = vunpack.c.l.b16 %v832
        %v869 = vunpack.c.l.b16 %v833
        %v870 = vunpack.c.l.b16 %v834
        %v871 = vunpack.c.l.b16 %v835
        %v872 = vunpack.c.l.b16 %v836
        %v873 = vunpack.c.l.b16 %v837
        %v874 = vunpack.c.l.b16 %v838
        %v875 = vunpack.c.l.b16 %v839
        %v876 = vpack.c.b16 %v861, %v860
        %v877 = vpack.c.b16 %v863, %v862
        %v878 = vpack.c.b16 %v865, %v864
        %v879 = vpack.c.b16 %v867, %v866
        %v880 = vpack.c.b16 %v869, %v868
        %v881 = vpack.c.b16 %v871, %v870
        %v882 = vpack.c.b16 %v873, %v872
        %v883 = vpack.c.b16 %v875, %v874
        %892 = vmatprep.subr.bf16.mxu0 0
        %893 = vmatpush1.bf16.msra.mxu0 %v883
        %894 = vmatprep.subr.bf16.mxu0 0
        %895 = vmatpush1.bf16.msra.mxu0 %v882
        %896 = vmatprep.subr.bf16.mxu0 0
        %897 = vmatpush1.bf16.msra.mxu0 %v881
        %898 = vmatprep.subr.bf16.mxu0 0
        %899 = vmatpush1.bf16.msra.mxu0 %v880
        %900 = vmatprep.subr.bf16.mxu0 0
        %901 = vmatpush1.bf16.msra.mxu0 %v879
        %902 = vmatprep.subr.bf16.mxu0 0
        %903 = vmatpush1.bf16.msra.mxu0 %v878
        %904 = vmatprep.subr.bf16.mxu0 0
        %905 = vmatpush1.bf16.msra.mxu0 %v877
        %906 = vmatprep.subr.bf16.mxu0 0
        %907 = vmatpush1.bf16.msra.mxu0 %v876
        %908 = vmatprep.subr.bf16.mxu0 0
        %909 = vmatpush2.bf16.msra.mxu0 0
        %910 = vmatprep.subr.bf16.mxu0 0
        %911 = vmatpush2.bf16.msra.mxu0 0
        %912 = vmatprep.subr.bf16.mxu0 0
        %913 = vmatpush2.bf16.msra.mxu0 0
        %914 = vmatprep.subr.bf16.mxu0 0
        %915 = vmatpush2.bf16.msra.mxu0 0
        %916 = vmatprep.subr.bf16.mxu0 0
        %917 = vmatpush2.bf16.msra.mxu0 0
        %918 = vmatprep.subr.bf16.mxu0 0
        %919 = vmatpush2.bf16.msra.mxu0 0
        %920 = vmatprep.subr.bf16.mxu0 0
        %921 = vmatpush2.bf16.msra.mxu0 0
        %922 = vmatprep.subr.bf16.mxu0 0
        %923 = vmatpush2.bf16.msra.mxu0 0
        %924 = vmatprep.mubr.bf16.mxu0 0
        %925 = vmatmul.mubr.bf16.gmra.mxu0 %v701
        %v926 = vpop.f32.mrf.mxu0
        %v927 = vadd.f32 %v843, %v926
        %v928 = vpop.f32.mrf.mxu0
        %v929 = vpop.f32.mrf.mxu0
        %v930 = vadd.f32 %v843, %v929
        %v931 = vpop.f32.mrf.mxu0
        %932 = vmatprep.mubr.bf16.mxu0 0
        %933 = vmatmul.mubr.bf16.gmra.mxu0 %v702
        %v934 = vpop.f32.mrf.mxu0
        %v935 = vadd.f32 %v843, %v934
        %v936 = vpop.f32.mrf.mxu0
        %v937 = vpop.f32.mrf.mxu0
        %v938 = vadd.f32 %v843, %v937
        %v939 = vpop.f32.mrf.mxu0
        %940 = vdwg.mxu0
        %v941 = vld [vmem:[%s507] sm:$0xf]
        %v942 = vld [vmem:[%s507 + $0x4] sm:$0xf]
        %v943 = vld [vmem:[%s507 + $0x8] sm:$0xf]
        %v944 = vld [vmem:[%s507 + $0xc] sm:$0xf]
        %v945 = vld [vmem:[%s507 + $0x10] sm:$0xf]
        %v946 = vld [vmem:[%s507 + $0x14] sm:$0xf]
        %v947 = vld [vmem:[%s507 + $0x18] sm:$0xf]
        %v948 = vld [vmem:[%s507 + $0x1c] sm:$0xf]
        %v949 = vld [vmem:[%s507 + $0x20] sm:$0xf]
        %v950 = vld [vmem:[%s507 + $0x24] sm:$0xf]
        %v951 = vld [vmem:[%s507 + $0x28] sm:$0xf]
        %v952 = vld [vmem:[%s507 + $0x2c] sm:$0xf]
        %v953 = vld [vmem:[%s507 + $0x30] sm:$0xf]
        %v954 = vld [vmem:[%s507 + $0x34] sm:$0xf]
        %v955 = vld [vmem:[%s507 + $0x38] sm:$0xf]
        %v956 = vld [vmem:[%s507 + $0x3c] sm:$0xf]
        %v957 = vlaneseq
        %v958 = vshrl.u32 %v957, 7
        %v959 = vsub.s32 4, %v958
        %v960 = vrot.slane %v626, %v959
        %v977 = vunpack.c.l.b16 %v941
        %v978 = vunpack.c.l.b16 %v942
        %v979 = vunpack.c.l.b16 %v943
        %v980 = vunpack.c.l.b16 %v944
        %v981 = vunpack.c.l.b16 %v945
        %v982 = vunpack.c.l.b16 %v946
        %v983 = vunpack.c.l.b16 %v947
        %v984 = vunpack.c.l.b16 %v948
        %v985 = vunpack.c.l.b16 %v949
        %v986 = vunpack.c.l.b16 %v950
        %v987 = vunpack.c.l.b16 %v951
        %v988 = vunpack.c.l.b16 %v952
        %v989 = vunpack.c.l.b16 %v953
        %v990 = vunpack.c.l.b16 %v954
        %v991 = vunpack.c.l.b16 %v955
        %v992 = vunpack.c.l.b16 %v956
        %v993 = vpack.c.b16 %v978, %v977
        %v994 = vpack.c.b16 %v980, %v979
        %v995 = vpack.c.b16 %v982, %v981
        %v996 = vpack.c.b16 %v984, %v983
        %v997 = vpack.c.b16 %v986, %v985
        %v998 = vpack.c.b16 %v988, %v987
        %v999 = vpack.c.b16 %v990, %v989
        %v1000 = vpack.c.b16 %v992, %v991
        %1009 = vmatprep.subr.bf16.mxu0 0
        %1010 = vmatpush1.bf16.msra.mxu0 %v1000
        %1011 = vmatprep.subr.bf16.mxu0 0
        %1012 = vmatpush1.bf16.msra.mxu0 %v999
        %1013 = vmatprep.subr.bf16.mxu0 0
        %1014 = vmatpush1.bf16.msra.mxu0 %v998
        %1015 = vmatprep.subr.bf16.mxu0 0
        %1016 = vmatpush1.bf16.msra.mxu0 %v997
        %1017 = vmatprep.subr.bf16.mxu0 0
        %1018 = vmatpush1.bf16.msra.mxu0 %v996
        %1019 = vmatprep.subr.bf16.mxu0 0
        %1020 = vmatpush1.bf16.msra.mxu0 %v995
        %1021 = vmatprep.subr.bf16.mxu0 0
        %1022 = vmatpush1.bf16.msra.mxu0 %v994
        %1023 = vmatprep.subr.bf16.mxu0 0
        %1024 = vmatpush1.bf16.msra.mxu0 %v993
        %1025 = vmatprep.subr.bf16.mxu0 0
        %1026 = vmatpush2.bf16.msra.mxu0 0
        %1027 = vmatprep.subr.bf16.mxu0 0
        %1028 = vmatpush2.bf16.msra.mxu0 0
        %1029 = vmatprep.subr.bf16.mxu0 0
        %1030 = vmatpush2.bf16.msra.mxu0 0
        %1031 = vmatprep.subr.bf16.mxu0 0
        %1032 = vmatpush2.bf16.msra.mxu0 0
        %1033 = vmatprep.subr.bf16.mxu0 0
        %1034 = vmatpush2.bf16.msra.mxu0 0
        %1035 = vmatprep.subr.bf16.mxu0 0
        %1036 = vmatpush2.bf16.msra.mxu0 0
        %1037 = vmatprep.subr.bf16.mxu0 0
        %1038 = vmatpush2.bf16.msra.mxu0 0
        %1039 = vmatprep.subr.bf16.mxu0 0
        %1040 = vmatpush2.bf16.msra.mxu0 0
        %1041 = vmatprep.mubr.bf16.mxu0 0
        %1042 = vmatmul.mubr.bf16.gmra.mxu0 %v701
        %v1043 = vpop.f32.mrf.mxu0
        %v1044 = vadd.f32 %v960, %v1043
        %v1045 = vpop.f32.mrf.mxu0
        %v1046 = vpop.f32.mrf.mxu0
        %v1047 = vadd.f32 %v960, %v1046
        %v1048 = vpop.f32.mrf.mxu0
        %1049 = vmatprep.mubr.bf16.mxu0 0
        %1050 = vmatmul.mubr.bf16.gmra.mxu0 %v702
        %v1051 = vpop.f32.mrf.mxu0
        %v1052 = vadd.f32 %v960, %v1051
        %v1053 = vpop.f32.mrf.mxu0
        %v1054 = vpop.f32.mrf.mxu0
        %v1055 = vadd.f32 %v960, %v1054
        %v1056 = vpop.f32.mrf.mxu0
        %1057 = vdwg.mxu0
        %v1058 = vpack.c.bf16 %v820, %v820
        %v1059 = vpack.c.bf16 %v821, %v821
        %v1060 = vpack.c.bf16 %v822, %v822
        %v1061 = vpack.c.bf16 %v823, %v823
        %v1062 = vpack.c.bf16 %v927, %v927
        %v1063 = vpack.c.bf16 %v930, %v930
        %v1064 = vpack.c.bf16 %v935, %v935
        %v1065 = vpack.c.bf16 %v938, %v938
        %v1066 = vpack.c.bf16 %v1044, %v1044
        %v1067 = vpack.c.bf16 %v1047, %v1047
        %v1068 = vpack.c.bf16 %v1052, %v1052
        %v1069 = vpack.c.bf16 %v1055, %v1055
        %vm1070 = vcmask 261120
        %v1072 = vsel %vm1070, %v1058, 0
        %v1075 = vsel %vm1070, %v1062, 0
        %1077 = vmatprep.subr.bf16.mxu0 0
        %1078 = vmatpush1.bf16.xpose.msra.mxu0 0
        %1079 = vmatprep.subr.bf16.mxu0 0
        %1080 = vmatpush1.bf16.xpose.msra.mxu0 0
        %1081 = vmatprep.subr.bf16.mxu0 0
        %1082 = vmatpush1.bf16.xpose.msra.mxu0 0
        %1083 = vmatprep.subr.bf16.mxu0 0
        %1084 = vmatpush1.bf16.xpose.msra.mxu0 0
        %1085 = vmatprep.subr.bf16.mxu0 0
        %1086 = vmatpush1.bf16.xpose.msra.mxu0 0
        %1087 = vmatprep.subr.bf16.mxu0 0
        %1088 = vmatpush1.bf16.xpose.msra.mxu0 0
        %1089 = vmatprep.subr.bf16.mxu0 0
        %1090 = vmatpush1.bf16.xpose.msra.mxu0 0
        %1091 = vmatprep.subr.bf16.mxu0 0
        %1092 = vmatpush1.bf16.xpose.msra.mxu0 %v1075
        %1093 = vmatprep.subr.bf16.mxu0 0
        %1094 = vmatpush2.bf16.xpose.msra.mxu0 0
        %1095 = vmatprep.subr.bf16.mxu0 0
        %1096 = vmatpush2.bf16.xpose.msra.mxu0 0
        %1097 = vmatprep.subr.bf16.mxu0 0
        %1098 = vmatpush2.bf16.xpose.msra.mxu0 0
        %1099 = vmatprep.subr.bf16.mxu0 0
        %1100 = vmatpush2.bf16.xpose.msra.mxu0 0
        %1101 = vmatprep.subr.bf16.mxu0 0
        %1102 = vmatpush2.bf16.xpose.msra.mxu0 0
        %1103 = vmatprep.subr.bf16.mxu0 0
        %1104 = vmatpush2.bf16.xpose.msra.mxu0 0
        %1105 = vmatprep.subr.bf16.mxu0 0
        %1106 = vmatpush2.bf16.xpose.msra.mxu0 0
        %1107 = vmatprep.subr.bf16.mxu0 0
        %1108 = vmatpush2.bf16.xpose.msra.mxu0 0
        %1109 = vmatprep.mubr.bf16.mxu0 0
        %1110 = vmatmul.mubr.bf16.gmra.mxu0 %v1072
        %v1111 = vpop.f32.mrf.mxu0
        %v1112 = vadd.f32 0.0, %v1111
        %v1113 = vpop.f32.mrf.mxu0
        %v1114 = vpop.f32.mrf.mxu0
        %v1115 = vpop.f32.mrf.mxu0
        %1116 = vdwg.mxu0
        %v1118 = vsel %vm1070, %v1059, 0
        %v1121 = vsel %vm1070, %v1063, 0
        %1123 = vmatprep.subr.bf16.mxu0 0
        %1124 = vmatpush1.bf16.xpose.msra.mxu0 0
        %1125 = vmatprep.subr.bf16.mxu0 0
        %1126 = vmatpush1.bf16.xpose.msra.mxu0 0
        %1127 = vmatprep.subr.bf16.mxu0 0
        %1128 = vmatpush1.bf16.xpose.msra.mxu0 0
        %1129 = vmatprep.subr.bf16.mxu0 0
        %1130 = vmatpush1.bf16.xpose.msra.mxu0 0
        %1131 = vmatprep.subr.bf16.mxu0 0
        %1132 = vmatpush1.bf16.xpose.msra.mxu0 0
        %1133 = vmatprep.subr.bf16.mxu0 0
        %1134 = vmatpush1.bf16.xpose.msra.mxu0 0
        %1135 = vmatprep.subr.bf16.mxu0 0
        %1136 = vmatpush1.bf16.xpose.msra.mxu0 0
        %1137 = vmatprep.subr.bf16.mxu0 0
        %1138 = vmatpush1.bf16.xpose.msra.mxu0 %v1121
        %1139 = vmatprep.subr.bf16.mxu0 0
        %1140 = vmatpush2.bf16.xpose.msra.mxu0 0
        %1141 = vmatprep.subr.bf16.mxu0 0
        %1142 = vmatpush2.bf16.xpose.msra.mxu0 0
        %1143 = vmatprep.subr.bf16.mxu0 0
        %1144 = vmatpush2.bf16.xpose.msra.mxu0 0
        %1145 = vmatprep.subr.bf16.mxu0 0
        %1146 = vmatpush2.bf16.xpose.msra.mxu0 0
        %1147 = vmatprep.subr.bf16.mxu0 0
        %1148 = vmatpush2.bf16.xpose.msra.mxu0 0
        %1149 = vmatprep.subr.bf16.mxu0 0
        %1150 = vmatpush2.bf16.xpose.msra.mxu0 0
        %1151 = vmatprep.subr.bf16.mxu0 0
        %1152 = vmatpush2.bf16.xpose.msra.mxu0 0
        %1153 = vmatprep.subr.bf16.mxu0 0
        %1154 = vmatpush2.bf16.xpose.msra.mxu0 0
        %1155 = vmatprep.mubr.bf16.mxu0 0
        %1156 = vmatmul.mubr.bf16.gmra.mxu0 %v1118
        %v1157 = vpop.f32.mrf.mxu0
        %v1158 = vadd.f32 0.0, %v1157
        %v1159 = vpop.f32.mrf.mxu0
        %v1160 = vpop.f32.mrf.mxu0
        %v1161 = vpop.f32.mrf.mxu0
        %1162 = vdwg.mxu0
        %v1164 = vsel %vm1070, %v1060, 0
        %v1167 = vsel %vm1070, %v1064, 0
        %1169 = vmatprep.subr.bf16.mxu0 0
        %1170 = vmatpush1.bf16.xpose.msra.mxu0 0
        %1171 = vmatprep.subr.bf16.mxu0 0
        %1172 = vmatpush1.bf16.xpose.msra.mxu0 0
        %1173 = vmatprep.subr.bf16.mxu0 0
        %1174 = vmatpush1.bf16.xpose.msra.mxu0 0
        %1175 = vmatprep.subr.bf16.mxu0 0
        %1176 = vmatpush1.bf16.xpose.msra.mxu0 0
        %1177 = vmatprep.subr.bf16.mxu0 0
        %1178 = vmatpush1.bf16.xpose.msra.mxu0 0
        %1179 = vmatprep.subr.bf16.mxu0 0
        %1180 = vmatpush1.bf16.xpose.msra.mxu0 0
        %1181 = vmatprep.subr.bf16.mxu0 0
        %1182 = vmatpush1.bf16.xpose.msra.mxu0 0
        %1183 = vmatprep.subr.bf16.mxu0 0
        %1184 = vmatpush1.bf16.xpose.msra.mxu0 %v1167
        %1185 = vmatprep.subr.bf16.mxu0 0
        %1186 = vmatpush2.bf16.xpose.msra.mxu0 0
        %1187 = vmatprep.subr.bf16.mxu0 0
        %1188 = vmatpush2.bf16.xpose.msra.mxu0 0
        %1189 = vmatprep.subr.bf16.mxu0 0
        %1190 = vmatpush2.bf16.xpose.msra.mxu0 0
        %1191 = vmatprep.subr.bf16.mxu0 0
        %1192 = vmatpush2.bf16.xpose.msra.mxu0 0
        %1193 = vmatprep.subr.bf16.mxu0 0
        %1194 = vmatpush2.bf16.xpose.msra.mxu0 0
        %1195 = vmatprep.subr.bf16.mxu0 0
        %1196 = vmatpush2.bf16.xpose.msra.mxu0 0
        %1197 = vmatprep.subr.bf16.mxu0 0
        %1198 = vmatpush2.bf16.xpose.msra.mxu0 0
        %1199 = vmatprep.subr.bf16.mxu0 0
        %1200 = vmatpush2.bf16.xpose.msra.mxu0 0
        %1201 = vmatprep.mubr.bf16.mxu0 0
        %1202 = vmatmul.mubr.bf16.gmra.mxu0 %v1164
        %v1203 = vpop.f32.mrf.mxu0
        %v1204 = vadd.f32 0.0, %v1203
        %v1205 = vpop.f32.mrf.mxu0
        %v1206 = vpop.f32.mrf.mxu0
        %v1207 = vpop.f32.mrf.mxu0
        %1208 = vdwg.mxu0
        %v1210 = vsel %vm1070, %v1061, 0
        %v1213 = vsel %vm1070, %v1065, 0
        %1215 = vmatprep.subr.bf16.mxu0 0
        %1216 = vmatpush1.bf16.xpose.msra.mxu0 0
        %1217 = vmatprep.subr.bf16.mxu0 0
        %1218 = vmatpush1.bf16.xpose.msra.mxu0 0
        %1219 = vmatprep.subr.bf16.mxu0 0
        %1220 = vmatpush1.bf16.xpose.msra.mxu0 0
        %1221 = vmatprep.subr.bf16.mxu0 0
        %1222 = vmatpush1.bf16.xpose.msra.mxu0 0
        %1223 = vmatprep.subr.bf16.mxu0 0
        %1224 = vmatpush1.bf16.xpose.msra.mxu0 0
        %1225 = vmatprep.subr.bf16.mxu0 0
        %1226 = vmatpush1.bf16.xpose.msra.mxu0 0
        %1227 = vmatprep.subr.bf16.mxu0 0
        %1228 = vmatpush1.bf16.xpose.msra.mxu0 0
        %1229 = vmatprep.subr.bf16.mxu0 0
        %1230 = vmatpush1.bf16.xpose.msra.mxu0 %v1213
        %1231 = vmatprep.subr.bf16.mxu0 0
        %1232 = vmatpush2.bf16.xpose.msra.mxu0 0
        %1233 = vmatprep.subr.bf16.mxu0 0
        %1234 = vmatpush2.bf16.xpose.msra.mxu0 0
        %1235 = vmatprep.subr.bf16.mxu0 0
        %1236 = vmatpush2.bf16.xpose.msra.mxu0 0
        %1237 = vmatprep.subr.bf16.mxu0 0
        %1238 = vmatpush2.bf16.xpose.msra.mxu0 0
        %1239 = vmatprep.subr.bf16.mxu0 0
        %1240 = vmatpush2.bf16.xpose.msra.mxu0 0
        %1241 = vmatprep.subr.bf16.mxu0 0
        %1242 = vmatpush2.bf16.xpose.msra.mxu0 0
        %1243 = vmatprep.subr.bf16.mxu0 0
        %1244 = vmatpush2.bf16.xpose.msra.mxu0 0
        %1245 = vmatprep.subr.bf16.mxu0 0
        %1246 = vmatpush2.bf16.xpose.msra.mxu0 0
        %1247 = vmatprep.mubr.bf16.mxu0 0
        %1248 = vmatmul.mubr.bf16.gmra.mxu0 %v1210
        %v1249 = vpop.f32.mrf.mxu0
        %v1250 = vadd.f32 0.0, %v1249
        %v1251 = vpop.f32.mrf.mxu0
        %v1252 = vpop.f32.mrf.mxu0
        %v1253 = vpop.f32.mrf.mxu0
        %1254 = vdwg.mxu0
        %vm1255 = vcmask 64512
        %v1256 = vsel %vm1255, %v1112, -inf
        %1257 = vmax.xlane.f32.xlu0 %v1256
        %v1258 = vpop.xlane.xlu0 %1257
        %v1259 = vsel %vm1255, %v1158, -inf
        %1260 = vmax.xlane.f32.xlu0 %v1259
        %v1261 = vpop.xlane.xlu0 %1260
        %v1262 = vsel %vm1255, %v1204, -inf
        %1263 = vmax.xlane.f32.xlu0 %v1262
        %v1264 = vpop.xlane.xlu0 %1263
        %v1265 = vsel %vm1255, %v1250, -inf
        %1266 = vmax.xlane.f32.xlu0 %v1265
        %v1267 = vpop.xlane.xlu0 %1266
        %v1268 = vsub.f32 %v1112, %v1258
        %v1269 = vsub.f32 %v1158, %v1261
        %v1270 = vsub.f32 %v1204, %v1264
        %v1271 = vsub.f32 %v1250, %v1267
        %v1272 = vmul.f32 %v1268, 1.442695
        %v1273 = vpow.pop %v1272
        %v1274 = vmul.f32 %v1269, 1.442695
        %v1275 = vpow.pop %v1274
        %v1276 = vmul.f32 %v1270, 1.442695
        %v1277 = vpow.pop %v1276
        %v1278 = vmul.f32 %v1271, 1.442695
        %v1279 = vpow.pop %v1278
        %v1280 = vsel %vm1255, %v1273, 0.0
        %1281 = vadd.xlane.f32.xlu0 %v1280
        %v1282 = vpop.xlane.xlu0 %1281
        %v1283 = vsel %vm1255, %v1275, 0.0
        %1284 = vadd.xlane.f32.xlu0 %v1283
        %v1285 = vpop.xlane.xlu0 %1284
        %v1286 = vsel %vm1255, %v1277, 0.0
        %1287 = vadd.xlane.f32.xlu0 %v1286
        %v1288 = vpop.xlane.xlu0 %1287
        %v1289 = vsel %vm1255, %v1279, 0.0
        %1290 = vadd.xlane.f32.xlu0 %v1289
        %v1291 = vpop.xlane.xlu0 %1290
        %v1292 = vrcp.pop %v1282
        %v1293 = vrcp.pop %v1285
        %v1294 = vrcp.pop %v1288
        %v1295 = vrcp.pop %v1291
        %v1296 = vmul.f32 %v1273, %v1292
        %v1297 = vmul.f32 %v1275, %v1293
        %v1298 = vmul.f32 %v1277, %v1294
        %v1299 = vmul.f32 %v1279, %v1295
        %v1300 = vpack.c.bf16 %v1296, %v1296
        %v1301 = vpack.c.bf16 %v1297, %v1297
        %v1302 = vpack.c.bf16 %v1298, %v1298
        %v1303 = vpack.c.bf16 %v1299, %v1299
        %v1305 = vsel %vm1255, %v1300, 0
        %vm1307 = vcmask 1043456
        %v1309 = vsel %vm1307, %v1066, 0
        %1311 = vmatprep.subr.bf16.mxu0 0
        %1312 = vmatpush1.bf16.msra.mxu0 0
        %1313 = vmatprep.subr.bf16.mxu0 0
        %1314 = vmatpush1.bf16.msra.mxu0 0
        %1315 = vmatprep.subr.bf16.mxu0 0
        %1316 = vmatpush1.bf16.msra.mxu0 0
        %1317 = vmatprep.subr.bf16.mxu0 0
        %1318 = vmatpush1.bf16.msra.mxu0 0
        %1319 = vmatprep.subr.bf16.mxu0 0
        %1320 = vmatpush1.bf16.msra.mxu0 0
        %1321 = vmatprep.subr.bf16.mxu0 0
        %1322 = vmatpush1.bf16.msra.mxu0 0
        %1323 = vmatprep.subr.bf16.mxu0 0
        %1324 = vmatpush1.bf16.msra.mxu0 0
        %1325 = vmatprep.subr.bf16.mxu0 0
        %1326 = vmatpush1.bf16.msra.mxu0 %v1309
        %1327 = vmatprep.subr.bf16.mxu0 0
        %1328 = vmatpush2.bf16.msra.mxu0 0
        %1329 = vmatprep.subr.bf16.mxu0 0
        %1330 = vmatpush2.bf16.msra.mxu0 0
        %1331 = vmatprep.subr.bf16.mxu0 0
        %1332 = vmatpush2.bf16.msra.mxu0 0
        %1333 = vmatprep.subr.bf16.mxu0 0
        %1334 = vmatpush2.bf16.msra.mxu0 0
        %1335 = vmatprep.subr.bf16.mxu0 0
        %1336 = vmatpush2.bf16.msra.mxu0 0
        %1337 = vmatprep.subr.bf16.mxu0 0
        %1338 = vmatpush2.bf16.msra.mxu0 0
        %1339 = vmatprep.subr.bf16.mxu0 0
        %1340 = vmatpush2.bf16.msra.mxu0 0
        %1341 = vmatprep.subr.bf16.mxu0 0
        %1342 = vmatpush2.bf16.msra.mxu0 0
        %1343 = vmatprep.mubr.bf16.mxu0 0
        %1344 = vmatmul.mubr.bf16.gmra.mxu0 %v1305
        %v1345 = vpop.f32.mrf.mxu0
        %v1346 = vadd.f32 0.0, %v1345
        %v1347 = vpop.f32.mrf.mxu0
        %v1348 = vpop.f32.mrf.mxu0
        %v1349 = vpop.f32.mrf.mxu0
        %1350 = vdwg.mxu0
        %v1352 = vsel %vm1255, %v1301, 0
        %v1355 = vsel %vm1307, %v1067, 0
        %1357 = vmatprep.subr.bf16.mxu0 0
        %1358 = vmatpush1.bf16.msra.mxu0 0
        %1359 = vmatprep.subr.bf16.mxu0 0
        %1360 = vmatpush1.bf16.msra.mxu0 0
        %1361 = vmatprep.subr.bf16.mxu0 0
        %1362 = vmatpush1.bf16.msra.mxu0 0
        %1363 = vmatprep.subr.bf16.mxu0 0
        %1364 = vmatpush1.bf16.msra.mxu0 0
        %1365 = vmatprep.subr.bf16.mxu0 0
        %1366 = vmatpush1.bf16.msra.mxu0 0
        %1367 = vmatprep.subr.bf16.mxu0 0
        %1368 = vmatpush1.bf16.msra.mxu0 0
        %1369 = vmatprep.subr.bf16.mxu0 0
        %1370 = vmatpush1.bf16.msra.mxu0 0
        %1371 = vmatprep.subr.bf16.mxu0 0
        %1372 = vmatpush1.bf16.msra.mxu0 %v1355
        %1373 = vmatprep.subr.bf16.mxu0 0
        %1374 = vmatpush2.bf16.msra.mxu0 0
        %1375 = vmatprep.subr.bf16.mxu0 0
        %1376 = vmatpush2.bf16.msra.mxu0 0
        %1377 = vmatprep.subr.bf16.mxu0 0
        %1378 = vmatpush2.bf16.msra.mxu0 0
        %1379 = vmatprep.subr.bf16.mxu0 0
        %1380 = vmatpush2.bf16.msra.mxu0 0
        %1381 = vmatprep.subr.bf16.mxu0 0
        %1382 = vmatpush2.bf16.msra.mxu0 0
        %1383 = vmatprep.subr.bf16.mxu0 0
        %1384 = vmatpush2.bf16.msra.mxu0 0
        %1385 = vmatprep.subr.bf16.mxu0 0
        %1386 = vmatpush2.bf16.msra.mxu0 0
        %1387 = vmatprep.subr.bf16.mxu0 0
        %1388 = vmatpush2.bf16.msra.mxu0 0
        %1389 = vmatprep.mubr.bf16.mxu0 0
        %1390 = vmatmul.mubr.bf16.gmra.mxu0 %v1352
        %v1391 = vpop.f32.mrf.mxu0
        %v1392 = vadd.f32 0.0, %v1391
        %v1393 = vpop.f32.mrf.mxu0
        %v1394 = vpop.f32.mrf.mxu0
        %v1395 = vpop.f32.mrf.mxu0
        %1396 = vdwg.mxu0
        %v1398 = vsel %vm1255, %v1302, 0
        %v1401 = vsel %vm1307, %v1068, 0
        %1403 = vmatprep.subr.bf16.mxu0 0
        %1404 = vmatpush1.bf16.msra.mxu0 0
        %1405 = vmatprep.subr.bf16.mxu0 0
        %1406 = vmatpush1.bf16.msra.mxu0 0
        %1407 = vmatprep.subr.bf16.mxu0 0
        %1408 = vmatpush1.bf16.msra.mxu0 0
        %1409 = vmatprep.subr.bf16.mxu0 0
        %1410 = vmatpush1.bf16.msra.mxu0 0
        %1411 = vmatprep.subr.bf16.mxu0 0
        %1412 = vmatpush1.bf16.msra.mxu0 0
        %1413 = vmatprep.subr.bf16.mxu0 0
        %1414 = vmatpush1.bf16.msra.mxu0 0
        %1415 = vmatprep.subr.bf16.mxu0 0
        %1416 = vmatpush1.bf16.msra.mxu0 0
        %1417 = vmatprep.subr.bf16.mxu0 0
        %1418 = vmatpush1.bf16.msra.mxu0 %v1401
        %1419 = vmatprep.subr.bf16.mxu0 0
        %1420 = vmatpush2.bf16.msra.mxu0 0
        %1421 = vmatprep.subr.bf16.mxu0 0
        %1422 = vmatpush2.bf16.msra.mxu0 0
        %1423 = vmatprep.subr.bf16.mxu0 0
        %1424 = vmatpush2.bf16.msra.mxu0 0
        %1425 = vmatprep.subr.bf16.mxu0 0
        %1426 = vmatpush2.bf16.msra.mxu0 0
        %1427 = vmatprep.subr.bf16.mxu0 0
        %1428 = vmatpush2.bf16.msra.mxu0 0
        %1429 = vmatprep.subr.bf16.mxu0 0
        %1430 = vmatpush2.bf16.msra.mxu0 0
        %1431 = vmatprep.subr.bf16.mxu0 0
        %1432 = vmatpush2.bf16.msra.mxu0 0
        %1433 = vmatprep.subr.bf16.mxu0 0
        %1434 = vmatpush2.bf16.msra.mxu0 0
        %1435 = vmatprep.mubr.bf16.mxu0 0
        %1436 = vmatmul.mubr.bf16.gmra.mxu0 %v1398
        %v1437 = vpop.f32.mrf.mxu0
        %v1438 = vadd.f32 0.0, %v1437
        %v1439 = vpop.f32.mrf.mxu0
        %v1440 = vpop.f32.mrf.mxu0
        %v1441 = vpop.f32.mrf.mxu0
        %1442 = vdwg.mxu0
        %v1444 = vsel %vm1255, %v1303, 0
        %v1447 = vsel %vm1307, %v1069, 0
        %1449 = vmatprep.subr.bf16.mxu0 0
        %1450 = vmatpush1.bf16.msra.mxu0 0
        %1451 = vmatprep.subr.bf16.mxu0 0
        %1452 = vmatpush1.bf16.msra.mxu0 0
        %1453 = vmatprep.subr.bf16.mxu0 0
        %1454 = vmatpush1.bf16.msra.mxu0 0
        %1455 = vmatprep.subr.bf16.mxu0 0
        %1456 = vmatpush1.bf16.msra.mxu0 0
        %1457 = vmatprep.subr.bf16.mxu0 0
        %1458 = vmatpush1.bf16.msra.mxu0 0
        %1459 = vmatprep.subr.bf16.mxu0 0
        %1460 = vmatpush1.bf16.msra.mxu0 0
        %1461 = vmatprep.subr.bf16.mxu0 0
        %1462 = vmatpush1.bf16.msra.mxu0 0
        %1463 = vmatprep.subr.bf16.mxu0 0
        %1464 = vmatpush1.bf16.msra.mxu0 %v1447
        %1465 = vmatprep.subr.bf16.mxu0 0
        %1466 = vmatpush2.bf16.msra.mxu0 0
        %1467 = vmatprep.subr.bf16.mxu0 0
        %1468 = vmatpush2.bf16.msra.mxu0 0
        %1469 = vmatprep.subr.bf16.mxu0 0
        %1470 = vmatpush2.bf16.msra.mxu0 0
        %1471 = vmatprep.subr.bf16.mxu0 0
        %1472 = vmatpush2.bf16.msra.mxu0 0
        %1473 = vmatprep.subr.bf16.mxu0 0
        %1474 = vmatpush2.bf16.msra.mxu0 0
        %1475 = vmatprep.subr.bf16.mxu0 0
        %1476 = vmatpush2.bf16.msra.mxu0 0
        %1477 = vmatprep.subr.bf16.mxu0 0
        %1478 = vmatpush2.bf16.msra.mxu0 0
        %1479 = vmatprep.subr.bf16.mxu0 0
        %1480 = vmatpush2.bf16.msra.mxu0 0
        %1481 = vmatprep.mubr.bf16.mxu0 0
        %1482 = vmatmul.mubr.bf16.gmra.mxu0 %v1444
        %v1483 = vpop.f32.mrf.mxu0
        %v1484 = vadd.f32 0.0, %v1483
        %v1485 = vpop.f32.mrf.mxu0
        %v1486 = vpop.f32.mrf.mxu0
        %v1487 = vpop.f32.mrf.mxu0
        %1488 = vdwg.mxu0
        %v1489 = vpack.c.bf16 %v1392, %v1346
        %v1490 = vpack.c.bf16 %v1484, %v1438
        %v1493 = vunpack.c.l.b16 %v1489
        %v1494 = vunpack.c.h.b16 %v1489
        %v1495 = vunpack.c.l.b16 %v1490
        %v1496 = vunpack.c.h.b16 %v1490
        %v1497 = vpack.c.b16 %v1493, %v1493
        %v1498 = vpack.c.b16 %v1494, %v1494
        %v1499 = vpack.c.b16 %v1495, %v1495
        %v1500 = vpack.c.b16 %v1496, %v1496
        %vm1505 = vcmask 257024
        %1506 = vst.msk [vmem:[#allocation2] sm:$0xf] %vm1505, %v1497
        %1507 = vst.msk [vmem:[#allocation2 + $0x4] sm:$0xf] %vm1505, %v1498
        %1508 = vst.msk [vmem:[#allocation2 + $0x8] sm:$0xf] %vm1505, %v1499
        %1509 = vst.msk [vmem:[#allocation2 + $0xc] sm:$0xf] %vm1505, %v1500
        %1511 = vrot.lane.b32.xlu0 %v1058, 96
        %v1512 = vpop.permute.xlu0 %1511
        %1514 = vrot.lane.b32.xlu0 %v1062, 96
        %v1515 = vpop.permute.xlu0 %1514
        %v1517 = vsel %vm1070, %v1512, 0
        %v1520 = vsel %vm1070, %v1515, 0
        %1522 = vmatprep.subr.bf16.mxu0 0
        %1523 = vmatpush1.bf16.xpose.msra.mxu0 0
        %1524 = vmatprep.subr.bf16.mxu0 0
        %1525 = vmatpush1.bf16.xpose.msra.mxu0 0
        %1526 = vmatprep.subr.bf16.mxu0 0
        %1527 = vmatpush1.bf16.xpose.msra.mxu0 0
        %1528 = vmatprep.subr.bf16.mxu0 0
        %1529 = vmatpush1.bf16.xpose.msra.mxu0 0
        %1530 = vmatprep.subr.bf16.mxu0 0
        %1531 = vmatpush1.bf16.xpose.msra.mxu0 0
        %1532 = vmatprep.subr.bf16.mxu0 0
        %1533 = vmatpush1.bf16.xpose.msra.mxu0 0
        %1534 = vmatprep.subr.bf16.mxu0 0
        %1535 = vmatpush1.bf16.xpose.msra.mxu0 0
        %1536 = vmatprep.subr.bf16.mxu0 0
        %1537 = vmatpush1.bf16.xpose.msra.mxu0 %v1520
        %1538 = vmatprep.subr.bf16.mxu0 0
        %1539 = vmatpush2.bf16.xpose.msra.mxu0 0
        %1540 = vmatprep.subr.bf16.mxu0 0
        %1541 = vmatpush2.bf16.xpose.msra.mxu0 0
        %1542 = vmatprep.subr.bf16.mxu0 0
        %1543 = vmatpush2.bf16.xpose.msra.mxu0 0
        %1544 = vmatprep.subr.bf16.mxu0 0
        %1545 = vmatpush2.bf16.xpose.msra.mxu0 0
        %1546 = vmatprep.subr.bf16.mxu0 0
        %1547 = vmatpush2.bf16.xpose.msra.mxu0 0
        %1548 = vmatprep.subr.bf16.mxu0 0
        %1549 = vmatpush2.bf16.xpose.msra.mxu0 0
        %1550 = vmatprep.subr.bf16.mxu0 0
        %1551 = vmatpush2.bf16.xpose.msra.mxu0 0
        %1552 = vmatprep.subr.bf16.mxu0 0
        %1553 = vmatpush2.bf16.xpose.msra.mxu0 0
        %1554 = vmatprep.mubr.bf16.mxu0 0
        %1555 = vmatmul.mubr.bf16.gmra.mxu0 %v1517
        %v1556 = vpop.f32.mrf.mxu0
        %v1557 = vadd.f32 0.0, %v1556
        %v1558 = vpop.f32.mrf.mxu0
        %v1559 = vpop.f32.mrf.mxu0
        %v1560 = vpop.f32.mrf.mxu0
        %1561 = vdwg.mxu0
        %1563 = vrot.lane.b32.xlu0 %v1059, 96
        %v1564 = vpop.permute.xlu0 %1563
        %1566 = vrot.lane.b32.xlu0 %v1063, 96
        %v1567 = vpop.permute.xlu0 %1566
        %v1569 = vsel %vm1070, %v1564, 0
        %v1572 = vsel %vm1070, %v1567, 0
        %1574 = vmatprep.subr.bf16.mxu0 0
        %1575 = vmatpush1.bf16.xpose.msra.mxu0 0
        %1576 = vmatprep.subr.bf16.mxu0 0
        %1577 = vmatpush1.bf16.xpose.msra.mxu0 0
        %1578 = vmatprep.subr.bf16.mxu0 0
        %1579 = vmatpush1.bf16.xpose.msra.mxu0 0
        %1580 = vmatprep.subr.bf16.mxu0 0
        %1581 = vmatpush1.bf16.xpose.msra.mxu0 0
        %1582 = vmatprep.subr.bf16.mxu0 0
        %1583 = vmatpush1.bf16.xpose.msra.mxu0 0
        %1584 = vmatprep.subr.bf16.mxu0 0
        %1585 = vmatpush1.bf16.xpose.msra.mxu0 0
        %1586 = vmatprep.subr.bf16.mxu0 0
        %1587 = vmatpush1.bf16.xpose.msra.mxu0 0
        %1588 = vmatprep.subr.bf16.mxu0 0
        %1589 = vmatpush1.bf16.xpose.msra.mxu0 %v1572
        %1590 = vmatprep.subr.bf16.mxu0 0
        %1591 = vmatpush2.bf16.xpose.msra.mxu0 0
        %1592 = vmatprep.subr.bf16.mxu0 0
        %1593 = vmatpush2.bf16.xpose.msra.mxu0 0
        %1594 = vmatprep.subr.bf16.mxu0 0
        %1595 = vmatpush2.bf16.xpose.msra.mxu0 0
        %1596 = vmatprep.subr.bf16.mxu0 0
        %1597 = vmatpush2.bf16.xpose.msra.mxu0 0
        %1598 = vmatprep.subr.bf16.mxu0 0
        %1599 = vmatpush2.bf16.xpose.msra.mxu0 0
        %1600 = vmatprep.subr.bf16.mxu0 0
        %1601 = vmatpush2.bf16.xpose.msra.mxu0 0
        %1602 = vmatprep.subr.bf16.mxu0 0
        %1603 = vmatpush2.bf16.xpose.msra.mxu0 0
        %1604 = vmatprep.subr.bf16.mxu0 0
        %1605 = vmatpush2.bf16.xpose.msra.mxu0 0
        %1606 = vmatprep.mubr.bf16.mxu0 0
        %1607 = vmatmul.mubr.bf16.gmra.mxu0 %v1569
        %v1608 = vpop.f32.mrf.mxu0
        %v1609 = vadd.f32 0.0, %v1608
        %v1610 = vpop.f32.mrf.mxu0
        %v1611 = vpop.f32.mrf.mxu0
        %v1612 = vpop.f32.mrf.mxu0
        %1613 = vdwg.mxu0
        %1615 = vrot.lane.b32.xlu0 %v1060, 96
        %v1616 = vpop.permute.xlu0 %1615
        %1618 = vrot.lane.b32.xlu0 %v1064, 96
        %v1619 = vpop.permute.xlu0 %1618
        %v1621 = vsel %vm1070, %v1616, 0
        %v1624 = vsel %vm1070, %v1619, 0
        %1626 = vmatprep.subr.bf16.mxu0 0
        %1627 = vmatpush1.bf16.xpose.msra.mxu0 0
        %1628 = vmatprep.subr.bf16.mxu0 0
        %1629 = vmatpush1.bf16.xpose.msra.mxu0 0
        %1630 = vmatprep.subr.bf16.mxu0 0
        %1631 = vmatpush1.bf16.xpose.msra.mxu0 0
        %1632 = vmatprep.subr.bf16.mxu0 0
        %1633 = vmatpush1.bf16.xpose.msra.mxu0 0
        %1634 = vmatprep.subr.bf16.mxu0 0
        %1635 = vmatpush1.bf16.xpose.msra.mxu0 0
        %1636 = vmatprep.subr.bf16.mxu0 0
        %1637 = vmatpush1.bf16.xpose.msra.mxu0 0
        %1638 = vmatprep.subr.bf16.mxu0 0
        %1639 = vmatpush1.bf16.xpose.msra.mxu0 0
        %1640 = vmatprep.subr.bf16.mxu0 0
        %1641 = vmatpush1.bf16.xpose.msra.mxu0 %v1624
        %1642 = vmatprep.subr.bf16.mxu0 0
        %1643 = vmatpush2.bf16.xpose.msra.mxu0 0
        %1644 = vmatprep.subr.bf16.mxu0 0
        %1645 = vmatpush2.bf16.xpose.msra.mxu0 0
        %1646 = vmatprep.subr.bf16.mxu0 0
        %1647 = vmatpush2.bf16.xpose.msra.mxu0 0
        %1648 = vmatprep.subr.bf16.mxu0 0
        %1649 = vmatpush2.bf16.xpose.msra.mxu0 0
        %1650 = vmatprep.subr.bf16.mxu0 0
        %1651 = vmatpush2.bf16.xpose.msra.mxu0 0
        %1652 = vmatprep.subr.bf16.mxu0 0
        %1653 = vmatpush2.bf16.xpose.msra.mxu0 0
        %1654 = vmatprep.subr.bf16.mxu0 0
        %1655 = vmatpush2.bf16.xpose.msra.mxu0 0
        %1656 = vmatprep.subr.bf16.mxu0 0
        %1657 = vmatpush2.bf16.xpose.msra.mxu0 0
        %1658 = vmatprep.mubr.bf16.mxu0 0
        %1659 = vmatmul.mubr.bf16.gmra.mxu0 %v1621
        %v1660 = vpop.f32.mrf.mxu0
        %v1661 = vadd.f32 0.0, %v1660
        %v1662 = vpop.f32.mrf.mxu0
        %v1663 = vpop.f32.mrf.mxu0
        %v1664 = vpop.f32.mrf.mxu0
        %1665 = vdwg.mxu0
        %1667 = vrot.lane.b32.xlu0 %v1061, 96
        %v1668 = vpop.permute.xlu0 %1667
        %1670 = vrot.lane.b32.xlu0 %v1065, 96
        %v1671 = vpop.permute.xlu0 %1670
        %v1673 = vsel %vm1070, %v1668, 0
        %v1676 = vsel %vm1070, %v1671, 0
        %1678 = vmatprep.subr.bf16.mxu0 0
        %1679 = vmatpush1.bf16.xpose.msra.mxu0 0
        %1680 = vmatprep.subr.bf16.mxu0 0
        %1681 = vmatpush1.bf16.xpose.msra.mxu0 0
        %1682 = vmatprep.subr.bf16.mxu0 0
        %1683 = vmatpush1.bf16.xpose.msra.mxu0 0
        %1684 = vmatprep.subr.bf16.mxu0 0
        %1685 = vmatpush1.bf16.xpose.msra.mxu0 0
        %1686 = vmatprep.subr.bf16.mxu0 0
        %1687 = vmatpush1.bf16.xpose.msra.mxu0 0
        %1688 = vmatprep.subr.bf16.mxu0 0
        %1689 = vmatpush1.bf16.xpose.msra.mxu0 0
        %1690 = vmatprep.subr.bf16.mxu0 0
        %1691 = vmatpush1.bf16.xpose.msra.mxu0 0
        %1692 = vmatprep.subr.bf16.mxu0 0
        %1693 = vmatpush1.bf16.xpose.msra.mxu0 %v1676
        %1694 = vmatprep.subr.bf16.mxu0 0
        %1695 = vmatpush2.bf16.xpose.msra.mxu0 0
        %1696 = vmatprep.subr.bf16.mxu0 0
        %1697 = vmatpush2.bf16.xpose.msra.mxu0 0
        %1698 = vmatprep.subr.bf16.mxu0 0
        %1699 = vmatpush2.bf16.xpose.msra.mxu0 0
        %1700 = vmatprep.subr.bf16.mxu0 0
        %1701 = vmatpush2.bf16.xpose.msra.mxu0 0
        %1702 = vmatprep.subr.bf16.mxu0 0
        %1703 = vmatpush2.bf16.xpose.msra.mxu0 0
        %1704 = vmatprep.subr.bf16.mxu0 0
        %1705 = vmatpush2.bf16.xpose.msra.mxu0 0
        %1706 = vmatprep.subr.bf16.mxu0 0
        %1707 = vmatpush2.bf16.xpose.msra.mxu0 0
        %1708 = vmatprep.subr.bf16.mxu0 0
        %1709 = vmatpush2.bf16.xpose.msra.mxu0 0
        %1710 = vmatprep.mubr.bf16.mxu0 0
        %1711 = vmatmul.mubr.bf16.gmra.mxu0 %v1673
        %v1712 = vpop.f32.mrf.mxu0
        %v1713 = vadd.f32 0.0, %v1712
        %v1714 = vpop.f32.mrf.mxu0
        %v1715 = vpop.f32.mrf.mxu0
        %v1716 = vpop.f32.mrf.mxu0
        %1717 = vdwg.mxu0
        %v1718 = vsel %vm1255, %v1557, -inf
        %1719 = vmax.xlane.f32.xlu0 %v1718
        %v1720 = vpop.xlane.xlu0 %1719
        %v1721 = vsel %vm1255, %v1609, -inf
        %1722 = vmax.xlane.f32.xlu0 %v1721
        %v1723 = vpop.xlane.xlu0 %1722
        %v1724 = vsel %vm1255, %v1661, -inf
        %1725 = vmax.xlane.f32.xlu0 %v1724
        %v1726 = vpop.xlane.xlu0 %1725
        %v1727 = vsel %vm1255, %v1713, -inf
        %1728 = vmax.xlane.f32.xlu0 %v1727
        %v1729 = vpop.xlane.xlu0 %1728
        %v1730 = vsub.f32 %v1557, %v1720
        %v1731 = vsub.f32 %v1609, %v1723
        %v1732 = vsub.f32 %v1661, %v1726
        %v1733 = vsub.f32 %v1713, %v1729
        %v1734 = vmul.f32 %v1730, 1.442695
        %v1735 = vpow.pop %v1734
        %v1736 = vmul.f32 %v1731, 1.442695
        %v1737 = vpow.pop %v1736
        %v1738 = vmul.f32 %v1732, 1.442695
        %v1739 = vpow.pop %v1738
        %v1740 = vmul.f32 %v1733, 1.442695
        %v1741 = vpow.pop %v1740
        %v1742 = vsel %vm1255, %v1735, 0.0
        %1743 = vadd.xlane.f32.xlu0 %v1742
        %v1744 = vpop.xlane.xlu0 %1743
        %v1745 = vsel %vm1255, %v1737, 0.0
        %1746 = vadd.xlane.f32.xlu0 %v1745
        %v1747 = vpop.xlane.xlu0 %1746
        %v1748 = vsel %vm1255, %v1739, 0.0
        %1749 = vadd.xlane.f32.xlu0 %v1748
        %v1750 = vpop.xlane.xlu0 %1749
        %v1751 = vsel %vm1255, %v1741, 0.0
        %1752 = vadd.xlane.f32.xlu0 %v1751
        %v1753 = vpop.xlane.xlu0 %1752
        %v1754 = vrcp.pop %v1744
        %v1755 = vrcp.pop %v1747
        %v1756 = vrcp.pop %v1750
        %v1757 = vrcp.pop %v1753
        %v1758 = vmul.f32 %v1735, %v1754
        %v1759 = vmul.f32 %v1737, %v1755
        %v1760 = vmul.f32 %v1739, %v1756
        %v1761 = vmul.f32 %v1741, %v1757
        %v1762 = vpack.c.bf16 %v1758, %v1758
        %v1763 = vpack.c.bf16 %v1759, %v1759
        %v1764 = vpack.c.bf16 %v1760, %v1760
        %v1765 = vpack.c.bf16 %v1761, %v1761
        %1767 = vrot.lane.b32.xlu0 %v1066, 96
        %v1768 = vpop.permute.xlu0 %1767
        %v1770 = vsel %vm1255, %v1762, 0
        %v1773 = vsel %vm1307, %v1768, 0
        %1775 = vmatprep.subr.bf16.mxu0 0
        %1776 = vmatpush1.bf16.msra.mxu0 0
        %1777 = vmatprep.subr.bf16.mxu0 0
        %1778 = vmatpush1.bf16.msra.mxu0 0
        %1779 = vmatprep.subr.bf16.mxu0 0
        %1780 = vmatpush1.bf16.msra.mxu0 0
        %1781 = vmatprep.subr.bf16.mxu0 0
        %1782 = vmatpush1.bf16.msra.mxu0 0
        %1783 = vmatprep.subr.bf16.mxu0 0
        %1784 = vmatpush1.bf16.msra.mxu0 0
        %1785 = vmatprep.subr.bf16.mxu0 0
        %1786 = vmatpush1.bf16.msra.mxu0 0
        %1787 = vmatprep.subr.bf16.mxu0 0
        %1788 = vmatpush1.bf16.msra.mxu0 0
        %1789 = vmatprep.subr.bf16.mxu0 0
        %1790 = vmatpush1.bf16.msra.mxu0 %v1773
        %1791 = vmatprep.subr.bf16.mxu0 0
        %1792 = vmatpush2.bf16.msra.mxu0 0
        %1793 = vmatprep.subr.bf16.mxu0 0
        %1794 = vmatpush2.bf16.msra.mxu0 0
        %1795 = vmatprep.subr.bf16.mxu0 0
        %1796 = vmatpush2.bf16.msra.mxu0 0
        %1797 = vmatprep.subr.bf16.mxu0 0
        %1798 = vmatpush2.bf16.msra.mxu0 0
        %1799 = vmatprep.subr.bf16.mxu0 0
        %1800 = vmatpush2.bf16.msra.mxu0 0
        %1801 = vmatprep.subr.bf16.mxu0 0
        %1802 = vmatpush2.bf16.msra.mxu0 0
        %1803 = vmatprep.subr.bf16.mxu0 0
        %1804 = vmatpush2.bf16.msra.mxu0 0
        %1805 = vmatprep.subr.bf16.mxu0 0
        %1806 = vmatpush2.bf16.msra.mxu0 0
        %1807 = vmatprep.mubr.bf16.mxu0 0
        %1808 = vmatmul.mubr.bf16.gmra.mxu0 %v1770
        %v1809 = vpop.f32.mrf.mxu0
        %v1810 = vadd.f32 0.0, %v1809
        %v1811 = vpop.f32.mrf.mxu0
        %v1812 = vpop.f32.mrf.mxu0
        %v1813 = vpop.f32.mrf.mxu0
        %1814 = vdwg.mxu0
        %1816 = vrot.lane.b32.xlu0 %v1067, 96
        %v1817 = vpop.permute.xlu0 %1816
        %v1819 = vsel %vm1255, %v1763, 0
        %v1822 = vsel %vm1307, %v1817, 0
        %1824 = vmatprep.subr.bf16.mxu0 0
        %1825 = vmatpush1.bf16.msra.mxu0 0
        %1826 = vmatprep.subr.bf16.mxu0 0
        %1827 = vmatpush1.bf16.msra.mxu0 0
        %1828 = vmatprep.subr.bf16.mxu0 0
        %1829 = vmatpush1.bf16.msra.mxu0 0
        %1830 = vmatprep.subr.bf16.mxu0 0
        %1831 = vmatpush1.bf16.msra.mxu0 0
        %1832 = vmatprep.subr.bf16.mxu0 0
        %1833 = vmatpush1.bf16.msra.mxu0 0
        %1834 = vmatprep.subr.bf16.mxu0 0
        %1835 = vmatpush1.bf16.msra.mxu0 0
        %1836 = vmatprep.subr.bf16.mxu0 0
        %1837 = vmatpush1.bf16.msra.mxu0 0
        %1838 = vmatprep.subr.bf16.mxu0 0
        %1839 = vmatpush1.bf16.msra.mxu0 %v1822
        %1840 = vmatprep.subr.bf16.mxu0 0
        %1841 = vmatpush2.bf16.msra.mxu0 0
        %1842 = vmatprep.subr.bf16.mxu0 0
        %1843 = vmatpush2.bf16.msra.mxu0 0
        %1844 = vmatprep.subr.bf16.mxu0 0
        %1845 = vmatpush2.bf16.msra.mxu0 0
        %1846 = vmatprep.subr.bf16.mxu0 0
        %1847 = vmatpush2.bf16.msra.mxu0 0
        %1848 = vmatprep.subr.bf16.mxu0 0
        %1849 = vmatpush2.bf16.msra.mxu0 0
        %1850 = vmatprep.subr.bf16.mxu0 0
        %1851 = vmatpush2.bf16.msra.mxu0 0
        %1852 = vmatprep.subr.bf16.mxu0 0
        %1853 = vmatpush2.bf16.msra.mxu0 0
        %1854 = vmatprep.subr.bf16.mxu0 0
        %1855 = vmatpush2.bf16.msra.mxu0 0
        %1856 = vmatprep.mubr.bf16.mxu0 0
        %1857 = vmatmul.mubr.bf16.gmra.mxu0 %v1819
        %v1858 = vpop.f32.mrf.mxu0
        %v1859 = vadd.f32 0.0, %v1858
        %v1860 = vpop.f32.mrf.mxu0
        %v1861 = vpop.f32.mrf.mxu0
        %v1862 = vpop.f32.mrf.mxu0
        %1863 = vdwg.mxu0
        %1865 = vrot.lane.b32.xlu0 %v1068, 96
        %v1866 = vpop.permute.xlu0 %1865
        %v1868 = vsel %vm1255, %v1764, 0
        %v1871 = vsel %vm1307, %v1866, 0
        %1873 = vmatprep.subr.bf16.mxu0 0
        %1874 = vmatpush1.bf16.msra.mxu0 0
        %1875 = vmatprep.subr.bf16.mxu0 0
        %1876 = vmatpush1.bf16.msra.mxu0 0
        %1877 = vmatprep.subr.bf16.mxu0 0
        %1878 = vmatpush1.bf16.msra.mxu0 0
        %1879 = vmatprep.subr.bf16.mxu0 0
        %1880 = vmatpush1.bf16.msra.mxu0 0
        %1881 = vmatprep.subr.bf16.mxu0 0
        %1882 = vmatpush1.bf16.msra.mxu0 0
        %1883 = vmatprep.subr.bf16.mxu0 0
        %1884 = vmatpush1.bf16.msra.mxu0 0
        %1885 = vmatprep.subr.bf16.mxu0 0
        %1886 = vmatpush1.bf16.msra.mxu0 0
        %1887 = vmatprep.subr.bf16.mxu0 0
        %1888 = vmatpush1.bf16.msra.mxu0 %v1871
        %1889 = vmatprep.subr.bf16.mxu0 0
        %1890 = vmatpush2.bf16.msra.mxu0 0
        %1891 = vmatprep.subr.bf16.mxu0 0
        %1892 = vmatpush2.bf16.msra.mxu0 0
        %1893 = vmatprep.subr.bf16.mxu0 0
        %1894 = vmatpush2.bf16.msra.mxu0 0
        %1895 = vmatprep.subr.bf16.mxu0 0
        %1896 = vmatpush2.bf16.msra.mxu0 0
        %1897 = vmatprep.subr.bf16.mxu0 0
        %1898 = vmatpush2.bf16.msra.mxu0 0
        %1899 = vmatprep.subr.bf16.mxu0 0
        %1900 = vmatpush2.bf16.msra.mxu0 0
        %1901 = vmatprep.subr.bf16.mxu0 0
        %1902 = vmatpush2.bf16.msra.mxu0 0
        %1903 = vmatprep.subr.bf16.mxu0 0
        %1904 = vmatpush2.bf16.msra.mxu0 0
        %1905 = vmatprep.mubr.bf16.mxu0 0
        %1906 = vmatmul.mubr.bf16.gmra.mxu0 %v1868
        %v1907 = vpop.f32.mrf.mxu0
        %v1908 = vadd.f32 0.0, %v1907
        %v1909 = vpop.f32.mrf.mxu0
        %v1910 = vpop.f32.mrf.mxu0
        %v1911 = vpop.f32.mrf.mxu0
        %1912 = vdwg.mxu0
        %1914 = vrot.lane.b32.xlu0 %v1069, 96
        %v1915 = vpop.permute.xlu0 %1914
        %v1917 = vsel %vm1255, %v1765, 0
        %v1920 = vsel %vm1307, %v1915, 0
        %1922 = vmatprep.subr.bf16.mxu0 0
        %1923 = vmatpush1.bf16.msra.mxu0 0
        %1924 = vmatprep.subr.bf16.mxu0 0
        %1925 = vmatpush1.bf16.msra.mxu0 0
        %1926 = vmatprep.subr.bf16.mxu0 0
        %1927 = vmatpush1.bf16.msra.mxu0 0
        %1928 = vmatprep.subr.bf16.mxu0 0
        %1929 = vmatpush1.bf16.msra.mxu0 0
        %1930 = vmatprep.subr.bf16.mxu0 0
        %1931 = vmatpush1.bf16.msra.mxu0 0
        %1932 = vmatprep.subr.bf16.mxu0 0
        %1933 = vmatpush1.bf16.msra.mxu0 0
        %1934 = vmatprep.subr.bf16.mxu0 0
        %1935 = vmatpush1.bf16.msra.mxu0 0
        %1936 = vmatprep.subr.bf16.mxu0 0
        %1937 = vmatpush1.bf16.msra.mxu0 %v1920
        %1938 = vmatprep.subr.bf16.mxu0 0
        %1939 = vmatpush2.bf16.msra.mxu0 0
        %1940 = vmatprep.subr.bf16.mxu0 0
        %1941 = vmatpush2.bf16.msra.mxu0 0
        %1942 = vmatprep.subr.bf16.mxu0 0
        %1943 = vmatpush2.bf16.msra.mxu0 0
        %1944 = vmatprep.subr.bf16.mxu0 0
        %1945 = vmatpush2.bf16.msra.mxu0 0
        %1946 = vmatprep.subr.bf16.mxu0 0
        %1947 = vmatpush2.bf16.msra.mxu0 0
        %1948 = vmatprep.subr.bf16.mxu0 0
        %1949 = vmatpush2.bf16.msra.mxu0 0
        %1950 = vmatprep.subr.bf16.mxu0 0
        %1951 = vmatpush2.bf16.msra.mxu0 0
        %1952 = vmatprep.subr.bf16.mxu0 0
        %1953 = vmatpush2.bf16.msra.mxu0 0
        %1954 = vmatprep.mubr.bf16.mxu0 0
        %1955 = vmatmul.mubr.bf16.gmra.mxu0 %v1917
        %v1956 = vpop.f32.mrf.mxu0
        %v1957 = vadd.f32 0.0, %v1956
        %v1958 = vpop.f32.mrf.mxu0
        %v1959 = vpop.f32.mrf.mxu0
        %v1960 = vpop.f32.mrf.mxu0
        %1961 = vdwg.mxu0
        %v1962 = vpack.c.bf16 %v1859, %v1810
        %v1963 = vpack.c.bf16 %v1957, %v1908
        %v1966 = vunpack.c.l.b16 %v1962
        %v1967 = vunpack.c.h.b16 %v1962
        %v1968 = vunpack.c.l.b16 %v1963
        %v1969 = vunpack.c.h.b16 %v1963
        %v1970 = vpack.c.b16 %v1966, %v1966
        %v1971 = vpack.c.b16 %v1967, %v1967
        %v1972 = vpack.c.b16 %v1968, %v1968
        %v1973 = vpack.c.b16 %v1969, %v1969
        %1974 = vrot.lane.b32.xlu0 %v1970, 32
        %v1975 = vpop.permute.xlu0 %1974
        %1976 = vrot.lane.b32.xlu0 %v1971, 32
        %v1977 = vpop.permute.xlu0 %1976
        %1978 = vrot.lane.b32.xlu0 %v1972, 32
        %v1979 = vpop.permute.xlu0 %1978
        %1980 = vrot.lane.b32.xlu0 %v1973, 32
        %v1981 = vpop.permute.xlu0 %1980
        %vm1986 = vcmask 519424
        %1987 = vst.msk [vmem:[#allocation2] sm:$0xf] %vm1986, %v1975
        %1988 = vst.msk [vmem:[#allocation2 + $0x4] sm:$0xf] %vm1986, %v1977
        %1989 = vst.msk [vmem:[#allocation2 + $0x8] sm:$0xf] %vm1986, %v1979
        %1990 = vst.msk [vmem:[#allocation2 + $0xc] sm:$0xf] %vm1986, %v1981
        %1991 = vrot.lane.b32.xlu0 %v1058, 64
        %v1992 = vpop.permute.xlu0 %1991
        %1993 = vrot.lane.b32.xlu0 %v1062, 64
        %v1994 = vpop.permute.xlu0 %1993
        %v1996 = vsel %vm1070, %v1992, 0
        %v1999 = vsel %vm1070, %v1994, 0
        %2001 = vmatprep.subr.bf16.mxu0 0
        %2002 = vmatpush1.bf16.xpose.msra.mxu0 0
        %2003 = vmatprep.subr.bf16.mxu0 0
        %2004 = vmatpush1.bf16.xpose.msra.mxu0 0
        %2005 = vmatprep.subr.bf16.mxu0 0
        %2006 = vmatpush1.bf16.xpose.msra.mxu0 0
        %2007 = vmatprep.subr.bf16.mxu0 0
        %2008 = vmatpush1.bf16.xpose.msra.mxu0 0
        %2009 = vmatprep.subr.bf16.mxu0 0
        %2010 = vmatpush1.bf16.xpose.msra.mxu0 0
        %2011 = vmatprep.subr.bf16.mxu0 0
        %2012 = vmatpush1.bf16.xpose.msra.mxu0 0
        %2013 = vmatprep.subr.bf16.mxu0 0
        %2014 = vmatpush1.bf16.xpose.msra.mxu0 0
        %2015 = vmatprep.subr.bf16.mxu0 0
        %2016 = vmatpush1.bf16.xpose.msra.mxu0 %v1999
        %2017 = vmatprep.subr.bf16.mxu0 0
        %2018 = vmatpush2.bf16.xpose.msra.mxu0 0
        %2019 = vmatprep.subr.bf16.mxu0 0
        %2020 = vmatpush2.bf16.xpose.msra.mxu0 0
        %2021 = vmatprep.subr.bf16.mxu0 0
        %2022 = vmatpush2.bf16.xpose.msra.mxu0 0
        %2023 = vmatprep.subr.bf16.mxu0 0
        %2024 = vmatpush2.bf16.xpose.msra.mxu0 0
        %2025 = vmatprep.subr.bf16.mxu0 0
        %2026 = vmatpush2.bf16.xpose.msra.mxu0 0
        %2027 = vmatprep.subr.bf16.mxu0 0
        %2028 = vmatpush2.bf16.xpose.msra.mxu0 0
        %2029 = vmatprep.subr.bf16.mxu0 0
        %2030 = vmatpush2.bf16.xpose.msra.mxu0 0
        %2031 = vmatprep.subr.bf16.mxu0 0
        %2032 = vmatpush2.bf16.xpose.msra.mxu0 0
        %2033 = vmatprep.mubr.bf16.mxu0 0
        %2034 = vmatmul.mubr.bf16.gmra.mxu0 %v1996
        %v2035 = vpop.f32.mrf.mxu0
        %v2036 = vadd.f32 0.0, %v2035
        %v2037 = vpop.f32.mrf.mxu0
        %v2038 = vpop.f32.mrf.mxu0
        %v2039 = vpop.f32.mrf.mxu0
        %2040 = vdwg.mxu0
        %2041 = vrot.lane.b32.xlu0 %v1059, 64
        %v2042 = vpop.permute.xlu0 %2041
        %2043 = vrot.lane.b32.xlu0 %v1063, 64
        %v2044 = vpop.permute.xlu0 %2043
        %v2046 = vsel %vm1070, %v2042, 0
        %v2049 = vsel %vm1070, %v2044, 0
        %2051 = vmatprep.subr.bf16.mxu0 0
        %2052 = vmatpush1.bf16.xpose.msra.mxu0 0
        %2053 = vmatprep.subr.bf16.mxu0 0
        %2054 = vmatpush1.bf16.xpose.msra.mxu0 0
        %2055 = vmatprep.subr.bf16.mxu0 0
        %2056 = vmatpush1.bf16.xpose.msra.mxu0 0
        %2057 = vmatprep.subr.bf16.mxu0 0
        %2058 = vmatpush1.bf16.xpose.msra.mxu0 0
        %2059 = vmatprep.subr.bf16.mxu0 0
        %2060 = vmatpush1.bf16.xpose.msra.mxu0 0
        %2061 = vmatprep.subr.bf16.mxu0 0
        %2062 = vmatpush1.bf16.xpose.msra.mxu0 0
        %2063 = vmatprep.subr.bf16.mxu0 0
        %2064 = vmatpush1.bf16.xpose.msra.mxu0 0
        %2065 = vmatprep.subr.bf16.mxu0 0
        %2066 = vmatpush1.bf16.xpose.msra.mxu0 %v2049
        %2067 = vmatprep.subr.bf16.mxu0 0
        %2068 = vmatpush2.bf16.xpose.msra.mxu0 0
        %2069 = vmatprep.subr.bf16.mxu0 0
        %2070 = vmatpush2.bf16.xpose.msra.mxu0 0
        %2071 = vmatprep.subr.bf16.mxu0 0
        %2072 = vmatpush2.bf16.xpose.msra.mxu0 0
        %2073 = vmatprep.subr.bf16.mxu0 0
        %2074 = vmatpush2.bf16.xpose.msra.mxu0 0
        %2075 = vmatprep.subr.bf16.mxu0 0
        %2076 = vmatpush2.bf16.xpose.msra.mxu0 0
        %2077 = vmatprep.subr.bf16.mxu0 0
        %2078 = vmatpush2.bf16.xpose.msra.mxu0 0
        %2079 = vmatprep.subr.bf16.mxu0 0
        %2080 = vmatpush2.bf16.xpose.msra.mxu0 0
        %2081 = vmatprep.subr.bf16.mxu0 0
        %2082 = vmatpush2.bf16.xpose.msra.mxu0 0
        %2083 = vmatprep.mubr.bf16.mxu0 0
        %2084 = vmatmul.mubr.bf16.gmra.mxu0 %v2046
        %v2085 = vpop.f32.mrf.mxu0
        %v2086 = vadd.f32 0.0, %v2085
        %v2087 = vpop.f32.mrf.mxu0
        %v2088 = vpop.f32.mrf.mxu0
        %v2089 = vpop.f32.mrf.mxu0
        %2090 = vdwg.mxu0
        %2091 = vrot.lane.b32.xlu0 %v1060, 64
        %v2092 = vpop.permute.xlu0 %2091
        %2093 = vrot.lane.b32.xlu0 %v1064, 64
        %v2094 = vpop.permute.xlu0 %2093
        %v2096 = vsel %vm1070, %v2092, 0
        %v2099 = vsel %vm1070, %v2094, 0
        %2101 = vmatprep.subr.bf16.mxu0 0
        %2102 = vmatpush1.bf16.xpose.msra.mxu0 0
        %2103 = vmatprep.subr.bf16.mxu0 0
        %2104 = vmatpush1.bf16.xpose.msra.mxu0 0
        %2105 = vmatprep.subr.bf16.mxu0 0
        %2106 = vmatpush1.bf16.xpose.msra.mxu0 0
        %2107 = vmatprep.subr.bf16.mxu0 0
        %2108 = vmatpush1.bf16.xpose.msra.mxu0 0
        %2109 = vmatprep.subr.bf16.mxu0 0
        %2110 = vmatpush1.bf16.xpose.msra.mxu0 0
        %2111 = vmatprep.subr.bf16.mxu0 0
        %2112 = vmatpush1.bf16.xpose.msra.mxu0 0
        %2113 = vmatprep.subr.bf16.mxu0 0
        %2114 = vmatpush1.bf16.xpose.msra.mxu0 0
        %2115 = vmatprep.subr.bf16.mxu0 0
        %2116 = vmatpush1.bf16.xpose.msra.mxu0 %v2099
        %2117 = vmatprep.subr.bf16.mxu0 0
        %2118 = vmatpush2.bf16.xpose.msra.mxu0 0
        %2119 = vmatprep.subr.bf16.mxu0 0
        %2120 = vmatpush2.bf16.xpose.msra.mxu0 0
        %2121 = vmatprep.subr.bf16.mxu0 0
        %2122 = vmatpush2.bf16.xpose.msra.mxu0 0
        %2123 = vmatprep.subr.bf16.mxu0 0
        %2124 = vmatpush2.bf16.xpose.msra.mxu0 0
        %2125 = vmatprep.subr.bf16.mxu0 0
        %2126 = vmatpush2.bf16.xpose.msra.mxu0 0
        %2127 = vmatprep.subr.bf16.mxu0 0
        %2128 = vmatpush2.bf16.xpose.msra.mxu0 0
        %2129 = vmatprep.subr.bf16.mxu0 0
        %2130 = vmatpush2.bf16.xpose.msra.mxu0 0
        %2131 = vmatprep.subr.bf16.mxu0 0
        %2132 = vmatpush2.bf16.xpose.msra.mxu0 0
        %2133 = vmatprep.mubr.bf16.mxu0 0
        %2134 = vmatmul.mubr.bf16.gmra.mxu0 %v2096
        %v2135 = vpop.f32.mrf.mxu0
        %v2136 = vadd.f32 0.0, %v2135
        %v2137 = vpop.f32.mrf.mxu0
        %v2138 = vpop.f32.mrf.mxu0
        %v2139 = vpop.f32.mrf.mxu0
        %2140 = vdwg.mxu0
        %2141 = vrot.lane.b32.xlu0 %v1061, 64
        %v2142 = vpop.permute.xlu0 %2141
        %2143 = vrot.lane.b32.xlu0 %v1065, 64
        %v2144 = vpop.permute.xlu0 %2143
        %v2146 = vsel %vm1070, %v2142, 0
        %v2149 = vsel %vm1070, %v2144, 0
        %2151 = vmatprep.subr.bf16.mxu0 0
        %2152 = vmatpush1.bf16.xpose.msra.mxu0 0
        %2153 = vmatprep.subr.bf16.mxu0 0
        %2154 = vmatpush1.bf16.xpose.msra.mxu0 0
        %2155 = vmatprep.subr.bf16.mxu0 0
        %2156 = vmatpush1.bf16.xpose.msra.mxu0 0
        %2157 = vmatprep.subr.bf16.mxu0 0
        %2158 = vmatpush1.bf16.xpose.msra.mxu0 0
        %2159 = vmatprep.subr.bf16.mxu0 0
        %2160 = vmatpush1.bf16.xpose.msra.mxu0 0
        %2161 = vmatprep.subr.bf16.mxu0 0
        %2162 = vmatpush1.bf16.xpose.msra.mxu0 0
        %2163 = vmatprep.subr.bf16.mxu0 0
        %2164 = vmatpush1.bf16.xpose.msra.mxu0 0
        %2165 = vmatprep.subr.bf16.mxu0 0
        %2166 = vmatpush1.bf16.xpose.msra.mxu0 %v2149
        %2167 = vmatprep.subr.bf16.mxu0 0
        %2168 = vmatpush2.bf16.xpose.msra.mxu0 0
        %2169 = vmatprep.subr.bf16.mxu0 0
        %2170 = vmatpush2.bf16.xpose.msra.mxu0 0
        %2171 = vmatprep.subr.bf16.mxu0 0
        %2172 = vmatpush2.bf16.xpose.msra.mxu0 0
        %2173 = vmatprep.subr.bf16.mxu0 0
        %2174 = vmatpush2.bf16.xpose.msra.mxu0 0
        %2175 = vmatprep.subr.bf16.mxu0 0
        %2176 = vmatpush2.bf16.xpose.msra.mxu0 0
        %2177 = vmatprep.subr.bf16.mxu0 0
        %2178 = vmatpush2.bf16.xpose.msra.mxu0 0
        %2179 = vmatprep.subr.bf16.mxu0 0
        %2180 = vmatpush2.bf16.xpose.msra.mxu0 0
        %2181 = vmatprep.subr.bf16.mxu0 0
        %2182 = vmatpush2.bf16.xpose.msra.mxu0 0
        %2183 = vmatprep.mubr.bf16.mxu0 0
        %2184 = vmatmul.mubr.bf16.gmra.mxu0 %v2146
        %v2185 = vpop.f32.mrf.mxu0
        %v2186 = vadd.f32 0.0, %v2185
        %v2187 = vpop.f32.mrf.mxu0
        %v2188 = vpop.f32.mrf.mxu0
        %v2189 = vpop.f32.mrf.mxu0
        %2190 = vdwg.mxu0
        %v2191 = vsel %vm1255, %v2036, -inf
        %2192 = vmax.xlane.f32.xlu0 %v2191
        %v2193 = vpop.xlane.xlu0 %2192
        %v2194 = vsel %vm1255, %v2086, -inf
        %2195 = vmax.xlane.f32.xlu0 %v2194
        %v2196 = vpop.xlane.xlu0 %2195
        %v2197 = vsel %vm1255, %v2136, -inf
        %2198 = vmax.xlane.f32.xlu0 %v2197
        %v2199 = vpop.xlane.xlu0 %2198
        %v2200 = vsel %vm1255, %v2186, -inf
        %2201 = vmax.xlane.f32.xlu0 %v2200
        %v2202 = vpop.xlane.xlu0 %2201
        %v2203 = vsub.f32 %v2036, %v2193
        %v2204 = vsub.f32 %v2086, %v2196
        %v2205 = vsub.f32 %v2136, %v2199
        %v2206 = vsub.f32 %v2186, %v2202
        %v2207 = vmul.f32 %v2203, 1.442695
        %v2208 = vpow.pop %v2207
        %v2209 = vmul.f32 %v2204, 1.442695
        %v2210 = vpow.pop %v2209
        %v2211 = vmul.f32 %v2205, 1.442695
        %v2212 = vpow.pop %v2211
        %v2213 = vmul.f32 %v2206, 1.442695
        %v2214 = vpow.pop %v2213
        %v2215 = vsel %vm1255, %v2208, 0.0
        %2216 = vadd.xlane.f32.xlu0 %v2215
        %v2217 = vpop.xlane.xlu0 %2216
        %v2218 = vsel %vm1255, %v2210, 0.0
        %2219 = vadd.xlane.f32.xlu0 %v2218
        %v2220 = vpop.xlane.xlu0 %2219
        %v2221 = vsel %vm1255, %v2212, 0.0
        %2222 = vadd.xlane.f32.xlu0 %v2221
        %v2223 = vpop.xlane.xlu0 %2222
        %v2224 = vsel %vm1255, %v2214, 0.0
        %2225 = vadd.xlane.f32.xlu0 %v2224
        %v2226 = vpop.xlane.xlu0 %2225
        %v2227 = vrcp.pop %v2217
        %v2228 = vrcp.pop %v2220
        %v2229 = vrcp.pop %v2223
        %v2230 = vrcp.pop %v2226
        %v2231 = vmul.f32 %v2208, %v2227
        %v2232 = vmul.f32 %v2210, %v2228
        %v2233 = vmul.f32 %v2212, %v2229
        %v2234 = vmul.f32 %v2214, %v2230
        %v2235 = vpack.c.bf16 %v2231, %v2231
        %v2236 = vpack.c.bf16 %v2232, %v2232
        %v2237 = vpack.c.bf16 %v2233, %v2233
        %v2238 = vpack.c.bf16 %v2234, %v2234
        %2239 = vrot.lane.b32.xlu0 %v1066, 64
        %v2240 = vpop.permute.xlu0 %2239
        %v2242 = vsel %vm1255, %v2235, 0
        %v2245 = vsel %vm1307, %v2240, 0
        %2247 = vmatprep.subr.bf16.mxu0 0
        %2248 = vmatpush1.bf16.msra.mxu0 0
        %2249 = vmatprep.subr.bf16.mxu0 0
        %2250 = vmatpush1.bf16.msra.mxu0 0
        %2251 = vmatprep.subr.bf16.mxu0 0
        %2252 = vmatpush1.bf16.msra.mxu0 0
        %2253 = vmatprep.subr.bf16.mxu0 0
        %2254 = vmatpush1.bf16.msra.mxu0 0
        %2255 = vmatprep.subr.bf16.mxu0 0
        %2256 = vmatpush1.bf16.msra.mxu0 0
        %2257 = vmatprep.subr.bf16.mxu0 0
        %2258 = vmatpush1.bf16.msra.mxu0 0
        %2259 = vmatprep.subr.bf16.mxu0 0
        %2260 = vmatpush1.bf16.msra.mxu0 0
        %2261 = vmatprep.subr.bf16.mxu0 0
        %2262 = vmatpush1.bf16.msra.mxu0 %v2245
        %2263 = vmatprep.subr.bf16.mxu0 0
        %2264 = vmatpush2.bf16.msra.mxu0 0
        %2265 = vmatprep.subr.bf16.mxu0 0
        %2266 = vmatpush2.bf16.msra.mxu0 0
        %2267 = vmatprep.subr.bf16.mxu0 0
        %2268 = vmatpush2.bf16.msra.mxu0 0
        %2269 = vmatprep.subr.bf16.mxu0 0
        %2270 = vmatpush2.bf16.msra.mxu0 0
        %2271 = vmatprep.subr.bf16.mxu0 0
        %2272 = vmatpush2.bf16.msra.mxu0 0
        %2273 = vmatprep.subr.bf16.mxu0 0
        %2274 = vmatpush2.bf16.msra.mxu0 0
        %2275 = vmatprep.subr.bf16.mxu0 0
        %2276 = vmatpush2.bf16.msra.mxu0 0
        %2277 = vmatprep.subr.bf16.mxu0 0
        %2278 = vmatpush2.bf16.msra.mxu0 0
        %2279 = vmatprep.mubr.bf16.mxu0 0
        %2280 = vmatmul.mubr.bf16.gmra.mxu0 %v2242
        %v2281 = vpop.f32.mrf.mxu0
        %v2282 = vadd.f32 0.0, %v2281
        %v2283 = vpop.f32.mrf.mxu0
        %v2284 = vpop.f32.mrf.mxu0
        %v2285 = vpop.f32.mrf.mxu0
        %2286 = vdwg.mxu0
        %2287 = vrot.lane.b32.xlu0 %v1067, 64
        %v2288 = vpop.permute.xlu0 %2287
        %v2290 = vsel %vm1255, %v2236, 0
        %v2293 = vsel %vm1307, %v2288, 0
        %2295 = vmatprep.subr.bf16.mxu0 0
        %2296 = vmatpush1.bf16.msra.mxu0 0
        %2297 = vmatprep.subr.bf16.mxu0 0
        %2298 = vmatpush1.bf16.msra.mxu0 0
        %2299 = vmatprep.subr.bf16.mxu0 0
        %2300 = vmatpush1.bf16.msra.mxu0 0
        %2301 = vmatprep.subr.bf16.mxu0 0
        %2302 = vmatpush1.bf16.msra.mxu0 0
        %2303 = vmatprep.subr.bf16.mxu0 0
        %2304 = vmatpush1.bf16.msra.mxu0 0
        %2305 = vmatprep.subr.bf16.mxu0 0
        %2306 = vmatpush1.bf16.msra.mxu0 0
        %2307 = vmatprep.subr.bf16.mxu0 0
        %2308 = vmatpush1.bf16.msra.mxu0 0
        %2309 = vmatprep.subr.bf16.mxu0 0
        %2310 = vmatpush1.bf16.msra.mxu0 %v2293
        %2311 = vmatprep.subr.bf16.mxu0 0
        %2312 = vmatpush2.bf16.msra.mxu0 0
        %2313 = vmatprep.subr.bf16.mxu0 0
        %2314 = vmatpush2.bf16.msra.mxu0 0
        %2315 = vmatprep.subr.bf16.mxu0 0
        %2316 = vmatpush2.bf16.msra.mxu0 0
        %2317 = vmatprep.subr.bf16.mxu0 0
        %2318 = vmatpush2.bf16.msra.mxu0 0
        %2319 = vmatprep.subr.bf16.mxu0 0
        %2320 = vmatpush2.bf16.msra.mxu0 0
        %2321 = vmatprep.subr.bf16.mxu0 0
        %2322 = vmatpush2.bf16.msra.mxu0 0
        %2323 = vmatprep.subr.bf16.mxu0 0
        %2324 = vmatpush2.bf16.msra.mxu0 0
        %2325 = vmatprep.subr.bf16.mxu0 0
        %2326 = vmatpush2.bf16.msra.mxu0 0
        %2327 = vmatprep.mubr.bf16.mxu0 0
        %2328 = vmatmul.mubr.bf16.gmra.mxu0 %v2290
        %v2329 = vpop.f32.mrf.mxu0
        %v2330 = vadd.f32 0.0, %v2329
        %v2331 = vpop.f32.mrf.mxu0
        %v2332 = vpop.f32.mrf.mxu0
        %v2333 = vpop.f32.mrf.mxu0
        %2334 = vdwg.mxu0
        %2335 = vrot.lane.b32.xlu0 %v1068, 64
        %v2336 = vpop.permute.xlu0 %2335
        %v2338 = vsel %vm1255, %v2237, 0
        %v2341 = vsel %vm1307, %v2336, 0
        %2343 = vmatprep.subr.bf16.mxu0 0
        %2344 = vmatpush1.bf16.msra.mxu0 0
        %2345 = vmatprep.subr.bf16.mxu0 0
        %2346 = vmatpush1.bf16.msra.mxu0 0
        %2347 = vmatprep.subr.bf16.mxu0 0
        %2348 = vmatpush1.bf16.msra.mxu0 0
        %2349 = vmatprep.subr.bf16.mxu0 0
        %2350 = vmatpush1.bf16.msra.mxu0 0
        %2351 = vmatprep.subr.bf16.mxu0 0
        %2352 = vmatpush1.bf16.msra.mxu0 0
        %2353 = vmatprep.subr.bf16.mxu0 0
        %2354 = vmatpush1.bf16.msra.mxu0 0
        %2355 = vmatprep.subr.bf16.mxu0 0
        %2356 = vmatpush1.bf16.msra.mxu0 0
        %2357 = vmatprep.subr.bf16.mxu0 0
        %2358 = vmatpush1.bf16.msra.mxu0 %v2341
        %2359 = vmatprep.subr.bf16.mxu0 0
        %2360 = vmatpush2.bf16.msra.mxu0 0
        %2361 = vmatprep.subr.bf16.mxu0 0
        %2362 = vmatpush2.bf16.msra.mxu0 0
        %2363 = vmatprep.subr.bf16.mxu0 0
        %2364 = vmatpush2.bf16.msra.mxu0 0
        %2365 = vmatprep.subr.bf16.mxu0 0
        %2366 = vmatpush2.bf16.msra.mxu0 0
        %2367 = vmatprep.subr.bf16.mxu0 0
        %2368 = vmatpush2.bf16.msra.mxu0 0
        %2369 = vmatprep.subr.bf16.mxu0 0
        %2370 = vmatpush2.bf16.msra.mxu0 0
        %2371 = vmatprep.subr.bf16.mxu0 0
        %2372 = vmatpush2.bf16.msra.mxu0 0
        %2373 = vmatprep.subr.bf16.mxu0 0
        %2374 = vmatpush2.bf16.msra.mxu0 0
        %2375 = vmatprep.mubr.bf16.mxu0 0
        %2376 = vmatmul.mubr.bf16.gmra.mxu0 %v2338
        %v2377 = vpop.f32.mrf.mxu0
        %v2378 = vadd.f32 0.0, %v2377
        %v2379 = vpop.f32.mrf.mxu0
        %v2380 = vpop.f32.mrf.mxu0
        %v2381 = vpop.f32.mrf.mxu0
        %2382 = vdwg.mxu0
        %2383 = vrot.lane.b32.xlu0 %v1069, 64
        %v2384 = vpop.permute.xlu0 %2383
        %v2386 = vsel %vm1255, %v2238, 0
        %v2389 = vsel %vm1307, %v2384, 0
        %2391 = vmatprep.subr.bf16.mxu0 0
        %2392 = vmatpush1.bf16.msra.mxu0 0
        %2393 = vmatprep.subr.bf16.mxu0 0
        %2394 = vmatpush1.bf16.msra.mxu0 0
        %2395 = vmatprep.subr.bf16.mxu0 0
        %2396 = vmatpush1.bf16.msra.mxu0 0
        %2397 = vmatprep.subr.bf16.mxu0 0
        %2398 = vmatpush1.bf16.msra.mxu0 0
        %2399 = vmatprep.subr.bf16.mxu0 0
        %2400 = vmatpush1.bf16.msra.mxu0 0
        %2401 = vmatprep.subr.bf16.mxu0 0
        %2402 = vmatpush1.bf16.msra.mxu0 0
        %2403 = vmatprep.subr.bf16.mxu0 0
        %2404 = vmatpush1.bf16.msra.mxu0 0
        %2405 = vmatprep.subr.bf16.mxu0 0
        %2406 = vmatpush1.bf16.msra.mxu0 %v2389
        %2407 = vmatprep.subr.bf16.mxu0 0
        %2408 = vmatpush2.bf16.msra.mxu0 0
        %2409 = vmatprep.subr.bf16.mxu0 0
        %2410 = vmatpush2.bf16.msra.mxu0 0
        %2411 = vmatprep.subr.bf16.mxu0 0
        %2412 = vmatpush2.bf16.msra.mxu0 0
        %2413 = vmatprep.subr.bf16.mxu0 0
        %2414 = vmatpush2.bf16.msra.mxu0 0
        %2415 = vmatprep.subr.bf16.mxu0 0
        %2416 = vmatpush2.bf16.msra.mxu0 0
        %2417 = vmatprep.subr.bf16.mxu0 0
        %2418 = vmatpush2.bf16.msra.mxu0 0
        %2419 = vmatprep.subr.bf16.mxu0 0
        %2420 = vmatpush2.bf16.msra.mxu0 0
        %2421 = vmatprep.subr.bf16.mxu0 0
        %2422 = vmatpush2.bf16.msra.mxu0 0
        %2423 = vmatprep.mubr.bf16.mxu0 0
        %2424 = vmatmul.mubr.bf16.gmra.mxu0 %v2386
        %v2425 = vpop.f32.mrf.mxu0
        %v2426 = vadd.f32 0.0, %v2425
        %v2427 = vpop.f32.mrf.mxu0
        %v2428 = vpop.f32.mrf.mxu0
        %v2429 = vpop.f32.mrf.mxu0
        %2430 = vdwg.mxu0
        %v2431 = vpack.c.bf16 %v2330, %v2282
        %v2432 = vpack.c.bf16 %v2426, %v2378
        %v2435 = vunpack.c.l.b16 %v2431
        %v2436 = vunpack.c.h.b16 %v2431
        %v2437 = vunpack.c.l.b16 %v2432
        %v2438 = vunpack.c.h.b16 %v2432
        %v2439 = vpack.c.b16 %v2435, %v2435
        %v2440 = vpack.c.b16 %v2436, %v2436
        %v2441 = vpack.c.b16 %v2437, %v2437
        %v2442 = vpack.c.b16 %v2438, %v2438
        %2443 = vrot.lane.b32.xlu0 %v2439, 64
        %v2444 = vpop.permute.xlu0 %2443
        %2445 = vrot.lane.b32.xlu0 %v2440, 64
        %v2446 = vpop.permute.xlu0 %2445
        %2447 = vrot.lane.b32.xlu0 %v2441, 64
        %v2448 = vpop.permute.xlu0 %2447
        %2449 = vrot.lane.b32.xlu0 %v2442, 64
        %v2450 = vpop.permute.xlu0 %2449
        %vm2455 = vcmask 781824
        %2456 = vst.msk [vmem:[#allocation2] sm:$0xf] %vm2455, %v2444
        %2457 = vst.msk [vmem:[#allocation2 + $0x4] sm:$0xf] %vm2455, %v2446
        %2458 = vst.msk [vmem:[#allocation2 + $0x8] sm:$0xf] %vm2455, %v2448
        %2459 = vst.msk [vmem:[#allocation2 + $0xc] sm:$0xf] %vm2455, %v2450
        %2460 = vrot.lane.b32.xlu0 %v1058, 32
        %v2461 = vpop.permute.xlu0 %2460
        %2462 = vrot.lane.b32.xlu0 %v1062, 32
        %v2463 = vpop.permute.xlu0 %2462
        %v2465 = vsel %vm1070, %v2461, 0
        %v2468 = vsel %vm1070, %v2463, 0
        %2470 = vmatprep.subr.bf16.mxu0 0
        %2471 = vmatpush1.bf16.xpose.msra.mxu0 0
        %2472 = vmatprep.subr.bf16.mxu0 0
        %2473 = vmatpush1.bf16.xpose.msra.mxu0 0
        %2474 = vmatprep.subr.bf16.mxu0 0
        %2475 = vmatpush1.bf16.xpose.msra.mxu0 0
        %2476 = vmatprep.subr.bf16.mxu0 0
        %2477 = vmatpush1.bf16.xpose.msra.mxu0 0
        %2478 = vmatprep.subr.bf16.mxu0 0
        %2479 = vmatpush1.bf16.xpose.msra.mxu0 0
        %2480 = vmatprep.subr.bf16.mxu0 0
        %2481 = vmatpush1.bf16.xpose.msra.mxu0 0
        %2482 = vmatprep.subr.bf16.mxu0 0
        %2483 = vmatpush1.bf16.xpose.msra.mxu0 0
        %2484 = vmatprep.subr.bf16.mxu0 0
        %2485 = vmatpush1.bf16.xpose.msra.mxu0 %v2468
        %2486 = vmatprep.subr.bf16.mxu0 0
        %2487 = vmatpush2.bf16.xpose.msra.mxu0 0
        %2488 = vmatprep.subr.bf16.mxu0 0
        %2489 = vmatpush2.bf16.xpose.msra.mxu0 0
        %2490 = vmatprep.subr.bf16.mxu0 0
        %2491 = vmatpush2.bf16.xpose.msra.mxu0 0
        %2492 = vmatprep.subr.bf16.mxu0 0
        %2493 = vmatpush2.bf16.xpose.msra.mxu0 0
        %2494 = vmatprep.subr.bf16.mxu0 0
        %2495 = vmatpush2.bf16.xpose.msra.mxu0 0
        %2496 = vmatprep.subr.bf16.mxu0 0
        %2497 = vmatpush2.bf16.xpose.msra.mxu0 0
        %2498 = vmatprep.subr.bf16.mxu0 0
        %2499 = vmatpush2.bf16.xpose.msra.mxu0 0
        %2500 = vmatprep.subr.bf16.mxu0 0
        %2501 = vmatpush2.bf16.xpose.msra.mxu0 0
        %2502 = vmatprep.mubr.bf16.mxu0 0
        %2503 = vmatmul.mubr.bf16.gmra.mxu0 %v2465
        %v2504 = vpop.f32.mrf.mxu0
        %v2505 = vadd.f32 0.0, %v2504
        %v2506 = vpop.f32.mrf.mxu0
        %v2507 = vpop.f32.mrf.mxu0
        %v2508 = vpop.f32.mrf.mxu0
        %2509 = vdwg.mxu0
        %2510 = vrot.lane.b32.xlu0 %v1059, 32
        %v2511 = vpop.permute.xlu0 %2510
        %2512 = vrot.lane.b32.xlu0 %v1063, 32
        %v2513 = vpop.permute.xlu0 %2512
        %v2515 = vsel %vm1070, %v2511, 0
        %v2518 = vsel %vm1070, %v2513, 0
        %2520 = vmatprep.subr.bf16.mxu0 0
        %2521 = vmatpush1.bf16.xpose.msra.mxu0 0
        %2522 = vmatprep.subr.bf16.mxu0 0
        %2523 = vmatpush1.bf16.xpose.msra.mxu0 0
        %2524 = vmatprep.subr.bf16.mxu0 0
        %2525 = vmatpush1.bf16.xpose.msra.mxu0 0
        %2526 = vmatprep.subr.bf16.mxu0 0
        %2527 = vmatpush1.bf16.xpose.msra.mxu0 0
        %2528 = vmatprep.subr.bf16.mxu0 0
        %2529 = vmatpush1.bf16.xpose.msra.mxu0 0
        %2530 = vmatprep.subr.bf16.mxu0 0
        %2531 = vmatpush1.bf16.xpose.msra.mxu0 0
        %2532 = vmatprep.subr.bf16.mxu0 0
        %2533 = vmatpush1.bf16.xpose.msra.mxu0 0
        %2534 = vmatprep.subr.bf16.mxu0 0
        %2535 = vmatpush1.bf16.xpose.msra.mxu0 %v2518
        %2536 = vmatprep.subr.bf16.mxu0 0
        %2537 = vmatpush2.bf16.xpose.msra.mxu0 0
        %2538 = vmatprep.subr.bf16.mxu0 0
        %2539 = vmatpush2.bf16.xpose.msra.mxu0 0
        %2540 = vmatprep.subr.bf16.mxu0 0
        %2541 = vmatpush2.bf16.xpose.msra.mxu0 0
        %2542 = vmatprep.subr.bf16.mxu0 0
        %2543 = vmatpush2.bf16.xpose.msra.mxu0 0
        %2544 = vmatprep.subr.bf16.mxu0 0
        %2545 = vmatpush2.bf16.xpose.msra.mxu0 0
        %2546 = vmatprep.subr.bf16.mxu0 0
        %2547 = vmatpush2.bf16.xpose.msra.mxu0 0
        %2548 = vmatprep.subr.bf16.mxu0 0
        %2549 = vmatpush2.bf16.xpose.msra.mxu0 0
        %2550 = vmatprep.subr.bf16.mxu0 0
        %2551 = vmatpush2.bf16.xpose.msra.mxu0 0
        %2552 = vmatprep.mubr.bf16.mxu0 0
        %2553 = vmatmul.mubr.bf16.gmra.mxu0 %v2515
        %v2554 = vpop.f32.mrf.mxu0
        %v2555 = vadd.f32 0.0, %v2554
        %v2556 = vpop.f32.mrf.mxu0
        %v2557 = vpop.f32.mrf.mxu0
        %v2558 = vpop.f32.mrf.mxu0
        %2559 = vdwg.mxu0
        %2560 = vrot.lane.b32.xlu0 %v1060, 32
        %v2561 = vpop.permute.xlu0 %2560
        %2562 = vrot.lane.b32.xlu0 %v1064, 32
        %v2563 = vpop.permute.xlu0 %2562
        %v2565 = vsel %vm1070, %v2561, 0
        %v2568 = vsel %vm1070, %v2563, 0
        %2570 = vmatprep.subr.bf16.mxu0 0
        %2571 = vmatpush1.bf16.xpose.msra.mxu0 0
        %2572 = vmatprep.subr.bf16.mxu0 0
        %2573 = vmatpush1.bf16.xpose.msra.mxu0 0
        %2574 = vmatprep.subr.bf16.mxu0 0
        %2575 = vmatpush1.bf16.xpose.msra.mxu0 0
        %2576 = vmatprep.subr.bf16.mxu0 0
        %2577 = vmatpush1.bf16.xpose.msra.mxu0 0
        %2578 = vmatprep.subr.bf16.mxu0 0
        %2579 = vmatpush1.bf16.xpose.msra.mxu0 0
        %2580 = vmatprep.subr.bf16.mxu0 0
        %2581 = vmatpush1.bf16.xpose.msra.mxu0 0
        %2582 = vmatprep.subr.bf16.mxu0 0
        %2583 = vmatpush1.bf16.xpose.msra.mxu0 0
        %2584 = vmatprep.subr.bf16.mxu0 0
        %2585 = vmatpush1.bf16.xpose.msra.mxu0 %v2568
        %2586 = vmatprep.subr.bf16.mxu0 0
        %2587 = vmatpush2.bf16.xpose.msra.mxu0 0
        %2588 = vmatprep.subr.bf16.mxu0 0
        %2589 = vmatpush2.bf16.xpose.msra.mxu0 0
        %2590 = vmatprep.subr.bf16.mxu0 0
        %2591 = vmatpush2.bf16.xpose.msra.mxu0 0
        %2592 = vmatprep.subr.bf16.mxu0 0
        %2593 = vmatpush2.bf16.xpose.msra.mxu0 0
        %2594 = vmatprep.subr.bf16.mxu0 0
        %2595 = vmatpush2.bf16.xpose.msra.mxu0 0
        %2596 = vmatprep.subr.bf16.mxu0 0
        %2597 = vmatpush2.bf16.xpose.msra.mxu0 0
        %2598 = vmatprep.subr.bf16.mxu0 0
        %2599 = vmatpush2.bf16.xpose.msra.mxu0 0
        %2600 = vmatprep.subr.bf16.mxu0 0
        %2601 = vmatpush2.bf16.xpose.msra.mxu0 0
        %2602 = vmatprep.mubr.bf16.mxu0 0
        %2603 = vmatmul.mubr.bf16.gmra.mxu0 %v2565
        %v2604 = vpop.f32.mrf.mxu0
        %v2605 = vadd.f32 0.0, %v2604
        %v2606 = vpop.f32.mrf.mxu0
        %v2607 = vpop.f32.mrf.mxu0
        %v2608 = vpop.f32.mrf.mxu0
        %2609 = vdwg.mxu0
        %2610 = vrot.lane.b32.xlu0 %v1061, 32
        %v2611 = vpop.permute.xlu0 %2610
        %2612 = vrot.lane.b32.xlu0 %v1065, 32
        %v2613 = vpop.permute.xlu0 %2612
        %v2615 = vsel %vm1070, %v2611, 0
        %v2618 = vsel %vm1070, %v2613, 0
        %2620 = vmatprep.subr.bf16.mxu0 0
        %2621 = vmatpush1.bf16.xpose.msra.mxu0 0
        %2622 = vmatprep.subr.bf16.mxu0 0
        %2623 = vmatpush1.bf16.xpose.msra.mxu0 0
        %2624 = vmatprep.subr.bf16.mxu0 0
        %2625 = vmatpush1.bf16.xpose.msra.mxu0 0
        %2626 = vmatprep.subr.bf16.mxu0 0
        %2627 = vmatpush1.bf16.xpose.msra.mxu0 0
        %2628 = vmatprep.subr.bf16.mxu0 0
        %2629 = vmatpush1.bf16.xpose.msra.mxu0 0
        %2630 = vmatprep.subr.bf16.mxu0 0
        %2631 = vmatpush1.bf16.xpose.msra.mxu0 0
        %2632 = vmatprep.subr.bf16.mxu0 0
        %2633 = vmatpush1.bf16.xpose.msra.mxu0 0
        %2634 = vmatprep.subr.bf16.mxu0 0
        %2635 = vmatpush1.bf16.xpose.msra.mxu0 %v2618
        %2636 = vmatprep.subr.bf16.mxu0 0
        %2637 = vmatpush2.bf16.xpose.msra.mxu0 0
        %2638 = vmatprep.subr.bf16.mxu0 0
        %2639 = vmatpush2.bf16.xpose.msra.mxu0 0
        %2640 = vmatprep.subr.bf16.mxu0 0
        %2641 = vmatpush2.bf16.xpose.msra.mxu0 0
        %2642 = vmatprep.subr.bf16.mxu0 0
        %2643 = vmatpush2.bf16.xpose.msra.mxu0 0
        %2644 = vmatprep.subr.bf16.mxu0 0
        %2645 = vmatpush2.bf16.xpose.msra.mxu0 0
        %2646 = vmatprep.subr.bf16.mxu0 0
        %2647 = vmatpush2.bf16.xpose.msra.mxu0 0
        %2648 = vmatprep.subr.bf16.mxu0 0
        %2649 = vmatpush2.bf16.xpose.msra.mxu0 0
        %2650 = vmatprep.subr.bf16.mxu0 0
        %2651 = vmatpush2.bf16.xpose.msra.mxu0 0
        %2652 = vmatprep.mubr.bf16.mxu0 0
        %2653 = vmatmul.mubr.bf16.gmra.mxu0 %v2615
        %v2654 = vpop.f32.mrf.mxu0
        %v2655 = vadd.f32 0.0, %v2654
        %v2656 = vpop.f32.mrf.mxu0
        %v2657 = vpop.f32.mrf.mxu0
        %v2658 = vpop.f32.mrf.mxu0
        %2659 = vdwg.mxu0
        %v2660 = vsel %vm1255, %v2505, -inf
        %2661 = vmax.xlane.f32.xlu0 %v2660
        %v2662 = vpop.xlane.xlu0 %2661
        %v2663 = vsel %vm1255, %v2555, -inf
        %2664 = vmax.xlane.f32.xlu0 %v2663
        %v2665 = vpop.xlane.xlu0 %2664
        %v2666 = vsel %vm1255, %v2605, -inf
        %2667 = vmax.xlane.f32.xlu0 %v2666
        %v2668 = vpop.xlane.xlu0 %2667
        %v2669 = vsel %vm1255, %v2655, -inf
        %2670 = vmax.xlane.f32.xlu0 %v2669
        %v2671 = vpop.xlane.xlu0 %2670
        %v2672 = vsub.f32 %v2505, %v2662
        %v2673 = vsub.f32 %v2555, %v2665
        %v2674 = vsub.f32 %v2605, %v2668
        %v2675 = vsub.f32 %v2655, %v2671
        %v2676 = vmul.f32 %v2672, 1.442695
        %v2677 = vpow.pop %v2676
        %v2678 = vmul.f32 %v2673, 1.442695
        %v2679 = vpow.pop %v2678
        %v2680 = vmul.f32 %v2674, 1.442695
        %v2681 = vpow.pop %v2680
        %v2682 = vmul.f32 %v2675, 1.442695
        %v2683 = vpow.pop %v2682
        %v2684 = vsel %vm1255, %v2677, 0.0
        %2685 = vadd.xlane.f32.xlu0 %v2684
        %v2686 = vpop.xlane.xlu0 %2685
        %v2687 = vsel %vm1255, %v2679, 0.0
        %2688 = vadd.xlane.f32.xlu0 %v2687
        %v2689 = vpop.xlane.xlu0 %2688
        %v2690 = vsel %vm1255, %v2681, 0.0
        %2691 = vadd.xlane.f32.xlu0 %v2690
        %v2692 = vpop.xlane.xlu0 %2691
        %v2693 = vsel %vm1255, %v2683, 0.0
        %2694 = vadd.xlane.f32.xlu0 %v2693
        %v2695 = vpop.xlane.xlu0 %2694
        %v2696 = vrcp.pop %v2686
        %v2697 = vrcp.pop %v2689
        %v2698 = vrcp.pop %v2692
        %v2699 = vrcp.pop %v2695
        %v2700 = vmul.f32 %v2677, %v2696
        %v2701 = vmul.f32 %v2679, %v2697
        %v2702 = vmul.f32 %v2681, %v2698
        %v2703 = vmul.f32 %v2683, %v2699
        %v2704 = vpack.c.bf16 %v2700, %v2700
        %v2705 = vpack.c.bf16 %v2701, %v2701
        %v2706 = vpack.c.bf16 %v2702, %v2702
        %v2707 = vpack.c.bf16 %v2703, %v2703
        %2708 = vrot.lane.b32.xlu0 %v1066, 32
        %v2709 = vpop.permute.xlu0 %2708
        %v2711 = vsel %vm1255, %v2704, 0
        %v2714 = vsel %vm1307, %v2709, 0
        %2716 = vmatprep.subr.bf16.mxu0 0
        %2717 = vmatpush1.bf16.msra.mxu0 0
        %2718 = vmatprep.subr.bf16.mxu0 0
        %2719 = vmatpush1.bf16.msra.mxu0 0
        %2720 = vmatprep.subr.bf16.mxu0 0
        %2721 = vmatpush1.bf16.msra.mxu0 0
        %2722 = vmatprep.subr.bf16.mxu0 0
        %2723 = vmatpush1.bf16.msra.mxu0 0
        %2724 = vmatprep.subr.bf16.mxu0 0
        %2725 = vmatpush1.bf16.msra.mxu0 0
        %2726 = vmatprep.subr.bf16.mxu0 0
        %2727 = vmatpush1.bf16.msra.mxu0 0
        %2728 = vmatprep.subr.bf16.mxu0 0
        %2729 = vmatpush1.bf16.msra.mxu0 0
        %2730 = vmatprep.subr.bf16.mxu0 0
        %2731 = vmatpush1.bf16.msra.mxu0 %v2714
        %2732 = vmatprep.subr.bf16.mxu0 0
        %2733 = vmatpush2.bf16.msra.mxu0 0
        %2734 = vmatprep.subr.bf16.mxu0 0
        %2735 = vmatpush2.bf16.msra.mxu0 0
        %2736 = vmatprep.subr.bf16.mxu0 0
        %2737 = vmatpush2.bf16.msra.mxu0 0
        %2738 = vmatprep.subr.bf16.mxu0 0
        %2739 = vmatpush2.bf16.msra.mxu0 0
        %2740 = vmatprep.subr.bf16.mxu0 0
        %2741 = vmatpush2.bf16.msra.mxu0 0
        %2742 = vmatprep.subr.bf16.mxu0 0
        %2743 = vmatpush2.bf16.msra.mxu0 0
        %2744 = vmatprep.subr.bf16.mxu0 0
        %2745 = vmatpush2.bf16.msra.mxu0 0
        %2746 = vmatprep.subr.bf16.mxu0 0
        %2747 = vmatpush2.bf16.msra.mxu0 0
        %2748 = vmatprep.mubr.bf16.mxu0 0
        %2749 = vmatmul.mubr.bf16.gmra.mxu0 %v2711
        %v2750 = vpop.f32.mrf.mxu0
        %v2751 = vadd.f32 0.0, %v2750
        %v2752 = vpop.f32.mrf.mxu0
        %v2753 = vpop.f32.mrf.mxu0
        %v2754 = vpop.f32.mrf.mxu0
        %2755 = vdwg.mxu0
        %2756 = vrot.lane.b32.xlu0 %v1067, 32
        %v2757 = vpop.permute.xlu0 %2756
        %v2759 = vsel %vm1255, %v2705, 0
        %v2762 = vsel %vm1307, %v2757, 0
        %2764 = vmatprep.subr.bf16.mxu0 0
        %2765 = vmatpush1.bf16.msra.mxu0 0
        %2766 = vmatprep.subr.bf16.mxu0 0
        %2767 = vmatpush1.bf16.msra.mxu0 0
        %2768 = vmatprep.subr.bf16.mxu0 0
        %2769 = vmatpush1.bf16.msra.mxu0 0
        %2770 = vmatprep.subr.bf16.mxu0 0
        %2771 = vmatpush1.bf16.msra.mxu0 0
        %2772 = vmatprep.subr.bf16.mxu0 0
        %2773 = vmatpush1.bf16.msra.mxu0 0
        %2774 = vmatprep.subr.bf16.mxu0 0
        %2775 = vmatpush1.bf16.msra.mxu0 0
        %2776 = vmatprep.subr.bf16.mxu0 0
        %2777 = vmatpush1.bf16.msra.mxu0 0
        %2778 = vmatprep.subr.bf16.mxu0 0
        %2779 = vmatpush1.bf16.msra.mxu0 %v2762
        %2780 = vmatprep.subr.bf16.mxu0 0
        %2781 = vmatpush2.bf16.msra.mxu0 0
        %2782 = vmatprep.subr.bf16.mxu0 0
        %2783 = vmatpush2.bf16.msra.mxu0 0
        %2784 = vmatprep.subr.bf16.mxu0 0
        %2785 = vmatpush2.bf16.msra.mxu0 0
        %2786 = vmatprep.subr.bf16.mxu0 0
        %2787 = vmatpush2.bf16.msra.mxu0 0
        %2788 = vmatprep.subr.bf16.mxu0 0
        %2789 = vmatpush2.bf16.msra.mxu0 0
        %2790 = vmatprep.subr.bf16.mxu0 0
        %2791 = vmatpush2.bf16.msra.mxu0 0
        %2792 = vmatprep.subr.bf16.mxu0 0
        %2793 = vmatpush2.bf16.msra.mxu0 0
        %2794 = vmatprep.subr.bf16.mxu0 0
        %2795 = vmatpush2.bf16.msra.mxu0 0
        %2796 = vmatprep.mubr.bf16.mxu0 0
        %2797 = vmatmul.mubr.bf16.gmra.mxu0 %v2759
        %v2798 = vpop.f32.mrf.mxu0
        %v2799 = vadd.f32 0.0, %v2798
        %v2800 = vpop.f32.mrf.mxu0
        %v2801 = vpop.f32.mrf.mxu0
        %v2802 = vpop.f32.mrf.mxu0
        %2803 = vdwg.mxu0
        %2804 = vrot.lane.b32.xlu0 %v1068, 32
        %v2805 = vpop.permute.xlu0 %2804
        %v2807 = vsel %vm1255, %v2706, 0
        %v2810 = vsel %vm1307, %v2805, 0
        %2812 = vmatprep.subr.bf16.mxu0 0
        %2813 = vmatpush1.bf16.msra.mxu0 0
        %2814 = vmatprep.subr.bf16.mxu0 0
        %2815 = vmatpush1.bf16.msra.mxu0 0
        %2816 = vmatprep.subr.bf16.mxu0 0
        %2817 = vmatpush1.bf16.msra.mxu0 0
        %2818 = vmatprep.subr.bf16.mxu0 0
        %2819 = vmatpush1.bf16.msra.mxu0 0
        %2820 = vmatprep.subr.bf16.mxu0 0
        %2821 = vmatpush1.bf16.msra.mxu0 0
        %2822 = vmatprep.subr.bf16.mxu0 0
        %2823 = vmatpush1.bf16.msra.mxu0 0
        %2824 = vmatprep.subr.bf16.mxu0 0
        %2825 = vmatpush1.bf16.msra.mxu0 0
        %2826 = vmatprep.subr.bf16.mxu0 0
        %2827 = vmatpush1.bf16.msra.mxu0 %v2810
        %2828 = vmatprep.subr.bf16.mxu0 0
        %2829 = vmatpush2.bf16.msra.mxu0 0
        %2830 = vmatprep.subr.bf16.mxu0 0
        %2831 = vmatpush2.bf16.msra.mxu0 0
        %2832 = vmatprep.subr.bf16.mxu0 0
        %2833 = vmatpush2.bf16.msra.mxu0 0
        %2834 = vmatprep.subr.bf16.mxu0 0
        %2835 = vmatpush2.bf16.msra.mxu0 0
        %2836 = vmatprep.subr.bf16.mxu0 0
        %2837 = vmatpush2.bf16.msra.mxu0 0
        %2838 = vmatprep.subr.bf16.mxu0 0
        %2839 = vmatpush2.bf16.msra.mxu0 0
        %2840 = vmatprep.subr.bf16.mxu0 0
        %2841 = vmatpush2.bf16.msra.mxu0 0
        %2842 = vmatprep.subr.bf16.mxu0 0
        %2843 = vmatpush2.bf16.msra.mxu0 0
        %2844 = vmatprep.mubr.bf16.mxu0 0
        %2845 = vmatmul.mubr.bf16.gmra.mxu0 %v2807
        %v2846 = vpop.f32.mrf.mxu0
        %v2847 = vadd.f32 0.0, %v2846
        %v2848 = vpop.f32.mrf.mxu0
        %v2849 = vpop.f32.mrf.mxu0
        %v2850 = vpop.f32.mrf.mxu0
        %2851 = vdwg.mxu0
        %2852 = vrot.lane.b32.xlu0 %v1069, 32
        %v2853 = vpop.permute.xlu0 %2852
        %v2855 = vsel %vm1255, %v2707, 0
        %v2858 = vsel %vm1307, %v2853, 0
        %2860 = vmatprep.subr.bf16.mxu0 0
        %2861 = vmatpush1.bf16.msra.mxu0 0
        %2862 = vmatprep.subr.bf16.mxu0 0
        %2863 = vmatpush1.bf16.msra.mxu0 0
        %2864 = vmatprep.subr.bf16.mxu0 0
        %2865 = vmatpush1.bf16.msra.mxu0 0
        %2866 = vmatprep.subr.bf16.mxu0 0
        %2867 = vmatpush1.bf16.msra.mxu0 0
        %2868 = vmatprep.subr.bf16.mxu0 0
        %2869 = vmatpush1.bf16.msra.mxu0 0
        %2870 = vmatprep.subr.bf16.mxu0 0
        %2871 = vmatpush1.bf16.msra.mxu0 0
        %2872 = vmatprep.subr.bf16.mxu0 0
        %2873 = vmatpush1.bf16.msra.mxu0 0
        %2874 = vmatprep.subr.bf16.mxu0 0
        %2875 = vmatpush1.bf16.msra.mxu0 %v2858
        %2876 = vmatprep.subr.bf16.mxu0 0
        %2877 = vmatpush2.bf16.msra.mxu0 0
        %2878 = vmatprep.subr.bf16.mxu0 0
        %2879 = vmatpush2.bf16.msra.mxu0 0
        %2880 = vmatprep.subr.bf16.mxu0 0
        %2881 = vmatpush2.bf16.msra.mxu0 0
        %2882 = vmatprep.subr.bf16.mxu0 0
        %2883 = vmatpush2.bf16.msra.mxu0 0
        %2884 = vmatprep.subr.bf16.mxu0 0
        %2885 = vmatpush2.bf16.msra.mxu0 0
        %2886 = vmatprep.subr.bf16.mxu0 0
        %2887 = vmatpush2.bf16.msra.mxu0 0
        %2888 = vmatprep.subr.bf16.mxu0 0
        %2889 = vmatpush2.bf16.msra.mxu0 0
        %2890 = vmatprep.subr.bf16.mxu0 0
        %2891 = vmatpush2.bf16.msra.mxu0 0
        %2892 = vmatprep.mubr.bf16.mxu0 0
        %2893 = vmatmul.mubr.bf16.gmra.mxu0 %v2855
        %v2894 = vpop.f32.mrf.mxu0
        %v2895 = vadd.f32 0.0, %v2894
        %v2896 = vpop.f32.mrf.mxu0
        %v2897 = vpop.f32.mrf.mxu0
        %v2898 = vpop.f32.mrf.mxu0
        %2899 = vdwg.mxu0
        %v2900 = vpack.c.bf16 %v2799, %v2751
        %v2901 = vpack.c.bf16 %v2895, %v2847
        %v2904 = vunpack.c.l.b16 %v2900
        %v2905 = vunpack.c.h.b16 %v2900
        %v2906 = vunpack.c.l.b16 %v2901
        %v2907 = vunpack.c.h.b16 %v2901
        %v2908 = vpack.c.b16 %v2904, %v2904
        %v2909 = vpack.c.b16 %v2905, %v2905
        %v2910 = vpack.c.b16 %v2906, %v2906
        %v2911 = vpack.c.b16 %v2907, %v2907
        %2912 = vrot.lane.b32.xlu0 %v2908, 96
        %v2913 = vpop.permute.xlu0 %2912
        %2914 = vrot.lane.b32.xlu0 %v2909, 96
        %v2915 = vpop.permute.xlu0 %2914
        %2916 = vrot.lane.b32.xlu0 %v2910, 96
        %v2917 = vpop.permute.xlu0 %2916
        %2918 = vrot.lane.b32.xlu0 %v2911, 96
        %v2919 = vpop.permute.xlu0 %2918
        %vm2924 = vcmask 1044224
        %2925 = vst.msk [vmem:[#allocation2] sm:$0xf] %vm2924, %v2913
        %2926 = vst.msk [vmem:[#allocation2 + $0x4] sm:$0xf] %vm2924, %v2915
        %2927 = vst.msk [vmem:[#allocation2 + $0x8] sm:$0xf] %vm2924, %v2917
        %2928 = vst.msk [vmem:[#allocation2 + $0xc] sm:$0xf] %vm2924, %v2919
        %v2929 = vld [vmem:[#allocation2] sm:$0xf]
        %v2930 = vld [vmem:[#allocation2 + $0x4] sm:$0xf]
        %v2931 = vld [vmem:[#allocation2 + $0x8] sm:$0xf]
        %v2932 = vld [vmem:[#allocation2 + $0xc] sm:$0xf]
        %v2933 = vld [vmem:[%s516] sm:$0xf]
        %v2934 = vld [vmem:[%s516 + $0x4] sm:$0xf]
        %v2935 = vld [vmem:[%s516 + $0x8] sm:$0xf]
        %v2936 = vld [vmem:[%s516 + $0xc] sm:$0xf]
        %v2937 = vld [vmem:[%s516 + $0x10] sm:$0xf]
        %v2938 = vld [vmem:[%s516 + $0x14] sm:$0xf]
        %v2939 = vld [vmem:[%s516 + $0x18] sm:$0xf]
        %v2940 = vld [vmem:[%s516 + $0x1c] sm:$0xf]
        %v2941 = vld [vmem:[%s516 + $0x20] sm:$0xf]
        %v2942 = vld [vmem:[%s516 + $0x24] sm:$0xf]
        %v2943 = vld [vmem:[%s516 + $0x28] sm:$0xf]
        %v2944 = vld [vmem:[%s516 + $0x2c] sm:$0xf]
        %v2945 = vld [vmem:[%s516 + $0x30] sm:$0xf]
        %v2946 = vld [vmem:[%s516 + $0x34] sm:$0xf]
        %v2947 = vld [vmem:[%s516 + $0x38] sm:$0xf]
        %v2948 = vld [vmem:[%s516 + $0x3c] sm:$0xf]
        %v2953 = vunpack.c.l.b16 %v2929
        %v2954 = vunpack.c.l.b16 %v2930
        %v2955 = vunpack.c.l.b16 %v2931
        %v2956 = vunpack.c.l.b16 %v2932
        %v2957 = vpack.c.b16 %v2954, %v2953
        %v2958 = vpack.c.b16 %v2956, %v2955
        %v2977 = vunpack.c.l.b16 %v2933
        %v2978 = vunpack.c.l.b16 %v2934
        %v2979 = vunpack.c.l.b16 %v2935
        %v2980 = vunpack.c.l.b16 %v2936
        %v2981 = vunpack.c.l.b16 %v2937
        %v2982 = vunpack.c.l.b16 %v2938
        %v2983 = vunpack.c.l.b16 %v2939
        %v2984 = vunpack.c.l.b16 %v2940
        %v2985 = vunpack.c.l.b16 %v2941
        %v2986 = vunpack.c.l.b16 %v2942
        %v2987 = vunpack.c.l.b16 %v2943
        %v2988 = vunpack.c.l.b16 %v2944
        %v2989 = vunpack.c.l.b16 %v2945
        %v2990 = vunpack.c.l.b16 %v2946
        %v2991 = vunpack.c.l.b16 %v2947
        %v2992 = vunpack.c.l.b16 %v2948
        %v2993 = vpack.c.b16 %v2978, %v2977
        %v2994 = vpack.c.b16 %v2980, %v2979
        %v2995 = vpack.c.b16 %v2982, %v2981
        %v2996 = vpack.c.b16 %v2984, %v2983
        %v2997 = vpack.c.b16 %v2986, %v2985
        %v2998 = vpack.c.b16 %v2988, %v2987
        %v2999 = vpack.c.b16 %v2990, %v2989
        %v3000 = vpack.c.b16 %v2992, %v2991
        %3009 = vmatprep.subr.bf16.mxu0 0
        %3010 = vmatpush1.bf16.msra.mxu0 %v3000
        %3011 = vmatprep.subr.bf16.mxu0 0
        %3012 = vmatpush1.bf16.msra.mxu0 %v2999
        %3013 = vmatprep.subr.bf16.mxu0 0
        %3014 = vmatpush1.bf16.msra.mxu0 %v2998
        %3015 = vmatprep.subr.bf16.mxu0 0
        %3016 = vmatpush1.bf16.msra.mxu0 %v2997
        %3017 = vmatprep.subr.bf16.mxu0 0
        %3018 = vmatpush1.bf16.msra.mxu0 %v2996
        %3019 = vmatprep.subr.bf16.mxu0 0
        %3020 = vmatpush1.bf16.msra.mxu0 %v2995
        %3021 = vmatprep.subr.bf16.mxu0 0
        %3022 = vmatpush1.bf16.msra.mxu0 %v2994
        %3023 = vmatprep.subr.bf16.mxu0 0
        %3024 = vmatpush1.bf16.msra.mxu0 %v2993
        %3025 = vmatprep.subr.bf16.mxu0 0
        %3026 = vmatpush2.bf16.msra.mxu0 0
        %3027 = vmatprep.subr.bf16.mxu0 0
        %3028 = vmatpush2.bf16.msra.mxu0 0
        %3029 = vmatprep.subr.bf16.mxu0 0
        %3030 = vmatpush2.bf16.msra.mxu0 0
        %3031 = vmatprep.subr.bf16.mxu0 0
        %3032 = vmatpush2.bf16.msra.mxu0 0
        %3033 = vmatprep.subr.bf16.mxu0 0
        %3034 = vmatpush2.bf16.msra.mxu0 0
        %3035 = vmatprep.subr.bf16.mxu0 0
        %3036 = vmatpush2.bf16.msra.mxu0 0
        %3037 = vmatprep.subr.bf16.mxu0 0
        %3038 = vmatpush2.bf16.msra.mxu0 0
        %3039 = vmatprep.subr.bf16.mxu0 0
        %3040 = vmatpush2.bf16.msra.mxu0 0
        %3041 = vmatprep.mubr.bf16.mxu0 0
        %3042 = vmatmul.mubr.bf16.gmra.mxu0 %v2957
        %v3043 = vpop.f32.mrf.mxu0
        %v3044 = vadd.f32 0.0, %v3043
        %v3045 = vpop.f32.mrf.mxu0
        %v3046 = vpop.f32.mrf.mxu0
        %v3047 = vadd.f32 0.0, %v3046
        %v3048 = vpop.f32.mrf.mxu0
        %3049 = vmatprep.mubr.bf16.mxu0 0
        %3050 = vmatmul.mubr.bf16.gmra.mxu0 %v2958
        %v3051 = vpop.f32.mrf.mxu0
        %v3052 = vadd.f32 0.0, %v3051
        %v3053 = vpop.f32.mrf.mxu0
        %v3054 = vpop.f32.mrf.mxu0
        %v3055 = vadd.f32 0.0, %v3054
        %v3056 = vpop.f32.mrf.mxu0
        %3057 = vdwg.mxu0
        %v3058 = vadd.f32 %v622, %v3044
        %v3059 = vadd.f32 %v623, %v3047
        %v3060 = vadd.f32 %v624, %v3052
        %v3061 = vadd.f32 %v625, %v3055
        %v3062 = vlaneseq
        %v3063 = vshrl.u32 %v3062, 7
        %v3064 = vsub.s32 5, %v3063
        %v3065 = vrot.slane %v626, %v3064
        %v3066 = vadd.f32 %v3058, %v3065
        %v3067 = vadd.f32 %v3059, %v3065
        %v3068 = vadd.f32 %v3060, %v3065
        %v3069 = vadd.f32 %v3061, %v3065
        %3070 = vadd.xlane.f32.xlu0 %v3066
        %v3071 = vpop.xlane.xlu0 %3070
        %3072 = vadd.xlane.f32.xlu0 %v3067
        %v3073 = vpop.xlane.xlu0 %3072
        %3074 = vadd.xlane.f32.xlu0 %v3068
        %v3075 = vpop.xlane.xlu0 %3074
        %3076 = vadd.xlane.f32.xlu0 %v3069
        %v3077 = vpop.xlane.xlu0 %3076
        %v3078 = vmul.f32 %v3071, %v636
        %v3079 = vmul.f32 %v3073, %v636
        %v3080 = vmul.f32 %v3075, %v636
        %v3081 = vmul.f32 %v3077, %v636
        %v3082 = vmul.f32 %v3066, %v3066
        %v3083 = vmul.f32 %v3067, %v3067
        %v3084 = vmul.f32 %v3068, %v3068
        %v3085 = vmul.f32 %v3069, %v3069
        %3086 = vadd.xlane.f32.xlu0 %v3082
        %v3087 = vpop.xlane.xlu0 %3086
        %3088 = vadd.xlane.f32.xlu0 %v3083
        %v3089 = vpop.xlane.xlu0 %3088
        %3090 = vadd.xlane.f32.xlu0 %v3084
        %v3091 = vpop.xlane.xlu0 %3090
        %3092 = vadd.xlane.f32.xlu0 %v3085
        %v3093 = vpop.xlane.xlu0 %3092
        %v3094 = vmul.f32 %v3087, %v636
        %v3095 = vmul.f32 %v3089, %v636
        %v3096 = vmul.f32 %v3091, %v636
        %v3097 = vmul.f32 %v3093, %v636
        %v3098 = vmul.f32 %v3078, %v3078
        %v3099 = vmul.f32 %v3079, %v3079
        %v3100 = vmul.f32 %v3080, %v3080
        %v3101 = vmul.f32 %v3081, %v3081
        %v3102 = vsub.f32 %v3094, %v3098
        %v3103 = vsub.f32 %v3095, %v3099
        %v3104 = vsub.f32 %v3096, %v3100
        %v3105 = vsub.f32 %v3097, %v3101
        %v3106 = vmax.f32 %v3102, 0.0
        %v3107 = vmax.f32 %v3103, 0.0
        %v3108 = vmax.f32 %v3104, 0.0
        %v3109 = vmax.f32 %v3105, 0.0
        %v3110 = vsub.f32 %v3066, %v3078
        %v3111 = vsub.f32 %v3067, %v3079
        %v3112 = vsub.f32 %v3068, %v3080
        %v3113 = vsub.f32 %v3069, %v3081
        %v3114 = vadd.f32 %v3106, 1e-05
        %v3115 = vadd.f32 %v3107, 1e-05
        %v3116 = vadd.f32 %v3108, 1e-05
        %v3117 = vadd.f32 %v3109, 1e-05
        %v3118 = vrsqrt.pop %v3114
        %v3119 = vrsqrt.pop %v3115
        %v3120 = vrsqrt.pop %v3116
        %v3121 = vrsqrt.pop %v3117
        %v3122 = vmul.f32 %v3110, %v3118
        %v3123 = vmul.f32 %v3111, %v3119
        %v3124 = vmul.f32 %v3112, %v3120
        %v3125 = vmul.f32 %v3113, %v3121
        %v3126 = vlaneseq
        %v3127 = vshrl.u32 %v3126, 7
        %v3128 = vsub.s32 6, %v3127
        %v3129 = vrot.slane %v626, %v3128
        %v3130 = vmul.f32 %v3122, %v3129
        %v3131 = vmul.f32 %v3123, %v3129
        %v3132 = vmul.f32 %v3124, %v3129
        %v3133 = vmul.f32 %v3125, %v3129
        %v3134 = vlaneseq
        %v3135 = vshrl.u32 %v3134, 7
        %v3136 = vsub.s32 7, %v3135
        %v3137 = vrot.slane %v626, %v3136
        %v3138 = vadd.f32 %v3130, %v3137
        %v3139 = vadd.f32 %v3131, %v3137
        %v3140 = vadd.f32 %v3132, %v3137
        %v3141 = vadd.f32 %v3133, %v3137
        %v3142 = vpack.c.bf16 %v3139, %v3138
        %v3143 = vpack.c.bf16 %v3141, %v3140
        %v3144 = vld [vmem:[%s525] sm:$0xff]
        %v3145 = vld [vmem:[%s525 + $0x8] sm:$0xff]
        %v3146 = vld [vmem:[%s525 + $0x10] sm:$0xff]
        %v3147 = vld [vmem:[%s525 + $0x18] sm:$0xff]
        %v3148 = vld [vmem:[%s525 + $0x20] sm:$0xff]
        %v3149 = vld [vmem:[%s525 + $0x28] sm:$0xff]
        %v3150 = vld [vmem:[%s525 + $0x30] sm:$0xff]
        %v3151 = vld [vmem:[%s525 + $0x38] sm:$0xff]
        %v3152 = vld [vmem:[%s525 + $0x40] sm:$0xff]
        %v3153 = vld [vmem:[%s525 + $0x48] sm:$0xff]
        %v3154 = vld [vmem:[%s525 + $0x50] sm:$0xff]
        %v3155 = vld [vmem:[%s525 + $0x58] sm:$0xff]
        %v3156 = vld [vmem:[%s525 + $0x60] sm:$0xff]
        %v3157 = vld [vmem:[%s525 + $0x68] sm:$0xff]
        %v3158 = vld [vmem:[%s525 + $0x70] sm:$0xff]
        %v3159 = vld [vmem:[%s525 + $0x78] sm:$0xff]
        %v3160 = vld [vmem:[%s525 + $0x80] sm:$0xff]
        %v3161 = vld [vmem:[%s525 + $0x88] sm:$0xff]
        %v3162 = vld [vmem:[%s525 + $0x90] sm:$0xff]
        %v3163 = vld [vmem:[%s525 + $0x98] sm:$0xff]
        %v3164 = vld [vmem:[%s525 + $0xa0] sm:$0xff]
        %v3165 = vld [vmem:[%s525 + $0xa8] sm:$0xff]
        %v3166 = vld [vmem:[%s525 + $0xb0] sm:$0xff]
        %v3167 = vld [vmem:[%s525 + $0xb8] sm:$0xff]
        %v3168 = vld [vmem:[%s525 + $0xc0] sm:$0xff]
        %v3169 = vld [vmem:[%s525 + $0xc8] sm:$0xff]
        %v3170 = vld [vmem:[%s525 + $0xd0] sm:$0xff]
        %v3171 = vld [vmem:[%s525 + $0xd8] sm:$0xff]
        %v3172 = vld [vmem:[%s525 + $0xe0] sm:$0xff]
        %v3173 = vld [vmem:[%s525 + $0xe8] sm:$0xff]
        %v3174 = vld [vmem:[%s525 + $0xf0] sm:$0xff]
        %v3175 = vld [vmem:[%s525 + $0xf8] sm:$0xff]
        %v3176 = vld [vmem:[%s607] sm:$0xf]
        %v3178 = vlaneseq
        %v3179 = vshrl.u32 %v3178, 7
        %v3180 = vsub.s32 0, %v3179
        %v3181 = vrot.slane %v3176, %v3180
        %v3182 = vlaneseq
        %v3183 = vshrl.u32 %v3182, 7
        %v3184 = vsub.s32 1, %v3183
        %v3185 = vrot.slane %v3176, %v3184
        %v3186 = vlaneseq
        %v3187 = vshrl.u32 %v3186, 7
        %v3188 = vsub.s32 2, %v3187
        %v3189 = vrot.slane %v3176, %v3188
        %v3190 = vlaneseq
        %v3191 = vshrl.u32 %v3190, 7
        %v3192 = vsub.s32 3, %v3191
        %v3193 = vrot.slane %v3176, %v3192
        %v3230 = vunpack.c.l.b16 %v3144
        %v3231 = vunpack.c.h.b16 %v3144
        %v3232 = vunpack.c.l.b16 %v3145
        %v3233 = vunpack.c.h.b16 %v3145
        %v3234 = vunpack.c.l.b16 %v3146
        %v3235 = vunpack.c.h.b16 %v3146
        %v3236 = vunpack.c.l.b16 %v3147
        %v3237 = vunpack.c.h.b16 %v3147
        %v3238 = vunpack.c.l.b16 %v3148
        %v3239 = vunpack.c.h.b16 %v3148
        %v3240 = vunpack.c.l.b16 %v3149
        %v3241 = vunpack.c.h.b16 %v3149
        %v3242 = vunpack.c.l.b16 %v3150
        %v3243 = vunpack.c.h.b16 %v3150
        %v3244 = vunpack.c.l.b16 %v3151
        %v3245 = vunpack.c.h.b16 %v3151
        %v3246 = vunpack.c.l.b16 %v3152
        %v3247 = vunpack.c.h.b16 %v3152
        %v3248 = vunpack.c.l.b16 %v3153
        %v3249 = vunpack.c.h.b16 %v3153
        %v3250 = vunpack.c.l.b16 %v3154
        %v3251 = vunpack.c.h.b16 %v3154
        %v3252 = vunpack.c.l.b16 %v3155
        %v3253 = vunpack.c.h.b16 %v3155
        %v3254 = vunpack.c.l.b16 %v3156
        %v3255 = vunpack.c.h.b16 %v3156
        %v3256 = vunpack.c.l.b16 %v3157
        %v3257 = vunpack.c.h.b16 %v3157
        %v3258 = vunpack.c.l.b16 %v3158
        %v3259 = vunpack.c.h.b16 %v3158
        %v3260 = vunpack.c.l.b16 %v3159
        %v3261 = vunpack.c.h.b16 %v3159
        %v3262 = vunpack.c.l.b16 %v3160
        %v3263 = vunpack.c.h.b16 %v3160
        %v3264 = vunpack.c.l.b16 %v3161
        %v3265 = vunpack.c.h.b16 %v3161
        %v3266 = vunpack.c.l.b16 %v3162
        %v3267 = vunpack.c.h.b16 %v3162
        %v3268 = vunpack.c.l.b16 %v3163
        %v3269 = vunpack.c.h.b16 %v3163
        %v3270 = vunpack.c.l.b16 %v3164
        %v3271 = vunpack.c.h.b16 %v3164
        %v3272 = vunpack.c.l.b16 %v3165
        %v3273 = vunpack.c.h.b16 %v3165
        %v3274 = vunpack.c.l.b16 %v3166
        %v3275 = vunpack.c.h.b16 %v3166
        %v3276 = vunpack.c.l.b16 %v3167
        %v3277 = vunpack.c.h.b16 %v3167
        %v3278 = vunpack.c.l.b16 %v3168
        %v3279 = vunpack.c.h.b16 %v3168
        %v3280 = vunpack.c.l.b16 %v3169
        %v3281 = vunpack.c.h.b16 %v3169
        %v3282 = vunpack.c.l.b16 %v3170
        %v3283 = vunpack.c.h.b16 %v3170
        %v3284 = vunpack.c.l.b16 %v3171
        %v3285 = vunpack.c.h.b16 %v3171
        %v3286 = vunpack.c.l.b16 %v3172
        %v3287 = vunpack.c.h.b16 %v3172
        %v3288 = vunpack.c.l.b16 %v3173
        %v3289 = vunpack.c.h.b16 %v3173
        %v3290 = vunpack.c.l.b16 %v3174
        %v3291 = vunpack.c.h.b16 %v3174
        %v3292 = vunpack.c.l.b16 %v3175
        %v3293 = vunpack.c.h.b16 %v3175
        %v3294 = vpack.c.b16 %v3234, %v3230
        %v3295 = vpack.c.b16 %v3235, %v3231
        %v3296 = vpack.c.b16 %v3236, %v3232
        %v3297 = vpack.c.b16 %v3237, %v3233
        %v3298 = vpack.c.b16 %v3242, %v3238
        %v3299 = vpack.c.b16 %v3243, %v3239
        %v3300 = vpack.c.b16 %v3244, %v3240
        %v3301 = vpack.c.b16 %v3245, %v3241
        %v3302 = vpack.c.b16 %v3250, %v3246
        %v3303 = vpack.c.b16 %v3251, %v3247
        %v3304 = vpack.c.b16 %v3252, %v3248
        %v3305 = vpack.c.b16 %v3253, %v3249
        %v3306 = vpack.c.b16 %v3258, %v3254
        %v3307 = vpack.c.b16 %v3259, %v3255
        %v3308 = vpack.c.b16 %v3260, %v3256
        %v3309 = vpack.c.b16 %v3261, %v3257
        %v3310 = vpack.c.b16 %v3266, %v3262
        %v3311 = vpack.c.b16 %v3267, %v3263
        %v3312 = vpack.c.b16 %v3268, %v3264
        %v3313 = vpack.c.b16 %v3269, %v3265
        %v3314 = vpack.c.b16 %v3274, %v3270
        %v3315 = vpack.c.b16 %v3275, %v3271
        %v3316 = vpack.c.b16 %v3276, %v3272
        %v3317 = vpack.c.b16 %v3277, %v3273
        %v3318 = vpack.c.b16 %v3282, %v3278
        %v3319 = vpack.c.b16 %v3283, %v3279
        %v3320 = vpack.c.b16 %v3284, %v3280
        %v3321 = vpack.c.b16 %v3285, %v3281
        %v3322 = vpack.c.b16 %v3290, %v3286
        %v3323 = vpack.c.b16 %v3291, %v3287
        %v3324 = vpack.c.b16 %v3292, %v3288
        %v3325 = vpack.c.b16 %v3293, %v3289
        %3358 = vmatprep.subr.bf16.mxu0 %v3323
        %3359 = vmatpush1.bf16.msra.mxu0 %v3322
        %3360 = vmatprep.subr.bf16.mxu0 %v3319
        %3361 = vmatpush1.bf16.msra.mxu0 %v3318
        %3362 = vmatprep.subr.bf16.mxu0 %v3315
        %3363 = vmatpush1.bf16.msra.mxu0 %v3314
        %3364 = vmatprep.subr.bf16.mxu0 %v3311
        %3365 = vmatpush1.bf16.msra.mxu0 %v3310
        %3366 = vmatprep.subr.bf16.mxu0 %v3307
        %3367 = vmatpush1.bf16.msra.mxu0 %v3306
        %3368 = vmatprep.subr.bf16.mxu0 %v3303
        %3369 = vmatpush1.bf16.msra.mxu0 %v3302
        %3370 = vmatprep.subr.bf16.mxu0 %v3299
        %3371 = vmatpush1.bf16.msra.mxu0 %v3298
        %3372 = vmatprep.subr.bf16.mxu0 %v3295
        %3373 = vmatpush1.bf16.msra.mxu0 %v3294
        %3374 = vmatprep.subr.bf16.mxu0 0
        %3375 = vmatpush2.bf16.msra.mxu0 0
        %3376 = vmatprep.subr.bf16.mxu0 0
        %3377 = vmatpush2.bf16.msra.mxu0 0
        %3378 = vmatprep.subr.bf16.mxu0 0
        %3379 = vmatpush2.bf16.msra.mxu0 0
        %3380 = vmatprep.subr.bf16.mxu0 0
        %3381 = vmatpush2.bf16.msra.mxu0 0
        %3382 = vmatprep.subr.bf16.mxu0 0
        %3383 = vmatpush2.bf16.msra.mxu0 0
        %3384 = vmatprep.subr.bf16.mxu0 0
        %3385 = vmatpush2.bf16.msra.mxu0 0
        %3386 = vmatprep.subr.bf16.mxu0 0
        %3387 = vmatpush2.bf16.msra.mxu0 0
        %3388 = vmatprep.subr.bf16.mxu0 0
        %3389 = vmatpush2.bf16.msra.mxu0 0
        %3390 = vmatprep.mubr.bf16.mxu0 0
        %3391 = vmatmul.mubr.bf16.gmra.mxu0 %v3142
        %v3392 = vpop.f32.mrf.mxu0
        %v3393 = vadd.f32 %v3181, %v3392
        %v3394 = vpop.f32.mrf.mxu0
        %v3395 = vadd.f32 %v3185, %v3394
        %v3396 = vpop.f32.mrf.mxu0
        %v3397 = vadd.f32 %v3181, %v3396
        %v3398 = vpop.f32.mrf.mxu0
        %v3399 = vadd.f32 %v3185, %v3398
        %3400 = vmatprep.mubr.bf16.mxu0 0
        %3401 = vmatmul.mubr.bf16.gmra.mxu0 %v3143
        %v3402 = vpop.f32.mrf.mxu0
        %v3403 = vadd.f32 %v3181, %v3402
        %v3404 = vpop.f32.mrf.mxu0
        %v3405 = vadd.f32 %v3185, %v3404
        %v3406 = vpop.f32.mrf.mxu0
        %v3407 = vadd.f32 %v3181, %v3406
        %v3408 = vpop.f32.mrf.mxu0
        %v3409 = vadd.f32 %v3185, %v3408
        %3410 = vdwg.mxu0
        %3411 = vmatprep.subr.bf16.mxu0 %v3325
        %3412 = vmatpush1.bf16.msra.mxu0 %v3324
        %3413 = vmatprep.subr.bf16.mxu0 %v3321
        %3414 = vmatpush1.bf16.msra.mxu0 %v3320
        %3415 = vmatprep.subr.bf16.mxu0 %v3317
        %3416 = vmatpush1.bf16.msra.mxu0 %v3316
        %3417 = vmatprep.subr.bf16.mxu0 %v3313
        %3418 = vmatpush1.bf16.msra.mxu0 %v3312
        %3419 = vmatprep.subr.bf16.mxu0 %v3309
        %3420 = vmatpush1.bf16.msra.mxu0 %v3308
        %3421 = vmatprep.subr.bf16.mxu0 %v3305
        %3422 = vmatpush1.bf16.msra.mxu0 %v3304
        %3423 = vmatprep.subr.bf16.mxu0 %v3301
        %3424 = vmatpush1.bf16.msra.mxu0 %v3300
        %3425 = vmatprep.subr.bf16.mxu0 %v3297
        %3426 = vmatpush1.bf16.msra.mxu0 %v3296
        %3427 = vmatprep.subr.bf16.mxu0 0
        %3428 = vmatpush2.bf16.msra.mxu0 0
        %3429 = vmatprep.subr.bf16.mxu0 0
        %3430 = vmatpush2.bf16.msra.mxu0 0
        %3431 = vmatprep.subr.bf16.mxu0 0
        %3432 = vmatpush2.bf16.msra.mxu0 0
        %3433 = vmatprep.subr.bf16.mxu0 0
        %3434 = vmatpush2.bf16.msra.mxu0 0
        %3435 = vmatprep.subr.bf16.mxu0 0
        %3436 = vmatpush2.bf16.msra.mxu0 0
        %3437 = vmatprep.subr.bf16.mxu0 0
        %3438 = vmatpush2.bf16.msra.mxu0 0
        %3439 = vmatprep.subr.bf16.mxu0 0
        %3440 = vmatpush2.bf16.msra.mxu0 0
        %3441 = vmatprep.subr.bf16.mxu0 0
        %3442 = vmatpush2.bf16.msra.mxu0 0
        %3443 = vmatprep.mubr.bf16.mxu0 0
        %3444 = vmatmul.mubr.bf16.gmra.mxu0 %v3142
        %v3445 = vpop.f32.mrf.mxu0
        %v3446 = vadd.f32 %v3189, %v3445
        %v3447 = vpop.f32.mrf.mxu0
        %v3448 = vadd.f32 %v3193, %v3447
        %v3449 = vpop.f32.mrf.mxu0
        %v3450 = vadd.f32 %v3189, %v3449
        %v3451 = vpop.f32.mrf.mxu0
        %v3452 = vadd.f32 %v3193, %v3451
        %3453 = vmatprep.mubr.bf16.mxu0 0
        %3454 = vmatmul.mubr.bf16.gmra.mxu0 %v3143
        %v3455 = vpop.f32.mrf.mxu0
        %v3456 = vadd.f32 %v3189, %v3455
        %v3457 = vpop.f32.mrf.mxu0
        %v3458 = vadd.f32 %v3193, %v3457
        %v3459 = vpop.f32.mrf.mxu0
        %v3460 = vadd.f32 %v3189, %v3459
        %v3461 = vpop.f32.mrf.mxu0
        %v3462 = vadd.f32 %v3193, %v3461
        %3463 = vdwg.mxu0
        %v3464 = vmul.f32 %v3393, 0.5
        %v3465 = vmul.f32 %v3395, 0.5
        %v3466 = vmul.f32 %v3446, 0.5
        %v3467 = vmul.f32 %v3448, 0.5
        %v3468 = vmul.f32 %v3397, 0.5
        %v3469 = vmul.f32 %v3399, 0.5
        %v3470 = vmul.f32 %v3450, 0.5
        %v3471 = vmul.f32 %v3452, 0.5
        %v3472 = vmul.f32 %v3403, 0.5
        %v3473 = vmul.f32 %v3405, 0.5
        %v3474 = vmul.f32 %v3456, 0.5
        %v3475 = vmul.f32 %v3458, 0.5
        %v3476 = vmul.f32 %v3407, 0.5
        %v3477 = vmul.f32 %v3409, 0.5
        %v3478 = vmul.f32 %v3460, 0.5
        %v3479 = vmul.f32 %v3462, 0.5
        %v3480 = vmul.f32 %v3393, 0.70710677
        %v3481 = vmul.f32 %v3395, 0.70710677
        %v3482 = vmul.f32 %v3446, 0.70710677
        %v3483 = vmul.f32 %v3448, 0.70710677
        %v3484 = vmul.f32 %v3397, 0.70710677
        %v3485 = vmul.f32 %v3399, 0.70710677
        %v3486 = vmul.f32 %v3450, 0.70710677
        %v3487 = vmul.f32 %v3452, 0.70710677
        %v3488 = vmul.f32 %v3403, 0.70710677
        %v3489 = vmul.f32 %v3405, 0.70710677
        %v3490 = vmul.f32 %v3456, 0.70710677
        %v3491 = vmul.f32 %v3458, 0.70710677
        %v3492 = vmul.f32 %v3407, 0.70710677
        %v3493 = vmul.f32 %v3409, 0.70710677
        %v3494 = vmul.f32 %v3460, 0.70710677
        %v3495 = vmul.f32 %v3462, 0.70710677
        %v3496 = verf.f32.pop %v3480
        %v3497 = verf.f32.pop %v3481
        %v3498 = verf.f32.pop %v3482
        %v3499 = verf.f32.pop %v3483
        %v3500 = verf.f32.pop %v3484
        %v3501 = verf.f32.pop %v3485
        %v3502 = verf.f32.pop %v3486
        %v3503 = verf.f32.pop %v3487
        %v3504 = verf.f32.pop %v3488
        %v3505 = verf.f32.pop %v3489
        %v3506 = verf.f32.pop %v3490
        %v3507 = verf.f32.pop %v3491
        %v3508 = verf.f32.pop %v3492
        %v3509 = verf.f32.pop %v3493
        %v3510 = verf.f32.pop %v3494
        %v3511 = verf.f32.pop %v3495
        %v3512 = vadd.f32 %v3496, 1.0
        %v3513 = vadd.f32 %v3497, 1.0
        %v3514 = vadd.f32 %v3498, 1.0
        %v3515 = vadd.f32 %v3499, 1.0
        %v3516 = vadd.f32 %v3500, 1.0
        %v3517 = vadd.f32 %v3501, 1.0
        %v3518 = vadd.f32 %v3502, 1.0
        %v3519 = vadd.f32 %v3503, 1.0
        %v3520 = vadd.f32 %v3504, 1.0
        %v3521 = vadd.f32 %v3505, 1.0
        %v3522 = vadd.f32 %v3506, 1.0
        %v3523 = vadd.f32 %v3507, 1.0
        %v3524 = vadd.f32 %v3508, 1.0
        %v3525 = vadd.f32 %v3509, 1.0
        %v3526 = vadd.f32 %v3510, 1.0
        %v3527 = vadd.f32 %v3511, 1.0
        %v3528 = vmul.f32 %v3464, %v3512
        %v3529 = vmul.f32 %v3465, %v3513
        %v3530 = vmul.f32 %v3466, %v3514
        %v3531 = vmul.f32 %v3467, %v3515
        %v3532 = vmul.f32 %v3468, %v3516
        %v3533 = vmul.f32 %v3469, %v3517
        %v3534 = vmul.f32 %v3470, %v3518
        %v3535 = vmul.f32 %v3471, %v3519
        %v3536 = vmul.f32 %v3472, %v3520
        %v3537 = vmul.f32 %v3473, %v3521
        %v3538 = vmul.f32 %v3474, %v3522
        %v3539 = vmul.f32 %v3475, %v3523
        %v3540 = vmul.f32 %v3476, %v3524
        %v3541 = vmul.f32 %v3477, %v3525
        %v3542 = vmul.f32 %v3478, %v3526
        %v3543 = vmul.f32 %v3479, %v3527
        %v3544 = vpack.c.bf16 %v3532, %v3528
        %v3545 = vpack.c.bf16 %v3533, %v3529
        %v3546 = vpack.c.bf16 %v3534, %v3530
        %v3547 = vpack.c.bf16 %v3535, %v3531
        %v3548 = vpack.c.bf16 %v3540, %v3536
        %v3549 = vpack.c.bf16 %v3541, %v3537
        %v3550 = vpack.c.bf16 %v3542, %v3538
        %v3551 = vpack.c.bf16 %v3543, %v3539
        %v3552 = vld [vmem:[%s534] sm:$0xf]
        %v3553 = vld [vmem:[%s534 + $0x4] sm:$0xf]
        %v3554 = vld [vmem:[%s534 + $0x8] sm:$0xf]
        %v3555 = vld [vmem:[%s534 + $0xc] sm:$0xf]
        %v3556 = vld [vmem:[%s534 + $0x10] sm:$0xf]
        %v3557 = vld [vmem:[%s534 + $0x14] sm:$0xf]
        %v3558 = vld [vmem:[%s534 + $0x18] sm:$0xf]
        %v3559 = vld [vmem:[%s534 + $0x1c] sm:$0xf]
        %v3560 = vld [vmem:[%s534 + $0x20] sm:$0xf]
        %v3561 = vld [vmem:[%s534 + $0x24] sm:$0xf]
        %v3562 = vld [vmem:[%s534 + $0x28] sm:$0xf]
        %v3563 = vld [vmem:[%s534 + $0x2c] sm:$0xf]
        %v3564 = vld [vmem:[%s534 + $0x30] sm:$0xf]
        %v3565 = vld [vmem:[%s534 + $0x34] sm:$0xf]
        %v3566 = vld [vmem:[%s534 + $0x38] sm:$0xf]
        %v3567 = vld [vmem:[%s534 + $0x3c] sm:$0xf]
        %v3568 = vld [vmem:[%s534 + $0x40] sm:$0xf]
        %v3569 = vld [vmem:[%s534 + $0x44] sm:$0xf]
        %v3570 = vld [vmem:[%s534 + $0x48] sm:$0xf]
        %v3571 = vld [vmem:[%s534 + $0x4c] sm:$0xf]
        %v3572 = vld [vmem:[%s534 + $0x50] sm:$0xf]
        %v3573 = vld [vmem:[%s534 + $0x54] sm:$0xf]
        %v3574 = vld [vmem:[%s534 + $0x58] sm:$0xf]
        %v3575 = vld [vmem:[%s534 + $0x5c] sm:$0xf]
        %v3576 = vld [vmem:[%s534 + $0x60] sm:$0xf]
        %v3577 = vld [vmem:[%s534 + $0x64] sm:$0xf]
        %v3578 = vld [vmem:[%s534 + $0x68] sm:$0xf]
        %v3579 = vld [vmem:[%s534 + $0x6c] sm:$0xf]
        %v3580 = vld [vmem:[%s534 + $0x70] sm:$0xf]
        %v3581 = vld [vmem:[%s534 + $0x74] sm:$0xf]
        %v3582 = vld [vmem:[%s534 + $0x78] sm:$0xf]
        %v3583 = vld [vmem:[%s534 + $0x7c] sm:$0xf]
        %v3584 = vld [vmem:[%s534 + $0x80] sm:$0xf]
        %v3585 = vld [vmem:[%s534 + $0x84] sm:$0xf]
        %v3586 = vld [vmem:[%s534 + $0x88] sm:$0xf]
        %v3587 = vld [vmem:[%s534 + $0x8c] sm:$0xf]
        %v3588 = vld [vmem:[%s534 + $0x90] sm:$0xf]
        %v3589 = vld [vmem:[%s534 + $0x94] sm:$0xf]
        %v3590 = vld [vmem:[%s534 + $0x98] sm:$0xf]
        %v3591 = vld [vmem:[%s534 + $0x9c] sm:$0xf]
        %v3592 = vld [vmem:[%s534 + $0xa0] sm:$0xf]
        %v3593 = vld [vmem:[%s534 + $0xa4] sm:$0xf]
        %v3594 = vld [vmem:[%s534 + $0xa8] sm:$0xf]
        %v3595 = vld [vmem:[%s534 + $0xac] sm:$0xf]
        %v3596 = vld [vmem:[%s534 + $0xb0] sm:$0xf]
        %v3597 = vld [vmem:[%s534 + $0xb4] sm:$0xf]
        %v3598 = vld [vmem:[%s534 + $0xb8] sm:$0xf]
        %v3599 = vld [vmem:[%s534 + $0xbc] sm:$0xf]
        %v3600 = vld [vmem:[%s534 + $0xc0] sm:$0xf]
        %v3601 = vld [vmem:[%s534 + $0xc4] sm:$0xf]
        %v3602 = vld [vmem:[%s534 + $0xc8] sm:$0xf]
        %v3603 = vld [vmem:[%s534 + $0xcc] sm:$0xf]
        %v3604 = vld [vmem:[%s534 + $0xd0] sm:$0xf]
        %v3605 = vld [vmem:[%s534 + $0xd4] sm:$0xf]
        %v3606 = vld [vmem:[%s534 + $0xd8] sm:$0xf]
        %v3607 = vld [vmem:[%s534 + $0xdc] sm:$0xf]
        %v3608 = vld [vmem:[%s534 + $0xe0] sm:$0xf]
        %v3609 = vld [vmem:[%s534 + $0xe4] sm:$0xf]
        %v3610 = vld [vmem:[%s534 + $0xe8] sm:$0xf]
        %v3611 = vld [vmem:[%s534 + $0xec] sm:$0xf]
        %v3612 = vld [vmem:[%s534 + $0xf0] sm:$0xf]
        %v3613 = vld [vmem:[%s534 + $0xf4] sm:$0xf]
        %v3614 = vld [vmem:[%s534 + $0xf8] sm:$0xf]
        %v3615 = vld [vmem:[%s534 + $0xfc] sm:$0xf]
        %v3680 = vunpack.c.l.b16 %v3552
        %v3681 = vunpack.c.l.b16 %v3553
        %v3682 = vunpack.c.l.b16 %v3554
        %v3683 = vunpack.c.l.b16 %v3555
        %v3684 = vunpack.c.l.b16 %v3556
        %v3685 = vunpack.c.l.b16 %v3557
        %v3686 = vunpack.c.l.b16 %v3558
        %v3687 = vunpack.c.l.b16 %v3559
        %v3688 = vunpack.c.l.b16 %v3560
        %v3689 = vunpack.c.l.b16 %v3561
        %v3690 = vunpack.c.l.b16 %v3562
        %v3691 = vunpack.c.l.b16 %v3563
        %v3692 = vunpack.c.l.b16 %v3564
        %v3693 = vunpack.c.l.b16 %v3565
        %v3694 = vunpack.c.l.b16 %v3566
        %v3695 = vunpack.c.l.b16 %v3567
        %v3696 = vunpack.c.l.b16 %v3568
        %v3697 = vunpack.c.l.b16 %v3569
        %v3698 = vunpack.c.l.b16 %v3570
        %v3699 = vunpack.c.l.b16 %v3571
        %v3700 = vunpack.c.l.b16 %v3572
        %v3701 = vunpack.c.l.b16 %v3573
        %v3702 = vunpack.c.l.b16 %v3574
        %v3703 = vunpack.c.l.b16 %v3575
        %v3704 = vunpack.c.l.b16 %v3576
        %v3705 = vunpack.c.l.b16 %v3577
        %v3706 = vunpack.c.l.b16 %v3578
        %v3707 = vunpack.c.l.b16 %v3579
        %v3708 = vunpack.c.l.b16 %v3580
        %v3709 = vunpack.c.l.b16 %v3581
        %v3710 = vunpack.c.l.b16 %v3582
        %v3711 = vunpack.c.l.b16 %v3583
        %v3712 = vunpack.c.l.b16 %v3584
        %v3713 = vunpack.c.l.b16 %v3585
        %v3714 = vunpack.c.l.b16 %v3586
        %v3715 = vunpack.c.l.b16 %v3587
        %v3716 = vunpack.c.l.b16 %v3588
        %v3717 = vunpack.c.l.b16 %v3589
        %v3718 = vunpack.c.l.b16 %v3590
        %v3719 = vunpack.c.l.b16 %v3591
        %v3720 = vunpack.c.l.b16 %v3592
        %v3721 = vunpack.c.l.b16 %v3593
        %v3722 = vunpack.c.l.b16 %v3594
        %v3723 = vunpack.c.l.b16 %v3595
        %v3724 = vunpack.c.l.b16 %v3596
        %v3725 = vunpack.c.l.b16 %v3597
        %v3726 = vunpack.c.l.b16 %v3598
        %v3727 = vunpack.c.l.b16 %v3599
        %v3728 = vunpack.c.l.b16 %v3600
        %v3729 = vunpack.c.l.b16 %v3601
        %v3730 = vunpack.c.l.b16 %v3602
        %v3731 = vunpack.c.l.b16 %v3603
        %v3732 = vunpack.c.l.b16 %v3604
        %v3733 = vunpack.c.l.b16 %v3605
        %v3734 = vunpack.c.l.b16 %v3606
        %v3735 = vunpack.c.l.b16 %v3607
        %v3736 = vunpack.c.l.b16 %v3608
        %v3737 = vunpack.c.l.b16 %v3609
        %v3738 = vunpack.c.l.b16 %v3610
        %v3739 = vunpack.c.l.b16 %v3611
        %v3740 = vunpack.c.l.b16 %v3612
        %v3741 = vunpack.c.l.b16 %v3613
        %v3742 = vunpack.c.l.b16 %v3614
        %v3743 = vunpack.c.l.b16 %v3615
        %v3744 = vpack.c.b16 %v3681, %v3680
        %v3745 = vpack.c.b16 %v3683, %v3682
        %v3746 = vpack.c.b16 %v3685, %v3684
        %v3747 = vpack.c.b16 %v3687, %v3686
        %v3748 = vpack.c.b16 %v3689, %v3688
        %v3749 = vpack.c.b16 %v3691, %v3690
        %v3750 = vpack.c.b16 %v3693, %v3692
        %v3751 = vpack.c.b16 %v3695, %v3694
        %v3752 = vpack.c.b16 %v3697, %v3696
        %v3753 = vpack.c.b16 %v3699, %v3698
        %v3754 = vpack.c.b16 %v3701, %v3700
        %v3755 = vpack.c.b16 %v3703, %v3702
        %v3756 = vpack.c.b16 %v3705, %v3704
        %v3757 = vpack.c.b16 %v3707, %v3706
        %v3758 = vpack.c.b16 %v3709, %v3708
        %v3759 = vpack.c.b16 %v3711, %v3710
        %v3760 = vpack.c.b16 %v3713, %v3712
        %v3761 = vpack.c.b16 %v3715, %v3714
        %v3762 = vpack.c.b16 %v3717, %v3716
        %v3763 = vpack.c.b16 %v3719, %v3718
        %v3764 = vpack.c.b16 %v3721, %v3720
        %v3765 = vpack.c.b16 %v3723, %v3722
        %v3766 = vpack.c.b16 %v3725, %v3724
        %v3767 = vpack.c.b16 %v3727, %v3726
        %v3768 = vpack.c.b16 %v3729, %v3728
        %v3769 = vpack.c.b16 %v3731, %v3730
        %v3770 = vpack.c.b16 %v3733, %v3732
        %v3771 = vpack.c.b16 %v3735, %v3734
        %v3772 = vpack.c.b16 %v3737, %v3736
        %v3773 = vpack.c.b16 %v3739, %v3738
        %v3774 = vpack.c.b16 %v3741, %v3740
        %v3775 = vpack.c.b16 %v3743, %v3742
        %3808 = vmatprep.subr.bf16.mxu0 0
        %3809 = vmatpush1.bf16.msra.mxu0 %v3751
        %3810 = vmatprep.subr.bf16.mxu0 0
        %3811 = vmatpush1.bf16.msra.mxu0 %v3750
        %3812 = vmatprep.subr.bf16.mxu0 0
        %3813 = vmatpush1.bf16.msra.mxu0 %v3749
        %3814 = vmatprep.subr.bf16.mxu0 0
        %3815 = vmatpush1.bf16.msra.mxu0 %v3748
        %3816 = vmatprep.subr.bf16.mxu0 0
        %3817 = vmatpush1.bf16.msra.mxu0 %v3747
        %3818 = vmatprep.subr.bf16.mxu0 0
        %3819 = vmatpush1.bf16.msra.mxu0 %v3746
        %3820 = vmatprep.subr.bf16.mxu0 0
        %3821 = vmatpush1.bf16.msra.mxu0 %v3745
        %3822 = vmatprep.subr.bf16.mxu0 0
        %3823 = vmatpush1.bf16.msra.mxu0 %v3744
        %3824 = vmatprep.subr.bf16.mxu0 0
        %3825 = vmatpush2.bf16.msra.mxu0 %v3759
        %3826 = vmatprep.subr.bf16.mxu0 0
        %3827 = vmatpush2.bf16.msra.mxu0 %v3758
        %3828 = vmatprep.subr.bf16.mxu0 0
        %3829 = vmatpush2.bf16.msra.mxu0 %v3757
        %3830 = vmatprep.subr.bf16.mxu0 0
        %3831 = vmatpush2.bf16.msra.mxu0 %v3756
        %3832 = vmatprep.subr.bf16.mxu0 0
        %3833 = vmatpush2.bf16.msra.mxu0 %v3755
        %3834 = vmatprep.subr.bf16.mxu0 0
        %3835 = vmatpush2.bf16.msra.mxu0 %v3754
        %3836 = vmatprep.subr.bf16.mxu0 0
        %3837 = vmatpush2.bf16.msra.mxu0 %v3753
        %3838 = vmatprep.subr.bf16.mxu0 0
        %3839 = vmatpush2.bf16.msra.mxu0 %v3752
        %3840 = vmatprep.mubr.bf16.mxu0 %v3545
        %3841 = vmatmul.mubr.bf16.gmra.mxu0 %v3544
        %v3842 = vpop.f32.mrf.mxu0
        %v3843 = vadd.f32 0.0, %v3842
        %v3844 = vpop.f32.mrf.mxu0
        %v3845 = vpop.f32.mrf.mxu0
        %v3846 = vadd.f32 0.0, %v3845
        %v3847 = vpop.f32.mrf.mxu0
        %3848 = vmatprep.mubr.bf16.mxu0 %v3549
        %3849 = vmatmul.mubr.bf16.gmra.mxu0 %v3548
        %v3850 = vpop.f32.mrf.mxu0
        %v3851 = vadd.f32 0.0, %v3850
        %v3852 = vpop.f32.mrf.mxu0
        %v3853 = vpop.f32.mrf.mxu0
        %v3854 = vadd.f32 0.0, %v3853
        %v3855 = vpop.f32.mrf.mxu0
        %3856 = vdwg.mxu0
        %3857 = vmatprep.subr.bf16.mxu0 0
        %3858 = vmatpush1.bf16.msra.mxu0 %v3767
        %3859 = vmatprep.subr.bf16.mxu0 0
        %3860 = vmatpush1.bf16.msra.mxu0 %v3766
        %3861 = vmatprep.subr.bf16.mxu0 0
        %3862 = vmatpush1.bf16.msra.mxu0 %v3765
        %3863 = vmatprep.subr.bf16.mxu0 0
        %3864 = vmatpush1.bf16.msra.mxu0 %v3764
        %3865 = vmatprep.subr.bf16.mxu0 0
        %3866 = vmatpush1.bf16.msra.mxu0 %v3763
        %3867 = vmatprep.subr.bf16.mxu0 0
        %3868 = vmatpush1.bf16.msra.mxu0 %v3762
        %3869 = vmatprep.subr.bf16.mxu0 0
        %3870 = vmatpush1.bf16.msra.mxu0 %v3761
        %3871 = vmatprep.subr.bf16.mxu0 0
        %3872 = vmatpush1.bf16.msra.mxu0 %v3760
        %3873 = vmatprep.subr.bf16.mxu0 0
        %3874 = vmatpush2.bf16.msra.mxu0 %v3775
        %3875 = vmatprep.subr.bf16.mxu0 0
        %3876 = vmatpush2.bf16.msra.mxu0 %v3774
        %3877 = vmatprep.subr.bf16.mxu0 0
        %3878 = vmatpush2.bf16.msra.mxu0 %v3773
        %3879 = vmatprep.subr.bf16.mxu0 0
        %3880 = vmatpush2.bf16.msra.mxu0 %v3772
        %3881 = vmatprep.subr.bf16.mxu0 0
        %3882 = vmatpush2.bf16.msra.mxu0 %v3771
        %3883 = vmatprep.subr.bf16.mxu0 0
        %3884 = vmatpush2.bf16.msra.mxu0 %v3770
        %3885 = vmatprep.subr.bf16.mxu0 0
        %3886 = vmatpush2.bf16.msra.mxu0 %v3769
        %3887 = vmatprep.subr.bf16.mxu0 0
        %3888 = vmatpush2.bf16.msra.mxu0 %v3768
        %3889 = vmatprep.mubr.bf16.mxu0 %v3547
        %3890 = vmatmul.mubr.bf16.gmra.mxu0 %v3546
        %v3891 = vpop.f32.mrf.mxu0
        %v3892 = vadd.f32 %v3843, %v3891
        %v3893 = vpop.f32.mrf.mxu0
        %v3894 = vpop.f32.mrf.mxu0
        %v3895 = vadd.f32 %v3846, %v3894
        %v3896 = vpop.f32.mrf.mxu0
        %3897 = vmatprep.mubr.bf16.mxu0 %v3551
        %3898 = vmatmul.mubr.bf16.gmra.mxu0 %v3550
        %v3899 = vpop.f32.mrf.mxu0
        %v3900 = vadd.f32 %v3851, %v3899
        %v3901 = vpop.f32.mrf.mxu0
        %v3902 = vpop.f32.mrf.mxu0
        %v3903 = vadd.f32 %v3854, %v3902
        %v3904 = vpop.f32.mrf.mxu0
        %3905 = vdwg.mxu0
        %v3906 = vadd.f32 %v3066, %v3892
        %v3907 = vadd.f32 %v3067, %v3895
        %v3908 = vadd.f32 %v3068, %v3900
        %v3909 = vadd.f32 %v3069, %v3903
        %v3910 = vlaneseq
        %v3911 = vshrl.u32 %v3910, 7
        %v3912 = vsub.s32 0, %v3911
        %v3913 = vrot.slane %v627, %v3912
        %v3914 = vadd.f32 %v3906, %v3913
        %v3915 = vadd.f32 %v3907, %v3913
        %v3916 = vadd.f32 %v3908, %v3913
        %v3917 = vadd.f32 %v3909, %v3913
        %3918 = vst [vmem:[#allocation15] sm:$0xff] %v3914
        %3919 = vst [vmem:[#allocation15 + $0x8] sm:$0xff] %v3915
        %3920 = vst [vmem:[#allocation15 + $0x10] sm:$0xff] %v3916
        %3921 = vst [vmem:[#allocation15 + $0x18] sm:$0xff] %v3917
        // Predicated region
        $region89: #{tpu_custom_call.1} parent=55 // pred_check
          %p3922 = pneg %p295
        $region90: #{tpu_custom_call.1} parent=55 // pred_check_branch
          %3924 = sbr.rel (%p3922) target = $region92
        $region91: #{tpu_custom_call.1} parent=55 // pred_region
          %s3925 = smul.u32 4, %s35
          %s3927 = ssub.s32 512, 512
          %3928 = vsyncadd [#allocation5], %s3927
          %s3929 = smul.addr %s3925, 128
          %s3930 = scalar_lea.hbm %s9, %s3929
          %s3931 = sshll.u32 [#allocation15], 4
          %s3932 = int_to_ptr.vmem [resolvable:$true] %s3931
          %3937 = dma.vmem_to_hbm [thread:$0]  %s3932, 512, %s3930, [#allocation5], 128, 128, 8
        $region92: #{tpu_custom_call.1} parent=55 // pred_fallthru
          _
        // Predicated region
        $region93: #{tpu_custom_call.1} parent=55 // pred_check
          %p3938 = pneg %p295
        $region94: #{tpu_custom_call.1} parent=55 // pred_check_branch
          %3940 = sbr.rel (%p3938) target = $region96
        $region95: #{tpu_custom_call.1} parent=55 // pred_region
          %3941 = dma.done [#allocation5], 512
        $region96: #{tpu_custom_call.1} parent=55 // pred_fallthru
          _
      $region56: #{tpu_custom_call.1} parent=5 // pred_fallthru
        _
      %p3942 = scmp.le.s32.totalorder 2, %s26
      // Predicated region
      $region97: #{tpu_custom_call.1} parent=5 // pred_check
        %p3943 = pneg %p3942
      $region98: #{tpu_custom_call.1} parent=5 // pred_check_branch
        %3945 = sbr.rel (%p3943) target = $region100
      $region99: #{tpu_custom_call.1} parent=5 // pred_region
        %s3946 = ssub.s32 %s26, 2
      $region100: #{tpu_custom_call.1} parent=5 // pred_fallthru
        _
    $region6: #{tpu_custom_call.1} parent=1 // loop_footer
      %s30 = sadd.s32 1, %s26
    $region7: #{tpu_custom_call.1} parent=1 // loop_footer_branch
      %25 = sbr.rel target = $region3
    $region8: #{tpu_custom_call.1} parent=1 // loop_exit
      _
    %3947 = vsyncpa [#allocation4], 1
    %s3948 = scalar_lea.sflag [#allocation4], 1
    %3949 = vsyncpa %s3948, 1
    %3950 = vsyncpa [#allocation7], 1
    %s3951 = scalar_lea.sflag [#allocation7], 1
    %3952 = vsyncpa %s3951, 1
    %3953 = vsyncpa [#allocation10], 1
    %s3954 = scalar_lea.sflag [#allocation10], 1
    %3955 = vsyncpa %s3954, 1
    %3956 = vsyncpa [#allocation13], 1
    %s3957 = scalar_lea.sflag [#allocation13], 1
    %3958 = vsyncpa %s3957, 1
    %3959 = vsyncpa [#allocation5], 1
    %s3960 = scalar_lea.sflag [#allocation5], 1
    %3961 = vsyncpa %s3960, 1

</llo_original>
